<compile_context>
chip_gen: v6e
topology: v6e:2x2x1
jax: 0.10.0
libtpu: 0.0.40
codegen_flags: <defaults>
</compile_context>

<pallas_src>
import functools

import jax
import jax.numpy as jnp
from jax.experimental import pallas as pl
from jax.experimental.pallas import tpu as pltpu


def _round_up(x, m):
    return ((x + m - 1) // m) * m


def _choose_batch_tile(b, ts, d, in_itemsize, budget_bytes=24 << 20):
    """Pick the batch tile TB (multiple of 8, <=128) for a ~24 MiB VMEM budget.

    Per batch row the pipelined tile holds ~2x the native-dtype frames (double
    buffering) plus f32 intermediates for the in-kernel sign-diff reduction.
    For very large TS the TS axis would be chunked inside the kernel instead
    (not needed at these sizes).
    """
    per_row = ts * d * (2 * in_itemsize + 6 * 4)
    tb = max(1, budget_bytes // max(per_row, 1))
    tb = int(max(8, min(128, (tb // 8) * 8)))          # sublane multiple, cap MXU-M
    return min(tb, _round_up(b, 8))


def _diff_fc_kernel(x_ref, w_ref, b_ref, o_ref):
    """x_ref: (TB, TS, D) frames (native dtype, e.g. bf16)
       w_ref: (D, Npad) bf16 transposed fc weight (resident across the grid)
       b_ref: (1, Npad) f32 fc bias
       o_ref: (TB, Npad) f32 output tile (lane-dense, Npad % 128 == 0)

    out = (1/TS) * [ (sum_{t=1..TS-1} sign(x_t - x_{t-1})) @ W + (TS-1)*b ]
    The sign-diff sum is pure VPU work; only ONE matmul hits the MXU.
    """
    ts = x_ref.shape[1]
    if ts > 1:
        # In-VMEM upcast only (HBM traffic stays in the native dtype); the sign
        # is computed with exact comparisons, so precision of the input dtype
        # never changes a zero-diff into +/-1.
        x = x_ref[...].astype(jnp.float32)                       # (TB, TS, D)
        cur, prev = x[:, 1:, :], x[:, :-1, :]
        d_sum = jnp.sum(
            (cur > prev).astype(jnp.float32) - (cur < prev).astype(jnp.float32),
            axis=1,
        )                                                        # (TB, D), small ints
        # Small-integer sign sums are exact in bf16 (|d_sum| <= TS-1 <= 256),
        # so the single matmul runs at full-rate bf16 on the MXU with an f32
        # accumulator.
        acc = jnp.dot(d_sum.astype(jnp.bfloat16), w_ref[...],
                      preferred_element_type=jnp.float32)        # (TB, Npad)
        acc = acc + jnp.float32(ts - 1) * b_ref[...]
        o_ref[...] = acc * jnp.float32(1.0 / ts)
    else:
        # TS == 1: the reference loop never runs -> zeros (matches the module).
        o_ref[...] = jnp.zeros_like(o_ref)


def prepare_fc_params(fc_weight, fc_bias, num_classes):
    """One-time prep (call OUTSIDE jit / per model, not per step): transpose the
    fc weight, cast to bf16, and pad the class axis to a lane-dense 128 multiple."""
    d = fc_weight.shape[1]
    n_pad = max(128, _round_up(num_classes, 128))
    w_t = jnp.pad(fc_weight.astype(jnp.bfloat16).T,
                  ((0, 0), (0, n_pad - num_classes)))            # (D, Npad) bf16
    b_p = jnp.pad(fc_bias.astype(jnp.float32)[None, :],
                  ((0, 0), (0, n_pad - num_classes)))            # (1, Npad) f32
    assert w_t.shape == (d, n_pad)
    return w_t, b_p


@functools.partial(jax.jit, static_argnames=("num_classes",))
def diff_fc_forward(x, w_t, b_p, *, num_classes):
    """x: (B, TS, C, H, W) or (B, C, H, W), any float dtype (kept as-is in HBM).
    w_t/b_p: outputs of prepare_fc_params.  Returns (B, num_classes) float32."""
    if x.ndim < 5:
        x = x[:, None]                                           # unsqueeze timestep dim
    b_z, ts, c, h, w = x.shape
    d = c * h * w
    assert d == w_t.shape[0], "flattened frame must match fc in_features"
    n_pad = w_t.shape[1]

    # Flatten frames to (B, TS, D); keep the native dtype (no f32 upcast).
    x_flat = x.reshape(b_z, ts, d)

    # Batch grid: tile padded to a sublane multiple, sized for ~24 MiB VMEM.
    tb = _choose_batch_tile(b_z, ts, d, jnp.dtype(x_flat.dtype).itemsize)
    b_pad = _round_up(b_z, tb)
    if b_pad != b_z:
        x_flat = jnp.pad(x_flat, ((0, b_pad - b_z), (0, 0), (0, 0)))
    grid = (b_pad // tb,)

    out_padded = pl.pallas_call(
        _diff_fc_kernel,
        out_shape=jax.ShapeDtypeStruct((b_pad, n_pad), jnp.float32),
        grid=grid,
        in_specs=[
            pl.BlockSpec((tb, ts, d), lambda i: (i, 0, 0)),       # frames, pipelined
            pl.BlockSpec((d, n_pad), lambda i: (0, 0)),           # weight, resident
            pl.BlockSpec((1, n_pad), lambda i: (0, 0)),           # bias, resident
        ],
        out_specs=pl.BlockSpec((tb, n_pad), lambda i: (i, 0)),
        compiler_params=pltpu.CompilerParams(
            dimension_semantics=("parallel",),                    # megacore on v7x
            # no vmem_limit_bytes: tiles are sized well under the default scoped
            # limit so the same kernel fits v7x's 64 MiB physical VMEM.
        ),
    )(x_flat, w_t, b_p)

    return out_padded[:b_z, :num_classes]


def _reference(x, fc_weight, fc_bias):
    """Pure-JAX f32 reference mirroring the per-timestep PyTorch-style loop."""
    if x.ndim < 5:
        x = x[:, None]
    b_z, ts = x.shape[0], x.shape[1]
    xf = x.reshape(b_z, ts, -1).astype(jnp.float32)
    wf = fc_weight.astype(jnp.float32)
    bf = fc_bias.astype(jnp.float32)
    out = jnp.zeros((b_z, fc_weight.shape[0]), jnp.float32)
    prev = xf[:, 0]
    for t in range(1, ts):
        cur = xf[:, t]
        out = out + jnp.sign(cur - prev) @ wf.T + bf
        prev = cur
    return out / ts


if __name__ == "__main__":
    # fc in_features = 64*64 forces C*H*W = 4096 -> C=1, H=W=64.
    B, TS, C, H, W = 2, 4, 1, 64, 64
    NUM_CLASSES = 10

    key = jax.random.PRNGKey(0)
    kx, kw, kb = jax.random.split(key, 3)
    # Frames stay in bf16 end to end (review: halve the HBM/DMA bytes).
    x = jax.random.normal(kx, (B, TS, C, H, W), jnp.float32).astype(jnp.bfloat16)
    fc_weight = jax.random.normal(kw, (NUM_CLASSES, C * H * W), jnp.float32) * 0.01
    fc_bias = jax.random.normal(kb, (NUM_CLASSES,), jnp.float32) * 0.01

    # Weight prep happens once, outside the jitted forward.
    w_t, b_p = prepare_fc_params(fc_weight, fc_bias, NUM_CLASSES)

    out = diff_fc_forward(x, w_t, b_p, num_classes=NUM_CLASSES)
    out = jax.block_until_ready(out)
    assert out.shape == (B, NUM_CLASSES)

    # (1) Structural check at tight tolerance against a reference that uses the
    #     same bf16-rounded weight the kernel uses (isolates the math reorder).
    ref_bf16w = _reference(x, w_t[:, :NUM_CLASSES].T.astype(jnp.float32), fc_bias)
    assert jnp.allclose(out, ref_bf16w, atol=1e-4, rtol=1e-4), "mismatch vs bf16-weight reference"

    # (2) Against the full-f32 per-timestep loop: only bf16 weight rounding differs.
    ref_f32 = _reference(x, fc_weight, fc_bias)
    assert jnp.allclose(out, ref_f32, atol=5e-3, rtol=5e-3), "mismatch vs f32 reference"

    print("KERNEL_OK")
</pallas_src>

<mosaic_0001>
module attributes {stable_mosaic.version = 11 : i64} {
  func.func @_diff_fc_kernel(%arg0: i32, %arg1: memref<8x4x4096xbf16, #tpu.memory_space<vmem>>, %arg2: memref<4096x128xbf16, #tpu.memory_space<vmem>>, %arg3: memref<1x128xf32, #tpu.memory_space<vmem>>, %arg4: memref<8x128xf32, #tpu.memory_space<vmem>>) attributes {dimension_semantics = [#tpu.dimension_semantics<parallel>], iteration_bounds = array<i64: 1>, scalar_prefetch = 0 : i64, scratch_operands = 0 : i64, tpu.core_type = #tpu.core_type<tc>, window_params = [{transform_indices = @transform_0, window_bounds = array<i64: 8, 4, 4096>}, {pipeline_mode = #tpu.pipeline_mode<synchronous>, transform_indices = @transform_1, window_bounds = array<i64: 4096, 128>}, {pipeline_mode = #tpu.pipeline_mode<synchronous>, transform_indices = @transform_2, window_bounds = array<i64: 1, 128>}, {transform_indices = @transform_3, window_bounds = array<i64: 8, 128>}]} {
    %c0 = arith.constant 0 : index
    %c0_0 = arith.constant 0 : index
    %c0_1 = arith.constant 0 : index
    %0 = vector.load %arg1[%c0, %c0_0, %c0_1] : memref<8x4x4096xbf16, #tpu.memory_space<vmem>>, vector<8x4x4096xbf16>
    %1 = arith.extf %0 : vector<8x4x4096xbf16> to vector<8x4x4096xf32>
    %2 = vector.extract_strided_slice %1 {offsets = [0, 1, 0], sizes = [8, 3, 4096], strides = [1, 1, 1]} : vector<8x4x4096xf32> to vector<8x3x4096xf32>
    %3 = vector.extract_strided_slice %1 {offsets = [0, 0, 0], sizes = [8, 3, 4096], strides = [1, 1, 1]} : vector<8x4x4096xf32> to vector<8x3x4096xf32>
    %4 = arith.cmpf ogt, %2, %3 : vector<8x3x4096xf32>
    %5 = arith.extui %4 : vector<8x3x4096xi1> to vector<8x3x4096xi32>
    %6 = arith.sitofp %5 : vector<8x3x4096xi32> to vector<8x3x4096xf32>
    %7 = arith.cmpf olt, %2, %3 : vector<8x3x4096xf32>
    %8 = arith.extui %7 : vector<8x3x4096xi1> to vector<8x3x4096xi32>
    %9 = arith.sitofp %8 : vector<8x3x4096xi32> to vector<8x3x4096xf32>
    %10 = arith.subf %6, %9 : vector<8x3x4096xf32>
    %cst = arith.constant dense<0.000000e+00> : vector<8x4096xf32>
    %11 = vector.multi_reduction <add>, %10, %cst [1] : vector<8x3x4096xf32> to vector<8x4096xf32>
    %12 = arith.truncf %11 : vector<8x4096xf32> to vector<8x4096xbf16>
    %c0_2 = arith.constant 0 : index
    %c0_3 = arith.constant 0 : index
    %13 = vector.load %arg2[%c0_2, %c0_3] : memref<4096x128xbf16, #tpu.memory_space<vmem>>, vector<4096x128xbf16>
    %cst_4 = arith.constant dense<0.000000e+00> : vector<8x128xf32>
    %14 = tpu.matmul %12, %13, %cst_4 {dimension_numbers = #tpu.dot_dimension_numbers<[1], [0], [0], [1], [0, 0, 1, 1], [], []>} : vector<8x4096xbf16>, vector<4096x128xbf16>, vector<8x128xf32> -> vector<8x128xf32>
    %c0_5 = arith.constant 0 : index
    %c0_6 = arith.constant 0 : index
    %15 = vector.load %arg3[%c0_5, %c0_6] : memref<1x128xf32, #tpu.memory_space<vmem>>, vector<1x128xf32>
    %cst_7 = arith.constant 3.000000e+00 : f32
    %16 = vector.broadcast %cst_7 : f32 to vector<1x128xf32>
    %17 = arith.mulf %16, %15 : vector<1x128xf32>
    %18 = vector.broadcast %17 : vector<1x128xf32> to vector<8x128xf32>
    %19 = arith.addf %14, %18 : vector<8x128xf32>
    %cst_8 = arith.constant 2.500000e-01 : f32
    %20 = vector.broadcast %cst_8 : f32 to vector<8x128xf32>
    %21 = arith.mulf %19, %20 : vector<8x128xf32>
    %c0_9 = arith.constant 0 : index
    %c0_10 = arith.constant 0 : index
    %22 = vector.load %arg4[%c0_9, %c0_10] : memref<8x128xf32, #tpu.memory_space<vmem>>, vector<8x128xf32>
    tpu.vector_store %arg4[%c0_9, %c0_10], %21 {strides = array<i32>} : memref<8x128xf32, #tpu.memory_space<vmem>>, vector<8x128xf32>,
    return
  }
  func.func @transform_0(%arg0: i32) -> (i32, i32, i32) {
    %c0_i32 = arith.constant 0 : i32
    %c0_i32_0 = arith.constant 0 : i32
    %c0_i32_1 = arith.constant 0 : i32
    return %arg0, %c0_i32, %c0_i32_0 : i32, i32, i32
  }
  func.func @transform_1(%arg0: i32) -> (i32, i32) {
    %c0_i32 = arith.constant 0 : i32
    %c0_i32_0 = arith.constant 0 : i32
    %c0_i32_1 = arith.constant 0 : i32
    return %c0_i32, %c0_i32_0 : i32, i32
  }
  func.func @transform_2(%arg0: i32) -> (i32, i32) {
    %c0_i32 = arith.constant 0 : i32
    %c0_i32_0 = arith.constant 0 : i32
    %c0_i32_1 = arith.constant 0 : i32
    return %c0_i32, %c0_i32_0 : i32, i32
  }
  func.func @transform_3(%arg0: i32) -> (i32, i32) {
    %c0_i32 = arith.constant 0 : i32
    %c0_i32_0 = arith.constant 0 : i32
    return %arg0, %c0_i32 : i32, i32
  }
}

</mosaic_0001>

<llo_original>
// kernel: diff_fc_forward.1
$region0: #{diff_fc_forward.1}
  #allocation0 [shape = 'u32[]', space=smem, size = 0x4, offset = 0x4, fixed_abs, tag = 'smem constant byte address 0x4 - core index']
  #allocation1 [shape = 'u32[144,128]{1,0:T(1,128)}', space=vmem, size = 0x12000, scoped, tag = 'internal scratch']
  %s0 = inlined_call_operand.vmem [shape: bf16[8,4,4096], index: 0, kind: input, shape index: {}]
  %s1 = inlined_call_operand.hbm [shape: bf16[4096,128], index: 1, kind: input, shape index: {}]
  %s2 = inlined_call_operand.vmem [shape: f32[1,128], index: 2, kind: input, shape index: {}]
  %s3 = inlined_call_operand.vmem [shape: f32[8,128], index: 3, kind: output, shape index: {}]
  %s4 = sld [smem:[#allocation0]]
  $region26: #{diff_fc_forward.1} parent=0
    _
  %s6 = ssub.s32 1, %s4
  %s7 = scalar_select 0, %s6, %s4
  $region1: #{diff_fc_forward.1} parent=0
    #allocation2 [shape = 'u8[1048576]{0}', space=vmem, size = 0x100000, scoped, tag = 'input window, operand 1, single buffered']
    #allocation3 [shape = 's32[1]{0}', space=sflag, size = 0x4, scoped, tag = 'scoped memory for diff_fc_forward.1']
    %8 = vsyncpa [#allocation3], 0
    // Predicated region
    $region2: #{diff_fc_forward.1} parent=1 // pred_check
      _
    $region3: #{diff_fc_forward.1} parent=1 // pred_check_branch
      %10 = sbr.rel (0) target = $region5
    $region4: #{diff_fc_forward.1} parent=1 // pred_region
      _
    $region5: #{diff_fc_forward.1} parent=1 // pred_fallthru
      _
    // Predicated region
    $region6: #{diff_fc_forward.1} parent=1 // pred_check
      _
    $region7: #{diff_fc_forward.1} parent=1 // pred_check_branch
      %12 = sbr.rel (0) target = $region9
    $region8: #{diff_fc_forward.1} parent=1 // pred_region
      %s14 = ssub.s32 32768, 32768
      %15 = vsyncadd [#allocation3], %s14
      %s16 = sshll.u32 [#allocation2], 4
      %s17 = int_to_ptr.vmem [resolvable:$true] %s16
      %22 = dma.hbm_to_vmem [thread:$0]  %s1, 32768, %s17, [#allocation3], 64, 64, 4
    $region9: #{diff_fc_forward.1} parent=1 // pred_fallthru
      _
    // Predicated region
    $region10: #{diff_fc_forward.1} parent=1 // pred_check
      _
    $region11: #{diff_fc_forward.1} parent=1 // pred_check_branch
      %24 = sbr.rel (0) target = $region13
    $region12: #{diff_fc_forward.1} parent=1 // pred_region
      _
    $region13: #{diff_fc_forward.1} parent=1 // pred_fallthru
      _
    // Predicated region
    $region14: #{diff_fc_forward.1} parent=1 // pred_check
      _
    $region15: #{diff_fc_forward.1} parent=1 // pred_check_branch
      %26 = sbr.rel (0) target = $region17
    $region16: #{diff_fc_forward.1} parent=1 // pred_region
      %27 = dma.done [#allocation3], 32768
    $region17: #{diff_fc_forward.1} parent=1 // pred_fallthru
      _
    %v29 = vld [vmem:[%s0] sm:$0xff]
    %v30 = vld [vmem:[%s0 + $0x8] sm:$0xff]
    %v31 = vld [vmem:[%s0 + $0x10] sm:$0xff]
    %v32 = vld [vmem:[%s0 + $0x18] sm:$0xff]
    %v33 = vld [vmem:[%s0 + $0x20] sm:$0xff]
    %v34 = vld [vmem:[%s0 + $0x28] sm:$0xff]
    %v35 = vld [vmem:[%s0 + $0x30] sm:$0xff]
    %v36 = vld [vmem:[%s0 + $0x38] sm:$0xff]
    %v37 = vld [vmem:[%s0 + $0x40] sm:$0xff]
    %v38 = vld [vmem:[%s0 + $0x48] sm:$0xff]
    %v39 = vld [vmem:[%s0 + $0x50] sm:$0xff]
    %v40 = vld [vmem:[%s0 + $0x58] sm:$0xff]
    %v41 = vld [vmem:[%s0 + $0x60] sm:$0xff]
    %v42 = vld [vmem:[%s0 + $0x68] sm:$0xff]
    %v43 = vld [vmem:[%s0 + $0x70] sm:$0xff]
    %v44 = vld [vmem:[%s0 + $0x78] sm:$0xff]
    %v45 = vld [vmem:[%s0 + $0x80] sm:$0xff]
    %v46 = vld [vmem:[%s0 + $0x88] sm:$0xff]
    %v47 = vld [vmem:[%s0 + $0x90] sm:$0xff]
    %v48 = vld [vmem:[%s0 + $0x98] sm:$0xff]
    %v49 = vld [vmem:[%s0 + $0xa0] sm:$0xff]
    %v50 = vld [vmem:[%s0 + $0xa8] sm:$0xff]
    %v51 = vld [vmem:[%s0 + $0xb0] sm:$0xff]
    %v52 = vld [vmem:[%s0 + $0xb8] sm:$0xff]
    %v53 = vld [vmem:[%s0 + $0xc0] sm:$0xff]
    %v54 = vld [vmem:[%s0 + $0xc8] sm:$0xff]
    %v55 = vld [vmem:[%s0 + $0xd0] sm:$0xff]
    %v56 = vld [vmem:[%s0 + $0xd8] sm:$0xff]
    %v57 = vld [vmem:[%s0 + $0xe0] sm:$0xff]
    %v58 = vld [vmem:[%s0 + $0xe8] sm:$0xff]
    %v59 = vld [vmem:[%s0 + $0xf0] sm:$0xff]
    %v60 = vld [vmem:[%s0 + $0xf8] sm:$0xff]
    %v61 = vld [vmem:[%s0 + $0x100] sm:$0xff]
    %v62 = vld [vmem:[%s0 + $0x108] sm:$0xff]
    %v63 = vld [vmem:[%s0 + $0x110] sm:$0xff]
    %v64 = vld [vmem:[%s0 + $0x118] sm:$0xff]
    %v65 = vld [vmem:[%s0 + $0x120] sm:$0xff]
    %v66 = vld [vmem:[%s0 + $0x128] sm:$0xff]
    %v67 = vld [vmem:[%s0 + $0x130] sm:$0xff]
    %v68 = vld [vmem:[%s0 + $0x138] sm:$0xff]
    %v69 = vld [vmem:[%s0 + $0x140] sm:$0xff]
    %v70 = vld [vmem:[%s0 + $0x148] sm:$0xff]
    %v71 = vld [vmem:[%s0 + $0x150] sm:$0xff]
    %v72 = vld [vmem:[%s0 + $0x158] sm:$0xff]
    %v73 = vld [vmem:[%s0 + $0x160] sm:$0xff]
    %v74 = vld [vmem:[%s0 + $0x168] sm:$0xff]
    %v75 = vld [vmem:[%s0 + $0x170] sm:$0xff]
    %v76 = vld [vmem:[%s0 + $0x178] sm:$0xff]
    %v77 = vld [vmem:[%s0 + $0x180] sm:$0xff]
    %v78 = vld [vmem:[%s0 + $0x188] sm:$0xff]
    %v79 = vld [vmem:[%s0 + $0x190] sm:$0xff]
    %v80 = vld [vmem:[%s0 + $0x198] sm:$0xff]
    %v81 = vld [vmem:[%s0 + $0x1a0] sm:$0xff]
    %v82 = vld [vmem:[%s0 + $0x1a8] sm:$0xff]
    %v83 = vld [vmem:[%s0 + $0x1b0] sm:$0xff]
    %v84 = vld [vmem:[%s0 + $0x1b8] sm:$0xff]
    %v85 = vld [vmem:[%s0 + $0x1c0] sm:$0xff]
    %v86 = vld [vmem:[%s0 + $0x1c8] sm:$0xff]
    %v87 = vld [vmem:[%s0 + $0x1d0] sm:$0xff]
    %v88 = vld [vmem:[%s0 + $0x1d8] sm:$0xff]
    %v89 = vld [vmem:[%s0 + $0x1e0] sm:$0xff]
    %v90 = vld [vmem:[%s0 + $0x1e8] sm:$0xff]
    %v91 = vld [vmem:[%s0 + $0x1f0] sm:$0xff]
    %v92 = vld [vmem:[%s0 + $0x1f8] sm:$0xff]
    %v93 = vunpack.c.l.bf16 %v29
    %v94 = vunpack.c.h.bf16 %v29
    %v95 = vunpack.c.l.bf16 %v30
    %v96 = vunpack.c.h.bf16 %v30
    %v97 = vunpack.c.l.bf16 %v31
    %v98 = vunpack.c.h.bf16 %v31
    %v99 = vunpack.c.l.bf16 %v32
    %v100 = vunpack.c.h.bf16 %v32
    %v101 = vunpack.c.l.bf16 %v33
    %v102 = vunpack.c.h.bf16 %v33
    %v103 = vunpack.c.l.bf16 %v34
    %v104 = vunpack.c.h.bf16 %v34
    %v105 = vunpack.c.l.bf16 %v35
    %v106 = vunpack.c.h.bf16 %v35
    %v107 = vunpack.c.l.bf16 %v36
    %v108 = vunpack.c.h.bf16 %v36
    %v109 = vunpack.c.l.bf16 %v37
    %v110 = vunpack.c.h.bf16 %v37
    %v111 = vunpack.c.l.bf16 %v38
    %v112 = vunpack.c.h.bf16 %v38
    %v113 = vunpack.c.l.bf16 %v39
    %v114 = vunpack.c.h.bf16 %v39
    %v115 = vunpack.c.l.bf16 %v40
    %v116 = vunpack.c.h.bf16 %v40
    %v117 = vunpack.c.l.bf16 %v41
    %v118 = vunpack.c.h.bf16 %v41
    %v119 = vunpack.c.l.bf16 %v42
    %v120 = vunpack.c.h.bf16 %v42
    %v121 = vunpack.c.l.bf16 %v43
    %v122 = vunpack.c.h.bf16 %v43
    %v123 = vunpack.c.l.bf16 %v44
    %v124 = vunpack.c.h.bf16 %v44
    %v125 = vunpack.c.l.bf16 %v45
    %v126 = vunpack.c.h.bf16 %v45
    %v127 = vunpack.c.l.bf16 %v46
    %v128 = vunpack.c.h.bf16 %v46
    %v129 = vunpack.c.l.bf16 %v47
    %v130 = vunpack.c.h.bf16 %v47
    %v131 = vunpack.c.l.bf16 %v48
    %v132 = vunpack.c.h.bf16 %v48
    %v133 = vunpack.c.l.bf16 %v49
    %v134 = vunpack.c.h.bf16 %v49
    %v135 = vunpack.c.l.bf16 %v50
    %v136 = vunpack.c.h.bf16 %v50
    %v137 = vunpack.c.l.bf16 %v51
    %v138 = vunpack.c.h.bf16 %v51
    %v139 = vunpack.c.l.bf16 %v52
    %v140 = vunpack.c.h.bf16 %v52
    %v141 = vunpack.c.l.bf16 %v53
    %v142 = vunpack.c.h.bf16 %v53
    %v143 = vunpack.c.l.bf16 %v54
    %v144 = vunpack.c.h.bf16 %v54
    %v145 = vunpack.c.l.bf16 %v55
    %v146 = vunpack.c.h.bf16 %v55
    %v147 = vunpack.c.l.bf16 %v56
    %v148 = vunpack.c.h.bf16 %v56
    %v149 = vunpack.c.l.bf16 %v57
    %v150 = vunpack.c.h.bf16 %v57
    %v151 = vunpack.c.l.bf16 %v58
    %v152 = vunpack.c.h.bf16 %v58
    %v153 = vunpack.c.l.bf16 %v59
    %v154 = vunpack.c.h.bf16 %v59
    %v155 = vunpack.c.l.bf16 %v60
    %v156 = vunpack.c.h.bf16 %v60
    %v157 = vunpack.c.l.bf16 %v61
    %v158 = vunpack.c.h.bf16 %v61
    %v159 = vunpack.c.l.bf16 %v62
    %v160 = vunpack.c.h.bf16 %v62
    %v161 = vunpack.c.l.bf16 %v63
    %v162 = vunpack.c.h.bf16 %v63
    %v163 = vunpack.c.l.bf16 %v64
    %v164 = vunpack.c.h.bf16 %v64
    %v165 = vunpack.c.l.bf16 %v65
    %v166 = vunpack.c.h.bf16 %v65
    %v167 = vunpack.c.l.bf16 %v66
    %v168 = vunpack.c.h.bf16 %v66
    %v169 = vunpack.c.l.bf16 %v67
    %v170 = vunpack.c.h.bf16 %v67
    %v171 = vunpack.c.l.bf16 %v68
    %v172 = vunpack.c.h.bf16 %v68
    %v173 = vunpack.c.l.bf16 %v69
    %v174 = vunpack.c.h.bf16 %v69
    %v175 = vunpack.c.l.bf16 %v70
    %v176 = vunpack.c.h.bf16 %v70
    %v177 = vunpack.c.l.bf16 %v71
    %v178 = vunpack.c.h.bf16 %v71
    %v179 = vunpack.c.l.bf16 %v72
    %v180 = vunpack.c.h.bf16 %v72
    %v181 = vunpack.c.l.bf16 %v73
    %v182 = vunpack.c.h.bf16 %v73
    %v183 = vunpack.c.l.bf16 %v74
    %v184 = vunpack.c.h.bf16 %v74
    %v185 = vunpack.c.l.bf16 %v75
    %v186 = vunpack.c.h.bf16 %v75
    %v187 = vunpack.c.l.bf16 %v76
    %v188 = vunpack.c.h.bf16 %v76
    %v189 = vunpack.c.l.bf16 %v77
    %v190 = vunpack.c.h.bf16 %v77
    %v191 = vunpack.c.l.bf16 %v78
    %v192 = vunpack.c.h.bf16 %v78
    %v193 = vunpack.c.l.bf16 %v79
    %v194 = vunpack.c.h.bf16 %v79
    %v195 = vunpack.c.l.bf16 %v80
    %v196 = vunpack.c.h.bf16 %v80
    %v197 = vunpack.c.l.bf16 %v81
    %v198 = vunpack.c.h.bf16 %v81
    %v199 = vunpack.c.l.bf16 %v82
    %v200 = vunpack.c.h.bf16 %v82
    %v201 = vunpack.c.l.bf16 %v83
    %v202 = vunpack.c.h.bf16 %v83
    %v203 = vunpack.c.l.bf16 %v84
    %v204 = vunpack.c.h.bf16 %v84
    %v205 = vunpack.c.l.bf16 %v85
    %v206 = vunpack.c.h.bf16 %v85
    %v207 = vunpack.c.l.bf16 %v86
    %v208 = vunpack.c.h.bf16 %v86
    %v209 = vunpack.c.l.bf16 %v87
    %v210 = vunpack.c.h.bf16 %v87
    %v211 = vunpack.c.l.bf16 %v88
    %v212 = vunpack.c.h.bf16 %v88
    %v213 = vunpack.c.l.bf16 %v89
    %v214 = vunpack.c.h.bf16 %v89
    %v215 = vunpack.c.l.bf16 %v90
    %v216 = vunpack.c.h.bf16 %v90
    %v217 = vunpack.c.l.bf16 %v91
    %v218 = vunpack.c.h.bf16 %v91
    %v219 = vunpack.c.l.bf16 %v92
    %v220 = vunpack.c.h.bf16 %v92
    %v349 = vrot.slane %v93, 7
    %v350 = vrot.slane %v94, 7
    %v351 = vrot.slane %v95, 7
    %v352 = vrot.slane %v96, 7
    %v353 = vrot.slane %v97, 7
    %v354 = vrot.slane %v98, 7
    %v355 = vrot.slane %v99, 7
    %v356 = vrot.slane %v100, 7
    %v357 = vrot.slane %v101, 7
    %v358 = vrot.slane %v102, 7
    %v359 = vrot.slane %v103, 7
    %v360 = vrot.slane %v104, 7
    %v361 = vrot.slane %v105, 7
    %v362 = vrot.slane %v106, 7
    %v363 = vrot.slane %v107, 7
    %v364 = vrot.slane %v108, 7
    %v365 = vrot.slane %v109, 7
    %v366 = vrot.slane %v110, 7
    %v367 = vrot.slane %v111, 7
    %v368 = vrot.slane %v112, 7
    %v369 = vrot.slane %v113, 7
    %v370 = vrot.slane %v114, 7
    %v371 = vrot.slane %v115, 7
    %v372 = vrot.slane %v116, 7
    %v373 = vrot.slane %v117, 7
    %v374 = vrot.slane %v118, 7
    %v375 = vrot.slane %v119, 7
    %v376 = vrot.slane %v120, 7
    %v377 = vrot.slane %v121, 7
    %v378 = vrot.slane %v122, 7
    %v379 = vrot.slane %v123, 7
    %v380 = vrot.slane %v124, 7
    %v381 = vrot.slane %v125, 7
    %v382 = vrot.slane %v126, 7
    %v383 = vrot.slane %v127, 7
    %v384 = vrot.slane %v128, 7
    %v385 = vrot.slane %v129, 7
    %v386 = vrot.slane %v130, 7
    %v387 = vrot.slane %v131, 7
    %v388 = vrot.slane %v132, 7
    %v389 = vrot.slane %v133, 7
    %v390 = vrot.slane %v134, 7
    %v391 = vrot.slane %v135, 7
    %v392 = vrot.slane %v136, 7
    %v393 = vrot.slane %v137, 7
    %v394 = vrot.slane %v138, 7
    %v395 = vrot.slane %v139, 7
    %v396 = vrot.slane %v140, 7
    %v397 = vrot.slane %v141, 7
    %v398 = vrot.slane %v142, 7
    %v399 = vrot.slane %v143, 7
    %v400 = vrot.slane %v144, 7
    %v401 = vrot.slane %v145, 7
    %v402 = vrot.slane %v146, 7
    %v403 = vrot.slane %v147, 7
    %v404 = vrot.slane %v148, 7
    %v405 = vrot.slane %v149, 7
    %v406 = vrot.slane %v150, 7
    %v407 = vrot.slane %v151, 7
    %v408 = vrot.slane %v152, 7
    %v409 = vrot.slane %v153, 7
    %v410 = vrot.slane %v154, 7
    %v411 = vrot.slane %v155, 7
    %v412 = vrot.slane %v156, 7
    %v413 = vrot.slane %v157, 7
    %v414 = vrot.slane %v158, 7
    %v415 = vrot.slane %v159, 7
    %v416 = vrot.slane %v160, 7
    %v417 = vrot.slane %v161, 7
    %v418 = vrot.slane %v162, 7
    %v419 = vrot.slane %v163, 7
    %v420 = vrot.slane %v164, 7
    %v421 = vrot.slane %v165, 7
    %v422 = vrot.slane %v166, 7
    %v423 = vrot.slane %v167, 7
    %v424 = vrot.slane %v168, 7
    %v425 = vrot.slane %v169, 7
    %v426 = vrot.slane %v170, 7
    %v427 = vrot.slane %v171, 7
    %v428 = vrot.slane %v172, 7
    %v429 = vrot.slane %v173, 7
    %v430 = vrot.slane %v174, 7
    %v431 = vrot.slane %v175, 7
    %v432 = vrot.slane %v176, 7
    %v433 = vrot.slane %v177, 7
    %v434 = vrot.slane %v178, 7
    %v435 = vrot.slane %v179, 7
    %v436 = vrot.slane %v180, 7
    %v437 = vrot.slane %v181, 7
    %v438 = vrot.slane %v182, 7
    %v439 = vrot.slane %v183, 7
    %v440 = vrot.slane %v184, 7
    %v441 = vrot.slane %v185, 7
    %v442 = vrot.slane %v186, 7
    %v443 = vrot.slane %v187, 7
    %v444 = vrot.slane %v188, 7
    %v445 = vrot.slane %v189, 7
    %v446 = vrot.slane %v190, 7
    %v447 = vrot.slane %v191, 7
    %v448 = vrot.slane %v192, 7
    %v449 = vrot.slane %v193, 7
    %v450 = vrot.slane %v194, 7
    %v451 = vrot.slane %v195, 7
    %v452 = vrot.slane %v196, 7
    %v453 = vrot.slane %v197, 7
    %v454 = vrot.slane %v198, 7
    %v455 = vrot.slane %v199, 7
    %v456 = vrot.slane %v200, 7
    %v457 = vrot.slane %v201, 7
    %v458 = vrot.slane %v202, 7
    %v459 = vrot.slane %v203, 7
    %v460 = vrot.slane %v204, 7
    %v461 = vrot.slane %v205, 7
    %v462 = vrot.slane %v206, 7
    %v463 = vrot.slane %v207, 7
    %v464 = vrot.slane %v208, 7
    %v465 = vrot.slane %v209, 7
    %v466 = vrot.slane %v210, 7
    %v467 = vrot.slane %v211, 7
    %v468 = vrot.slane %v212, 7
    %v469 = vrot.slane %v213, 7
    %v470 = vrot.slane %v214, 7
    %v471 = vrot.slane %v215, 7
    %v472 = vrot.slane %v216, 7
    %v473 = vrot.slane %v217, 7
    %v474 = vrot.slane %v218, 7
    %v475 = vrot.slane %v219, 7
    %v476 = vrot.slane %v220, 7
    %vm605 = vcmp.gt.f32.partialorder %v93, %v349
    %vm606 = vcmp.gt.f32.partialorder %v94, %v350
    %vm607 = vcmp.gt.f32.partialorder %v95, %v351
    %vm608 = vcmp.gt.f32.partialorder %v96, %v352
    %vm609 = vcmp.gt.f32.partialorder %v97, %v353
    %vm610 = vcmp.gt.f32.partialorder %v98, %v354
    %vm611 = vcmp.gt.f32.partialorder %v99, %v355
    %vm612 = vcmp.gt.f32.partialorder %v100, %v356
    %vm613 = vcmp.gt.f32.partialorder %v101, %v357
    %vm614 = vcmp.gt.f32.partialorder %v102, %v358
    %vm615 = vcmp.gt.f32.partialorder %v103, %v359
    %vm616 = vcmp.gt.f32.partialorder %v104, %v360
    %vm617 = vcmp.gt.f32.partialorder %v105, %v361
    %vm618 = vcmp.gt.f32.partialorder %v106, %v362
    %vm619 = vcmp.gt.f32.partialorder %v107, %v363
    %vm620 = vcmp.gt.f32.partialorder %v108, %v364
    %vm621 = vcmp.gt.f32.partialorder %v109, %v365
    %vm622 = vcmp.gt.f32.partialorder %v110, %v366
    %vm623 = vcmp.gt.f32.partialorder %v111, %v367
    %vm624 = vcmp.gt.f32.partialorder %v112, %v368
    %vm625 = vcmp.gt.f32.partialorder %v113, %v369
    %vm626 = vcmp.gt.f32.partialorder %v114, %v370
    %vm627 = vcmp.gt.f32.partialorder %v115, %v371
    %vm628 = vcmp.gt.f32.partialorder %v116, %v372
    %vm629 = vcmp.gt.f32.partialorder %v117, %v373
    %vm630 = vcmp.gt.f32.partialorder %v118, %v374
    %vm631 = vcmp.gt.f32.partialorder %v119, %v375
    %vm632 = vcmp.gt.f32.partialorder %v120, %v376
    %vm633 = vcmp.gt.f32.partialorder %v121, %v377
    %vm634 = vcmp.gt.f32.partialorder %v122, %v378
    %vm635 = vcmp.gt.f32.partialorder %v123, %v379
    %vm636 = vcmp.gt.f32.partialorder %v124, %v380
    %vm637 = vcmp.gt.f32.partialorder %v125, %v381
    %vm638 = vcmp.gt.f32.partialorder %v126, %v382
    %vm639 = vcmp.gt.f32.partialorder %v127, %v383
    %vm640 = vcmp.gt.f32.partialorder %v128, %v384
    %vm641 = vcmp.gt.f32.partialorder %v129, %v385
    %vm642 = vcmp.gt.f32.partialorder %v130, %v386
    %vm643 = vcmp.gt.f32.partialorder %v131, %v387
    %vm644 = vcmp.gt.f32.partialorder %v132, %v388
    %vm645 = vcmp.gt.f32.partialorder %v133, %v389
    %vm646 = vcmp.gt.f32.partialorder %v134, %v390
    %vm647 = vcmp.gt.f32.partialorder %v135, %v391
    %vm648 = vcmp.gt.f32.partialorder %v136, %v392
    %vm649 = vcmp.gt.f32.partialorder %v137, %v393
    %vm650 = vcmp.gt.f32.partialorder %v138, %v394
    %vm651 = vcmp.gt.f32.partialorder %v139, %v395
    %vm652 = vcmp.gt.f32.partialorder %v140, %v396
    %vm653 = vcmp.gt.f32.partialorder %v141, %v397
    %vm654 = vcmp.gt.f32.partialorder %v142, %v398
    %vm655 = vcmp.gt.f32.partialorder %v143, %v399
    %vm656 = vcmp.gt.f32.partialorder %v144, %v400
    %vm657 = vcmp.gt.f32.partialorder %v145, %v401
    %vm658 = vcmp.gt.f32.partialorder %v146, %v402
    %vm659 = vcmp.gt.f32.partialorder %v147, %v403
    %vm660 = vcmp.gt.f32.partialorder %v148, %v404
    %vm661 = vcmp.gt.f32.partialorder %v149, %v405
    %vm662 = vcmp.gt.f32.partialorder %v150, %v406
    %vm663 = vcmp.gt.f32.partialorder %v151, %v407
    %vm664 = vcmp.gt.f32.partialorder %v152, %v408
    %vm665 = vcmp.gt.f32.partialorder %v153, %v409
    %vm666 = vcmp.gt.f32.partialorder %v154, %v410
    %vm667 = vcmp.gt.f32.partialorder %v155, %v411
    %vm668 = vcmp.gt.f32.partialorder %v156, %v412
    %vm669 = vcmp.gt.f32.partialorder %v157, %v413
    %vm670 = vcmp.gt.f32.partialorder %v158, %v414
    %vm671 = vcmp.gt.f32.partialorder %v159, %v415
    %vm672 = vcmp.gt.f32.partialorder %v160, %v416
    %vm673 = vcmp.gt.f32.partialorder %v161, %v417
    %vm674 = vcmp.gt.f32.partialorder %v162, %v418
    %vm675 = vcmp.gt.f32.partialorder %v163, %v419
    %vm676 = vcmp.gt.f32.partialorder %v164, %v420
    %vm677 = vcmp.gt.f32.partialorder %v165, %v421
    %vm678 = vcmp.gt.f32.partialorder %v166, %v422
    %vm679 = vcmp.gt.f32.partialorder %v167, %v423
    %vm680 = vcmp.gt.f32.partialorder %v168, %v424
    %vm681 = vcmp.gt.f32.partialorder %v169, %v425
    %vm682 = vcmp.gt.f32.partialorder %v170, %v426
    %vm683 = vcmp.gt.f32.partialorder %v171, %v427
    %vm684 = vcmp.gt.f32.partialorder %v172, %v428
    %vm685 = vcmp.gt.f32.partialorder %v173, %v429
    %vm686 = vcmp.gt.f32.partialorder %v174, %v430
    %vm687 = vcmp.gt.f32.partialorder %v175, %v431
    %vm688 = vcmp.gt.f32.partialorder %v176, %v432
    %vm689 = vcmp.gt.f32.partialorder %v177, %v433
    %vm690 = vcmp.gt.f32.partialorder %v178, %v434
    %vm691 = vcmp.gt.f32.partialorder %v179, %v435
    %vm692 = vcmp.gt.f32.partialorder %v180, %v436
    %vm693 = vcmp.gt.f32.partialorder %v181, %v437
    %vm694 = vcmp.gt.f32.partialorder %v182, %v438
    %vm695 = vcmp.gt.f32.partialorder %v183, %v439
    %vm696 = vcmp.gt.f32.partialorder %v184, %v440
    %vm697 = vcmp.gt.f32.partialorder %v185, %v441
    %vm698 = vcmp.gt.f32.partialorder %v186, %v442
    %vm699 = vcmp.gt.f32.partialorder %v187, %v443
    %vm700 = vcmp.gt.f32.partialorder %v188, %v444
    %vm701 = vcmp.gt.f32.partialorder %v189, %v445
    %vm702 = vcmp.gt.f32.partialorder %v190, %v446
    %vm703 = vcmp.gt.f32.partialorder %v191, %v447
    %vm704 = vcmp.gt.f32.partialorder %v192, %v448
    %vm705 = vcmp.gt.f32.partialorder %v193, %v449
    %vm706 = vcmp.gt.f32.partialorder %v194, %v450
    %vm707 = vcmp.gt.f32.partialorder %v195, %v451
    %vm708 = vcmp.gt.f32.partialorder %v196, %v452
    %vm709 = vcmp.gt.f32.partialorder %v197, %v453
    %vm710 = vcmp.gt.f32.partialorder %v198, %v454
    %vm711 = vcmp.gt.f32.partialorder %v199, %v455
    %vm712 = vcmp.gt.f32.partialorder %v200, %v456
    %vm713 = vcmp.gt.f32.partialorder %v201, %v457
    %vm714 = vcmp.gt.f32.partialorder %v202, %v458
    %vm715 = vcmp.gt.f32.partialorder %v203, %v459
    %vm716 = vcmp.gt.f32.partialorder %v204, %v460
    %vm717 = vcmp.gt.f32.partialorder %v205, %v461
    %vm718 = vcmp.gt.f32.partialorder %v206, %v462
    %vm719 = vcmp.gt.f32.partialorder %v207, %v463
    %vm720 = vcmp.gt.f32.partialorder %v208, %v464
    %vm721 = vcmp.gt.f32.partialorder %v209, %v465
    %vm722 = vcmp.gt.f32.partialorder %v210, %v466
    %vm723 = vcmp.gt.f32.partialorder %v211, %v467
    %vm724 = vcmp.gt.f32.partialorder %v212, %v468
    %vm725 = vcmp.gt.f32.partialorder %v213, %v469
    %vm726 = vcmp.gt.f32.partialorder %v214, %v470
    %vm727 = vcmp.gt.f32.partialorder %v215, %v471
    %vm728 = vcmp.gt.f32.partialorder %v216, %v472
    %vm729 = vcmp.gt.f32.partialorder %v217, %v473
    %vm730 = vcmp.gt.f32.partialorder %v218, %v474
    %vm731 = vcmp.gt.f32.partialorder %v219, %v475
    %vm732 = vcmp.gt.f32.partialorder %v220, %v476
    %v733 = vsel %vm605, 1, 0
    %v734 = vsel %vm606, 1, 0
    %v735 = vsel %vm607, 1, 0
    %v736 = vsel %vm608, 1, 0
    %v737 = vsel %vm609, 1, 0
    %v738 = vsel %vm610, 1, 0
    %v739 = vsel %vm611, 1, 0
    %v740 = vsel %vm612, 1, 0
    %v741 = vsel %vm613, 1, 0
    %v742 = vsel %vm614, 1, 0
    %v743 = vsel %vm615, 1, 0
    %v744 = vsel %vm616, 1, 0
    %v745 = vsel %vm617, 1, 0
    %v746 = vsel %vm618, 1, 0
    %v747 = vsel %vm619, 1, 0
    %v748 = vsel %vm620, 1, 0
    %v749 = vsel %vm621, 1, 0
    %v750 = vsel %vm622, 1, 0
    %v751 = vsel %vm623, 1, 0
    %v752 = vsel %vm624, 1, 0
    %v753 = vsel %vm625, 1, 0
    %v754 = vsel %vm626, 1, 0
    %v755 = vsel %vm627, 1, 0
    %v756 = vsel %vm628, 1, 0
    %v757 = vsel %vm629, 1, 0
    %v758 = vsel %vm630, 1, 0
    %v759 = vsel %vm631, 1, 0
    %v760 = vsel %vm632, 1, 0
    %v761 = vsel %vm633, 1, 0
    %v762 = vsel %vm634, 1, 0
    %v763 = vsel %vm635, 1, 0
    %v764 = vsel %vm636, 1, 0
    %v765 = vsel %vm637, 1, 0
    %v766 = vsel %vm638, 1, 0
    %v767 = vsel %vm639, 1, 0
    %v768 = vsel %vm640, 1, 0
    %v769 = vsel %vm641, 1, 0
    %v770 = vsel %vm642, 1, 0
    %v771 = vsel %vm643, 1, 0
    %v772 = vsel %vm644, 1, 0
    %v773 = vsel %vm645, 1, 0
    %v774 = vsel %vm646, 1, 0
    %v775 = vsel %vm647, 1, 0
    %v776 = vsel %vm648, 1, 0
    %v777 = vsel %vm649, 1, 0
    %v778 = vsel %vm650, 1, 0
    %v779 = vsel %vm651, 1, 0
    %v780 = vsel %vm652, 1, 0
    %v781 = vsel %vm653, 1, 0
    %v782 = vsel %vm654, 1, 0
    %v783 = vsel %vm655, 1, 0
    %v784 = vsel %vm656, 1, 0
    %v785 = vsel %vm657, 1, 0
    %v786 = vsel %vm658, 1, 0
    %v787 = vsel %vm659, 1, 0
    %v788 = vsel %vm660, 1, 0
    %v789 = vsel %vm661, 1, 0
    %v790 = vsel %vm662, 1, 0
    %v791 = vsel %vm663, 1, 0
    %v792 = vsel %vm664, 1, 0
    %v793 = vsel %vm665, 1, 0
    %v794 = vsel %vm666, 1, 0
    %v795 = vsel %vm667, 1, 0
    %v796 = vsel %vm668, 1, 0
    %v797 = vsel %vm669, 1, 0
    %v798 = vsel %vm670, 1, 0
    %v799 = vsel %vm671, 1, 0
    %v800 = vsel %vm672, 1, 0
    %v801 = vsel %vm673, 1, 0
    %v802 = vsel %vm674, 1, 0
    %v803 = vsel %vm675, 1, 0
    %v804 = vsel %vm676, 1, 0
    %v805 = vsel %vm677, 1, 0
    %v806 = vsel %vm678, 1, 0
    %v807 = vsel %vm679, 1, 0
    %v808 = vsel %vm680, 1, 0
    %v809 = vsel %vm681, 1, 0
    %v810 = vsel %vm682, 1, 0
    %v811 = vsel %vm683, 1, 0
    %v812 = vsel %vm684, 1, 0
    %v813 = vsel %vm685, 1, 0
    %v814 = vsel %vm686, 1, 0
    %v815 = vsel %vm687, 1, 0
    %v816 = vsel %vm688, 1, 0
    %v817 = vsel %vm689, 1, 0
    %v818 = vsel %vm690, 1, 0
    %v819 = vsel %vm691, 1, 0
    %v820 = vsel %vm692, 1, 0
    %v821 = vsel %vm693, 1, 0
    %v822 = vsel %vm694, 1, 0
    %v823 = vsel %vm695, 1, 0
    %v824 = vsel %vm696, 1, 0
    %v825 = vsel %vm697, 1, 0
    %v826 = vsel %vm698, 1, 0
    %v827 = vsel %vm699, 1, 0
    %v828 = vsel %vm700, 1, 0
    %v829 = vsel %vm701, 1, 0
    %v830 = vsel %vm702, 1, 0
    %v831 = vsel %vm703, 1, 0
    %v832 = vsel %vm704, 1, 0
    %v833 = vsel %vm705, 1, 0
    %v834 = vsel %vm706, 1, 0
    %v835 = vsel %vm707, 1, 0
    %v836 = vsel %vm708, 1, 0
    %v837 = vsel %vm709, 1, 0
    %v838 = vsel %vm710, 1, 0
    %v839 = vsel %vm711, 1, 0
    %v840 = vsel %vm712, 1, 0
    %v841 = vsel %vm713, 1, 0
    %v842 = vsel %vm714, 1, 0
    %v843 = vsel %vm715, 1, 0
    %v844 = vsel %vm716, 1, 0
    %v845 = vsel %vm717, 1, 0
    %v846 = vsel %vm718, 1, 0
    %v847 = vsel %vm719, 1, 0
    %v848 = vsel %vm720, 1, 0
    %v849 = vsel %vm721, 1, 0
    %v850 = vsel %vm722, 1, 0
    %v851 = vsel %vm723, 1, 0
    %v852 = vsel %vm724, 1, 0
    %v853 = vsel %vm725, 1, 0
    %v854 = vsel %vm726, 1, 0
    %v855 = vsel %vm727, 1, 0
    %v856 = vsel %vm728, 1, 0
    %v857 = vsel %vm729, 1, 0
    %v858 = vsel %vm730, 1, 0
    %v859 = vsel %vm731, 1, 0
    %v860 = vsel %vm732, 1, 0
    %v861 = vcvt.s32.f32 %v733
    %v862 = vcvt.s32.f32 %v734
    %v863 = vcvt.s32.f32 %v735
    %v864 = vcvt.s32.f32 %v736
    %v865 = vcvt.s32.f32 %v737
    %v866 = vcvt.s32.f32 %v738
    %v867 = vcvt.s32.f32 %v739
    %v868 = vcvt.s32.f32 %v740
    %v869 = vcvt.s32.f32 %v741
    %v870 = vcvt.s32.f32 %v742
    %v871 = vcvt.s32.f32 %v743
    %v872 = vcvt.s32.f32 %v744
    %v873 = vcvt.s32.f32 %v745
    %v874 = vcvt.s32.f32 %v746
    %v875 = vcvt.s32.f32 %v747
    %v876 = vcvt.s32.f32 %v748
    %v877 = vcvt.s32.f32 %v749
    %v878 = vcvt.s32.f32 %v750
    %v879 = vcvt.s32.f32 %v751
    %v880 = vcvt.s32.f32 %v752
    %v881 = vcvt.s32.f32 %v753
    %v882 = vcvt.s32.f32 %v754
    %v883 = vcvt.s32.f32 %v755
    %v884 = vcvt.s32.f32 %v756
    %v885 = vcvt.s32.f32 %v757
    %v886 = vcvt.s32.f32 %v758
    %v887 = vcvt.s32.f32 %v759
    %v888 = vcvt.s32.f32 %v760
    %v889 = vcvt.s32.f32 %v761
    %v890 = vcvt.s32.f32 %v762
    %v891 = vcvt.s32.f32 %v763
    %v892 = vcvt.s32.f32 %v764
    %v893 = vcvt.s32.f32 %v765
    %v894 = vcvt.s32.f32 %v766
    %v895 = vcvt.s32.f32 %v767
    %v896 = vcvt.s32.f32 %v768
    %v897 = vcvt.s32.f32 %v769
    %v898 = vcvt.s32.f32 %v770
    %v899 = vcvt.s32.f32 %v771
    %v900 = vcvt.s32.f32 %v772
    %v901 = vcvt.s32.f32 %v773
    %v902 = vcvt.s32.f32 %v774
    %v903 = vcvt.s32.f32 %v775
    %v904 = vcvt.s32.f32 %v776
    %v905 = vcvt.s32.f32 %v777
    %v906 = vcvt.s32.f32 %v778
    %v907 = vcvt.s32.f32 %v779
    %v908 = vcvt.s32.f32 %v780
    %v909 = vcvt.s32.f32 %v781
    %v910 = vcvt.s32.f32 %v782
    %v911 = vcvt.s32.f32 %v783
    %v912 = vcvt.s32.f32 %v784
    %v913 = vcvt.s32.f32 %v785
    %v914 = vcvt.s32.f32 %v786
    %v915 = vcvt.s32.f32 %v787
    %v916 = vcvt.s32.f32 %v788
    %v917 = vcvt.s32.f32 %v789
    %v918 = vcvt.s32.f32 %v790
    %v919 = vcvt.s32.f32 %v791
    %v920 = vcvt.s32.f32 %v792
    %v921 = vcvt.s32.f32 %v793
    %v922 = vcvt.s32.f32 %v794
    %v923 = vcvt.s32.f32 %v795
    %v924 = vcvt.s32.f32 %v796
    %v925 = vcvt.s32.f32 %v797
    %v926 = vcvt.s32.f32 %v798
    %v927 = vcvt.s32.f32 %v799
    %v928 = vcvt.s32.f32 %v800
    %v929 = vcvt.s32.f32 %v801
    %v930 = vcvt.s32.f32 %v802
    %v931 = vcvt.s32.f32 %v803
    %v932 = vcvt.s32.f32 %v804
    %v933 = vcvt.s32.f32 %v805
    %v934 = vcvt.s32.f32 %v806
    %v935 = vcvt.s32.f32 %v807
    %v936 = vcvt.s32.f32 %v808
    %v937 = vcvt.s32.f32 %v809
    %v938 = vcvt.s32.f32 %v810
    %v939 = vcvt.s32.f32 %v811
    %v940 = vcvt.s32.f32 %v812
    %v941 = vcvt.s32.f32 %v813
    %v942 = vcvt.s32.f32 %v814
    %v943 = vcvt.s32.f32 %v815
    %v944 = vcvt.s32.f32 %v816
    %v945 = vcvt.s32.f32 %v817
    %v946 = vcvt.s32.f32 %v818
    %v947 = vcvt.s32.f32 %v819
    %v948 = vcvt.s32.f32 %v820
    %v949 = vcvt.s32.f32 %v821
    %v950 = vcvt.s32.f32 %v822
    %v951 = vcvt.s32.f32 %v823
    %v952 = vcvt.s32.f32 %v824
    %v953 = vcvt.s32.f32 %v825
    %v954 = vcvt.s32.f32 %v826
    %v955 = vcvt.s32.f32 %v827
    %v956 = vcvt.s32.f32 %v828
    %v957 = vcvt.s32.f32 %v829
    %v958 = vcvt.s32.f32 %v830
    %v959 = vcvt.s32.f32 %v831
    %v960 = vcvt.s32.f32 %v832
    %v961 = vcvt.s32.f32 %v833
    %v962 = vcvt.s32.f32 %v834
    %v963 = vcvt.s32.f32 %v835
    %v964 = vcvt.s32.f32 %v836
    %v965 = vcvt.s32.f32 %v837
    %v966 = vcvt.s32.f32 %v838
    %v967 = vcvt.s32.f32 %v839
    %v968 = vcvt.s32.f32 %v840
    %v969 = vcvt.s32.f32 %v841
    %v970 = vcvt.s32.f32 %v842
    %v971 = vcvt.s32.f32 %v843
    %v972 = vcvt.s32.f32 %v844
    %v973 = vcvt.s32.f32 %v845
    %v974 = vcvt.s32.f32 %v846
    %v975 = vcvt.s32.f32 %v847
    %v976 = vcvt.s32.f32 %v848
    %v977 = vcvt.s32.f32 %v849
    %v978 = vcvt.s32.f32 %v850
    %v979 = vcvt.s32.f32 %v851
    %v980 = vcvt.s32.f32 %v852
    %v981 = vcvt.s32.f32 %v853
    %v982 = vcvt.s32.f32 %v854
    %v983 = vcvt.s32.f32 %v855
    %v984 = vcvt.s32.f32 %v856
    %v985 = vcvt.s32.f32 %v857
    %v986 = vcvt.s32.f32 %v858
    %v987 = vcvt.s32.f32 %v859
    %v988 = vcvt.s32.f32 %v860
    %vm989 = vcmp.lt.f32.partialorder %v93, %v349
    %vm990 = vcmp.lt.f32.partialorder %v94, %v350
    %vm991 = vcmp.lt.f32.partialorder %v95, %v351
    %vm992 = vcmp.lt.f32.partialorder %v96, %v352
    %vm993 = vcmp.lt.f32.partialorder %v97, %v353
    %vm994 = vcmp.lt.f32.partialorder %v98, %v354
    %vm995 = vcmp.lt.f32.partialorder %v99, %v355
    %vm996 = vcmp.lt.f32.partialorder %v100, %v356
    %vm997 = vcmp.lt.f32.partialorder %v101, %v357
    %vm998 = vcmp.lt.f32.partialorder %v102, %v358
    %vm999 = vcmp.lt.f32.partialorder %v103, %v359
    %vm1000 = vcmp.lt.f32.partialorder %v104, %v360
    %vm1001 = vcmp.lt.f32.partialorder %v105, %v361
    %vm1002 = vcmp.lt.f32.partialorder %v106, %v362
    %vm1003 = vcmp.lt.f32.partialorder %v107, %v363
    %vm1004 = vcmp.lt.f32.partialorder %v108, %v364
    %vm1005 = vcmp.lt.f32.partialorder %v109, %v365
    %vm1006 = vcmp.lt.f32.partialorder %v110, %v366
    %vm1007 = vcmp.lt.f32.partialorder %v111, %v367
    %vm1008 = vcmp.lt.f32.partialorder %v112, %v368
    %vm1009 = vcmp.lt.f32.partialorder %v113, %v369
    %vm1010 = vcmp.lt.f32.partialorder %v114, %v370
    %vm1011 = vcmp.lt.f32.partialorder %v115, %v371
    %vm1012 = vcmp.lt.f32.partialorder %v116, %v372
    %vm1013 = vcmp.lt.f32.partialorder %v117, %v373
    %vm1014 = vcmp.lt.f32.partialorder %v118, %v374
    %vm1015 = vcmp.lt.f32.partialorder %v119, %v375
    %vm1016 = vcmp.lt.f32.partialorder %v120, %v376
    %vm1017 = vcmp.lt.f32.partialorder %v121, %v377
    %vm1018 = vcmp.lt.f32.partialorder %v122, %v378
    %vm1019 = vcmp.lt.f32.partialorder %v123, %v379
    %vm1020 = vcmp.lt.f32.partialorder %v124, %v380
    %vm1021 = vcmp.lt.f32.partialorder %v125, %v381
    %vm1022 = vcmp.lt.f32.partialorder %v126, %v382
    %vm1023 = vcmp.lt.f32.partialorder %v127, %v383
    %vm1024 = vcmp.lt.f32.partialorder %v128, %v384
    %vm1025 = vcmp.lt.f32.partialorder %v129, %v385
    %vm1026 = vcmp.lt.f32.partialorder %v130, %v386
    %vm1027 = vcmp.lt.f32.partialorder %v131, %v387
    %vm1028 = vcmp.lt.f32.partialorder %v132, %v388
    %vm1029 = vcmp.lt.f32.partialorder %v133, %v389
    %vm1030 = vcmp.lt.f32.partialorder %v134, %v390
    %vm1031 = vcmp.lt.f32.partialorder %v135, %v391
    %vm1032 = vcmp.lt.f32.partialorder %v136, %v392
    %vm1033 = vcmp.lt.f32.partialorder %v137, %v393
    %vm1034 = vcmp.lt.f32.partialorder %v138, %v394
    %vm1035 = vcmp.lt.f32.partialorder %v139, %v395
    %vm1036 = vcmp.lt.f32.partialorder %v140, %v396
    %vm1037 = vcmp.lt.f32.partialorder %v141, %v397
    %vm1038 = vcmp.lt.f32.partialorder %v142, %v398
    %vm1039 = vcmp.lt.f32.partialorder %v143, %v399
    %vm1040 = vcmp.lt.f32.partialorder %v144, %v400
    %vm1041 = vcmp.lt.f32.partialorder %v145, %v401
    %vm1042 = vcmp.lt.f32.partialorder %v146, %v402
    %vm1043 = vcmp.lt.f32.partialorder %v147, %v403
    %vm1044 = vcmp.lt.f32.partialorder %v148, %v404
    %vm1045 = vcmp.lt.f32.partialorder %v149, %v405
    %vm1046 = vcmp.lt.f32.partialorder %v150, %v406
    %vm1047 = vcmp.lt.f32.partialorder %v151, %v407
    %vm1048 = vcmp.lt.f32.partialorder %v152, %v408
    %vm1049 = vcmp.lt.f32.partialorder %v153, %v409
    %vm1050 = vcmp.lt.f32.partialorder %v154, %v410
    %vm1051 = vcmp.lt.f32.partialorder %v155, %v411
    %vm1052 = vcmp.lt.f32.partialorder %v156, %v412
    %vm1053 = vcmp.lt.f32.partialorder %v157, %v413
    %vm1054 = vcmp.lt.f32.partialorder %v158, %v414
    %vm1055 = vcmp.lt.f32.partialorder %v159, %v415
    %vm1056 = vcmp.lt.f32.partialorder %v160, %v416
    %vm1057 = vcmp.lt.f32.partialorder %v161, %v417
    %vm1058 = vcmp.lt.f32.partialorder %v162, %v418
    %vm1059 = vcmp.lt.f32.partialorder %v163, %v419
    %vm1060 = vcmp.lt.f32.partialorder %v164, %v420
    %vm1061 = vcmp.lt.f32.partialorder %v165, %v421
    %vm1062 = vcmp.lt.f32.partialorder %v166, %v422
    %vm1063 = vcmp.lt.f32.partialorder %v167, %v423
    %vm1064 = vcmp.lt.f32.partialorder %v168, %v424
    %vm1065 = vcmp.lt.f32.partialorder %v169, %v425
    %vm1066 = vcmp.lt.f32.partialorder %v170, %v426
    %vm1067 = vcmp.lt.f32.partialorder %v171, %v427
    %vm1068 = vcmp.lt.f32.partialorder %v172, %v428
    %vm1069 = vcmp.lt.f32.partialorder %v173, %v429
    %vm1070 = vcmp.lt.f32.partialorder %v174, %v430
    %vm1071 = vcmp.lt.f32.partialorder %v175, %v431
    %vm1072 = vcmp.lt.f32.partialorder %v176, %v432
    %vm1073 = vcmp.lt.f32.partialorder %v177, %v433
    %vm1074 = vcmp.lt.f32.partialorder %v178, %v434
    %vm1075 = vcmp.lt.f32.partialorder %v179, %v435
    %vm1076 = vcmp.lt.f32.partialorder %v180, %v436
    %vm1077 = vcmp.lt.f32.partialorder %v181, %v437
    %vm1078 = vcmp.lt.f32.partialorder %v182, %v438
    %vm1079 = vcmp.lt.f32.partialorder %v183, %v439
    %vm1080 = vcmp.lt.f32.partialorder %v184, %v440
    %vm1081 = vcmp.lt.f32.partialorder %v185, %v441
    %vm1082 = vcmp.lt.f32.partialorder %v186, %v442
    %vm1083 = vcmp.lt.f32.partialorder %v187, %v443
    %vm1084 = vcmp.lt.f32.partialorder %v188, %v444
    %vm1085 = vcmp.lt.f32.partialorder %v189, %v445
    %vm1086 = vcmp.lt.f32.partialorder %v190, %v446
    %vm1087 = vcmp.lt.f32.partialorder %v191, %v447
    %vm1088 = vcmp.lt.f32.partialorder %v192, %v448
    %vm1089 = vcmp.lt.f32.partialorder %v193, %v449
    %vm1090 = vcmp.lt.f32.partialorder %v194, %v450
    %vm1091 = vcmp.lt.f32.partialorder %v195, %v451
    %vm1092 = vcmp.lt.f32.partialorder %v196, %v452
    %vm1093 = vcmp.lt.f32.partialorder %v197, %v453
    %vm1094 = vcmp.lt.f32.partialorder %v198, %v454
    %vm1095 = vcmp.lt.f32.partialorder %v199, %v455
    %vm1096 = vcmp.lt.f32.partialorder %v200, %v456
    %vm1097 = vcmp.lt.f32.partialorder %v201, %v457
    %vm1098 = vcmp.lt.f32.partialorder %v202, %v458
    %vm1099 = vcmp.lt.f32.partialorder %v203, %v459
    %vm1100 = vcmp.lt.f32.partialorder %v204, %v460
    %vm1101 = vcmp.lt.f32.partialorder %v205, %v461
    %vm1102 = vcmp.lt.f32.partialorder %v206, %v462
    %vm1103 = vcmp.lt.f32.partialorder %v207, %v463
    %vm1104 = vcmp.lt.f32.partialorder %v208, %v464
    %vm1105 = vcmp.lt.f32.partialorder %v209, %v465
    %vm1106 = vcmp.lt.f32.partialorder %v210, %v466
    %vm1107 = vcmp.lt.f32.partialorder %v211, %v467
    %vm1108 = vcmp.lt.f32.partialorder %v212, %v468
    %vm1109 = vcmp.lt.f32.partialorder %v213, %v469
    %vm1110 = vcmp.lt.f32.partialorder %v214, %v470
    %vm1111 = vcmp.lt.f32.partialorder %v215, %v471
    %vm1112 = vcmp.lt.f32.partialorder %v216, %v472
    %vm1113 = vcmp.lt.f32.partialorder %v217, %v473
    %vm1114 = vcmp.lt.f32.partialorder %v218, %v474
    %vm1115 = vcmp.lt.f32.partialorder %v219, %v475
    %vm1116 = vcmp.lt.f32.partialorder %v220, %v476
    %v1117 = vsel %vm989, 1, 0
    %v1118 = vsel %vm990, 1, 0
    %v1119 = vsel %vm991, 1, 0
    %v1120 = vsel %vm992, 1, 0
    %v1121 = vsel %vm993, 1, 0
    %v1122 = vsel %vm994, 1, 0
    %v1123 = vsel %vm995, 1, 0
    %v1124 = vsel %vm996, 1, 0
    %v1125 = vsel %vm997, 1, 0
    %v1126 = vsel %vm998, 1, 0
    %v1127 = vsel %vm999, 1, 0
    %v1128 = vsel %vm1000, 1, 0
    %v1129 = vsel %vm1001, 1, 0
    %v1130 = vsel %vm1002, 1, 0
    %v1131 = vsel %vm1003, 1, 0
    %v1132 = vsel %vm1004, 1, 0
    %v1133 = vsel %vm1005, 1, 0
    %v1134 = vsel %vm1006, 1, 0
    %v1135 = vsel %vm1007, 1, 0
    %v1136 = vsel %vm1008, 1, 0
    %v1137 = vsel %vm1009, 1, 0
    %v1138 = vsel %vm1010, 1, 0
    %v1139 = vsel %vm1011, 1, 0
    %v1140 = vsel %vm1012, 1, 0
    %v1141 = vsel %vm1013, 1, 0
    %v1142 = vsel %vm1014, 1, 0
    %v1143 = vsel %vm1015, 1, 0
    %v1144 = vsel %vm1016, 1, 0
    %v1145 = vsel %vm1017, 1, 0
    %v1146 = vsel %vm1018, 1, 0
    %v1147 = vsel %vm1019, 1, 0
    %v1148 = vsel %vm1020, 1, 0
    %v1149 = vsel %vm1021, 1, 0
    %v1150 = vsel %vm1022, 1, 0
    %v1151 = vsel %vm1023, 1, 0
    %v1152 = vsel %vm1024, 1, 0
    %v1153 = vsel %vm1025, 1, 0
    %v1154 = vsel %vm1026, 1, 0
    %v1155 = vsel %vm1027, 1, 0
    %v1156 = vsel %vm1028, 1, 0
    %v1157 = vsel %vm1029, 1, 0
    %v1158 = vsel %vm1030, 1, 0
    %v1159 = vsel %vm1031, 1, 0
    %v1160 = vsel %vm1032, 1, 0
    %v1161 = vsel %vm1033, 1, 0
    %v1162 = vsel %vm1034, 1, 0
    %v1163 = vsel %vm1035, 1, 0
    %v1164 = vsel %vm1036, 1, 0
    %v1165 = vsel %vm1037, 1, 0
    %v1166 = vsel %vm1038, 1, 0
    %v1167 = vsel %vm1039, 1, 0
    %v1168 = vsel %vm1040, 1, 0
    %v1169 = vsel %vm1041, 1, 0
    %v1170 = vsel %vm1042, 1, 0
    %v1171 = vsel %vm1043, 1, 0
    %v1172 = vsel %vm1044, 1, 0
    %v1173 = vsel %vm1045, 1, 0
    %v1174 = vsel %vm1046, 1, 0
    %v1175 = vsel %vm1047, 1, 0
    %v1176 = vsel %vm1048, 1, 0
    %v1177 = vsel %vm1049, 1, 0
    %v1178 = vsel %vm1050, 1, 0
    %v1179 = vsel %vm1051, 1, 0
    %v1180 = vsel %vm1052, 1, 0
    %v1181 = vsel %vm1053, 1, 0
    %v1182 = vsel %vm1054, 1, 0
    %v1183 = vsel %vm1055, 1, 0
    %v1184 = vsel %vm1056, 1, 0
    %v1185 = vsel %vm1057, 1, 0
    %v1186 = vsel %vm1058, 1, 0
    %v1187 = vsel %vm1059, 1, 0
    %v1188 = vsel %vm1060, 1, 0
    %v1189 = vsel %vm1061, 1, 0
    %v1190 = vsel %vm1062, 1, 0
    %v1191 = vsel %vm1063, 1, 0
    %v1192 = vsel %vm1064, 1, 0
    %v1193 = vsel %vm1065, 1, 0
    %v1194 = vsel %vm1066, 1, 0
    %v1195 = vsel %vm1067, 1, 0
    %v1196 = vsel %vm1068, 1, 0
    %v1197 = vsel %vm1069, 1, 0
    %v1198 = vsel %vm1070, 1, 0
    %v1199 = vsel %vm1071, 1, 0
    %v1200 = vsel %vm1072, 1, 0
    %v1201 = vsel %vm1073, 1, 0
    %v1202 = vsel %vm1074, 1, 0
    %v1203 = vsel %vm1075, 1, 0
    %v1204 = vsel %vm1076, 1, 0
    %v1205 = vsel %vm1077, 1, 0
    %v1206 = vsel %vm1078, 1, 0
    %v1207 = vsel %vm1079, 1, 0
    %v1208 = vsel %vm1080, 1, 0
    %v1209 = vsel %vm1081, 1, 0
    %v1210 = vsel %vm1082, 1, 0
    %v1211 = vsel %vm1083, 1, 0
    %v1212 = vsel %vm1084, 1, 0
    %v1213 = vsel %vm1085, 1, 0
    %v1214 = vsel %vm1086, 1, 0
    %v1215 = vsel %vm1087, 1, 0
    %v1216 = vsel %vm1088, 1, 0
    %v1217 = vsel %vm1089, 1, 0
    %v1218 = vsel %vm1090, 1, 0
    %v1219 = vsel %vm1091, 1, 0
    %v1220 = vsel %vm1092, 1, 0
    %v1221 = vsel %vm1093, 1, 0
    %v1222 = vsel %vm1094, 1, 0
    %v1223 = vsel %vm1095, 1, 0
    %v1224 = vsel %vm1096, 1, 0
    %v1225 = vsel %vm1097, 1, 0
    %v1226 = vsel %vm1098, 1, 0
    %v1227 = vsel %vm1099, 1, 0
    %v1228 = vsel %vm1100, 1, 0
    %v1229 = vsel %vm1101, 1, 0
    %v1230 = vsel %vm1102, 1, 0
    %v1231 = vsel %vm1103, 1, 0
    %v1232 = vsel %vm1104, 1, 0
    %v1233 = vsel %vm1105, 1, 0
    %v1234 = vsel %vm1106, 1, 0
    %v1235 = vsel %vm1107, 1, 0
    %v1236 = vsel %vm1108, 1, 0
    %v1237 = vsel %vm1109, 1, 0
    %v1238 = vsel %vm1110, 1, 0
    %v1239 = vsel %vm1111, 1, 0
    %v1240 = vsel %vm1112, 1, 0
    %v1241 = vsel %vm1113, 1, 0
    %v1242 = vsel %vm1114, 1, 0
    %v1243 = vsel %vm1115, 1, 0
    %v1244 = vsel %vm1116, 1, 0
    %v1245 = vcvt.s32.f32 %v1117
    %v1246 = vcvt.s32.f32 %v1118
    %v1247 = vcvt.s32.f32 %v1119
    %v1248 = vcvt.s32.f32 %v1120
    %v1249 = vcvt.s32.f32 %v1121
    %v1250 = vcvt.s32.f32 %v1122
    %v1251 = vcvt.s32.f32 %v1123
    %v1252 = vcvt.s32.f32 %v1124
    %v1253 = vcvt.s32.f32 %v1125
    %v1254 = vcvt.s32.f32 %v1126
    %v1255 = vcvt.s32.f32 %v1127
    %v1256 = vcvt.s32.f32 %v1128
    %v1257 = vcvt.s32.f32 %v1129
    %v1258 = vcvt.s32.f32 %v1130
    %v1259 = vcvt.s32.f32 %v1131
    %v1260 = vcvt.s32.f32 %v1132
    %v1261 = vcvt.s32.f32 %v1133
    %v1262 = vcvt.s32.f32 %v1134
    %v1263 = vcvt.s32.f32 %v1135
    %v1264 = vcvt.s32.f32 %v1136
    %v1265 = vcvt.s32.f32 %v1137
    %v1266 = vcvt.s32.f32 %v1138
    %v1267 = vcvt.s32.f32 %v1139
    %v1268 = vcvt.s32.f32 %v1140
    %v1269 = vcvt.s32.f32 %v1141
    %v1270 = vcvt.s32.f32 %v1142
    %v1271 = vcvt.s32.f32 %v1143
    %v1272 = vcvt.s32.f32 %v1144
    %v1273 = vcvt.s32.f32 %v1145
    %v1274 = vcvt.s32.f32 %v1146
    %v1275 = vcvt.s32.f32 %v1147
    %v1276 = vcvt.s32.f32 %v1148
    %v1277 = vcvt.s32.f32 %v1149
    %v1278 = vcvt.s32.f32 %v1150
    %v1279 = vcvt.s32.f32 %v1151
    %v1280 = vcvt.s32.f32 %v1152
    %v1281 = vcvt.s32.f32 %v1153
    %v1282 = vcvt.s32.f32 %v1154
    %v1283 = vcvt.s32.f32 %v1155
    %v1284 = vcvt.s32.f32 %v1156
    %v1285 = vcvt.s32.f32 %v1157
    %v1286 = vcvt.s32.f32 %v1158
    %v1287 = vcvt.s32.f32 %v1159
    %v1288 = vcvt.s32.f32 %v1160
    %v1289 = vcvt.s32.f32 %v1161
    %v1290 = vcvt.s32.f32 %v1162
    %v1291 = vcvt.s32.f32 %v1163
    %v1292 = vcvt.s32.f32 %v1164
    %v1293 = vcvt.s32.f32 %v1165
    %v1294 = vcvt.s32.f32 %v1166
    %v1295 = vcvt.s32.f32 %v1167
    %v1296 = vcvt.s32.f32 %v1168
    %v1297 = vcvt.s32.f32 %v1169
    %v1298 = vcvt.s32.f32 %v1170
    %v1299 = vcvt.s32.f32 %v1171
    %v1300 = vcvt.s32.f32 %v1172
    %v1301 = vcvt.s32.f32 %v1173
    %v1302 = vcvt.s32.f32 %v1174
    %v1303 = vcvt.s32.f32 %v1175
    %v1304 = vcvt.s32.f32 %v1176
    %v1305 = vcvt.s32.f32 %v1177
    %v1306 = vcvt.s32.f32 %v1178
    %v1307 = vcvt.s32.f32 %v1179
    %v1308 = vcvt.s32.f32 %v1180
    %v1309 = vcvt.s32.f32 %v1181
    %v1310 = vcvt.s32.f32 %v1182
    %v1311 = vcvt.s32.f32 %v1183
    %v1312 = vcvt.s32.f32 %v1184
    %v1313 = vcvt.s32.f32 %v1185
    %v1314 = vcvt.s32.f32 %v1186
    %v1315 = vcvt.s32.f32 %v1187
    %v1316 = vcvt.s32.f32 %v1188
    %v1317 = vcvt.s32.f32 %v1189
    %v1318 = vcvt.s32.f32 %v1190
    %v1319 = vcvt.s32.f32 %v1191
    %v1320 = vcvt.s32.f32 %v1192
    %v1321 = vcvt.s32.f32 %v1193
    %v1322 = vcvt.s32.f32 %v1194
    %v1323 = vcvt.s32.f32 %v1195
    %v1324 = vcvt.s32.f32 %v1196
    %v1325 = vcvt.s32.f32 %v1197
    %v1326 = vcvt.s32.f32 %v1198
    %v1327 = vcvt.s32.f32 %v1199
    %v1328 = vcvt.s32.f32 %v1200
    %v1329 = vcvt.s32.f32 %v1201
    %v1330 = vcvt.s32.f32 %v1202
    %v1331 = vcvt.s32.f32 %v1203
    %v1332 = vcvt.s32.f32 %v1204
    %v1333 = vcvt.s32.f32 %v1205
    %v1334 = vcvt.s32.f32 %v1206
    %v1335 = vcvt.s32.f32 %v1207
    %v1336 = vcvt.s32.f32 %v1208
    %v1337 = vcvt.s32.f32 %v1209
    %v1338 = vcvt.s32.f32 %v1210
    %v1339 = vcvt.s32.f32 %v1211
    %v1340 = vcvt.s32.f32 %v1212
    %v1341 = vcvt.s32.f32 %v1213
    %v1342 = vcvt.s32.f32 %v1214
    %v1343 = vcvt.s32.f32 %v1215
    %v1344 = vcvt.s32.f32 %v1216
    %v1345 = vcvt.s32.f32 %v1217
    %v1346 = vcvt.s32.f32 %v1218
    %v1347 = vcvt.s32.f32 %v1219
    %v1348 = vcvt.s32.f32 %v1220
    %v1349 = vcvt.s32.f32 %v1221
    %v1350 = vcvt.s32.f32 %v1222
    %v1351 = vcvt.s32.f32 %v1223
    %v1352 = vcvt.s32.f32 %v1224
    %v1353 = vcvt.s32.f32 %v1225
    %v1354 = vcvt.s32.f32 %v1226
    %v1355 = vcvt.s32.f32 %v1227
    %v1356 = vcvt.s32.f32 %v1228
    %v1357 = vcvt.s32.f32 %v1229
    %v1358 = vcvt.s32.f32 %v1230
    %v1359 = vcvt.s32.f32 %v1231
    %v1360 = vcvt.s32.f32 %v1232
    %v1361 = vcvt.s32.f32 %v1233
    %v1362 = vcvt.s32.f32 %v1234
    %v1363 = vcvt.s32.f32 %v1235
    %v1364 = vcvt.s32.f32 %v1236
    %v1365 = vcvt.s32.f32 %v1237
    %v1366 = vcvt.s32.f32 %v1238
    %v1367 = vcvt.s32.f32 %v1239
    %v1368 = vcvt.s32.f32 %v1240
    %v1369 = vcvt.s32.f32 %v1241
    %v1370 = vcvt.s32.f32 %v1242
    %v1371 = vcvt.s32.f32 %v1243
    %v1372 = vcvt.s32.f32 %v1244
    %v1373 = vsub.f32 %v861, %v1245
    %v1374 = vsub.f32 %v862, %v1246
    %v1375 = vsub.f32 %v863, %v1247
    %v1376 = vsub.f32 %v864, %v1248
    %v1377 = vsub.f32 %v865, %v1249
    %v1378 = vsub.f32 %v866, %v1250
    %v1379 = vsub.f32 %v867, %v1251
    %v1380 = vsub.f32 %v868, %v1252
    %v1381 = vsub.f32 %v869, %v1253
    %v1382 = vsub.f32 %v870, %v1254
    %v1383 = vsub.f32 %v871, %v1255
    %v1384 = vsub.f32 %v872, %v1256
    %v1385 = vsub.f32 %v873, %v1257
    %v1386 = vsub.f32 %v874, %v1258
    %v1387 = vsub.f32 %v875, %v1259
    %v1388 = vsub.f32 %v876, %v1260
    %v1389 = vsub.f32 %v877, %v1261
    %v1390 = vsub.f32 %v878, %v1262
    %v1391 = vsub.f32 %v879, %v1263
    %v1392 = vsub.f32 %v880, %v1264
    %v1393 = vsub.f32 %v881, %v1265
    %v1394 = vsub.f32 %v882, %v1266
    %v1395 = vsub.f32 %v883, %v1267
    %v1396 = vsub.f32 %v884, %v1268
    %v1397 = vsub.f32 %v885, %v1269
    %v1398 = vsub.f32 %v886, %v1270
    %v1399 = vsub.f32 %v887, %v1271
    %v1400 = vsub.f32 %v888, %v1272
    %v1401 = vsub.f32 %v889, %v1273
    %v1402 = vsub.f32 %v890, %v1274
    %v1403 = vsub.f32 %v891, %v1275
    %v1404 = vsub.f32 %v892, %v1276
    %v1405 = vsub.f32 %v893, %v1277
    %v1406 = vsub.f32 %v894, %v1278
    %v1407 = vsub.f32 %v895, %v1279
    %v1408 = vsub.f32 %v896, %v1280
    %v1409 = vsub.f32 %v897, %v1281
    %v1410 = vsub.f32 %v898, %v1282
    %v1411 = vsub.f32 %v899, %v1283
    %v1412 = vsub.f32 %v900, %v1284
    %v1413 = vsub.f32 %v901, %v1285
    %v1414 = vsub.f32 %v902, %v1286
    %v1415 = vsub.f32 %v903, %v1287
    %v1416 = vsub.f32 %v904, %v1288
    %v1417 = vsub.f32 %v905, %v1289
    %v1418 = vsub.f32 %v906, %v1290
    %v1419 = vsub.f32 %v907, %v1291
    %v1420 = vsub.f32 %v908, %v1292
    %v1421 = vsub.f32 %v909, %v1293
    %v1422 = vsub.f32 %v910, %v1294
    %v1423 = vsub.f32 %v911, %v1295
    %v1424 = vsub.f32 %v912, %v1296
    %v1425 = vsub.f32 %v913, %v1297
    %v1426 = vsub.f32 %v914, %v1298
    %v1427 = vsub.f32 %v915, %v1299
    %v1428 = vsub.f32 %v916, %v1300
    %v1429 = vsub.f32 %v917, %v1301
    %v1430 = vsub.f32 %v918, %v1302
    %v1431 = vsub.f32 %v919, %v1303
    %v1432 = vsub.f32 %v920, %v1304
    %v1433 = vsub.f32 %v921, %v1305
    %v1434 = vsub.f32 %v922, %v1306
    %v1435 = vsub.f32 %v923, %v1307
    %v1436 = vsub.f32 %v924, %v1308
    %v1437 = vsub.f32 %v925, %v1309
    %v1438 = vsub.f32 %v926, %v1310
    %v1439 = vsub.f32 %v927, %v1311
    %v1440 = vsub.f32 %v928, %v1312
    %v1441 = vsub.f32 %v929, %v1313
    %v1442 = vsub.f32 %v930, %v1314
    %v1443 = vsub.f32 %v931, %v1315
    %v1444 = vsub.f32 %v932, %v1316
    %v1445 = vsub.f32 %v933, %v1317
    %v1446 = vsub.f32 %v934, %v1318
    %v1447 = vsub.f32 %v935, %v1319
    %v1448 = vsub.f32 %v936, %v1320
    %v1449 = vsub.f32 %v937, %v1321
    %v1450 = vsub.f32 %v938, %v1322
    %v1451 = vsub.f32 %v939, %v1323
    %v1452 = vsub.f32 %v940, %v1324
    %v1453 = vsub.f32 %v941, %v1325
    %v1454 = vsub.f32 %v942, %v1326
    %v1455 = vsub.f32 %v943, %v1327
    %v1456 = vsub.f32 %v944, %v1328
    %v1457 = vsub.f32 %v945, %v1329
    %v1458 = vsub.f32 %v946, %v1330
    %v1459 = vsub.f32 %v947, %v1331
    %v1460 = vsub.f32 %v948, %v1332
    %v1461 = vsub.f32 %v949, %v1333
    %v1462 = vsub.f32 %v950, %v1334
    %v1463 = vsub.f32 %v951, %v1335
    %v1464 = vsub.f32 %v952, %v1336
    %v1465 = vsub.f32 %v953, %v1337
    %v1466 = vsub.f32 %v954, %v1338
    %v1467 = vsub.f32 %v955, %v1339
    %v1468 = vsub.f32 %v956, %v1340
    %v1469 = vsub.f32 %v957, %v1341
    %v1470 = vsub.f32 %v958, %v1342
    %v1471 = vsub.f32 %v959, %v1343
    %v1472 = vsub.f32 %v960, %v1344
    %v1473 = vsub.f32 %v961, %v1345
    %v1474 = vsub.f32 %v962, %v1346
    %v1475 = vsub.f32 %v963, %v1347
    %v1476 = vsub.f32 %v964, %v1348
    %v1477 = vsub.f32 %v965, %v1349
    %v1478 = vsub.f32 %v966, %v1350
    %v1479 = vsub.f32 %v967, %v1351
    %v1480 = vsub.f32 %v968, %v1352
    %v1481 = vsub.f32 %v969, %v1353
    %v1482 = vsub.f32 %v970, %v1354
    %v1483 = vsub.f32 %v971, %v1355
    %v1484 = vsub.f32 %v972, %v1356
    %v1485 = vsub.f32 %v973, %v1357
    %v1486 = vsub.f32 %v974, %v1358
    %v1487 = vsub.f32 %v975, %v1359
    %v1488 = vsub.f32 %v976, %v1360
    %v1489 = vsub.f32 %v977, %v1361
    %v1490 = vsub.f32 %v978, %v1362
    %v1491 = vsub.f32 %v979, %v1363
    %v1492 = vsub.f32 %v980, %v1364
    %v1493 = vsub.f32 %v981, %v1365
    %v1494 = vsub.f32 %v982, %v1366
    %v1495 = vsub.f32 %v983, %v1367
    %v1496 = vsub.f32 %v984, %v1368
    %v1497 = vsub.f32 %v985, %v1369
    %v1498 = vsub.f32 %v986, %v1370
    %v1499 = vsub.f32 %v987, %v1371
    %v1500 = vsub.f32 %v988, %v1372
    %v1629 = vcombine.high %v1373, %v1373
    %v1630 = vcombine.high %v1374, %v1374
    %v1631 = vcombine.high %v1375, %v1375
    %v1632 = vcombine.high %v1376, %v1376
    %v1633 = vcombine.high %v1377, %v1377
    %v1634 = vcombine.high %v1378, %v1378
    %v1635 = vcombine.high %v1379, %v1379
    %v1636 = vcombine.high %v1380, %v1380
    %v1637 = vcombine.high %v1381, %v1381
    %v1638 = vcombine.high %v1382, %v1382
    %v1639 = vcombine.high %v1383, %v1383
    %v1640 = vcombine.high %v1384, %v1384
    %v1641 = vcombine.high %v1385, %v1385
    %v1642 = vcombine.high %v1386, %v1386
    %v1643 = vcombine.high %v1387, %v1387
    %v1644 = vcombine.high %v1388, %v1388
    %v1645 = vcombine.high %v1389, %v1389
    %v1646 = vcombine.high %v1390, %v1390
    %v1647 = vcombine.high %v1391, %v1391
    %v1648 = vcombine.high %v1392, %v1392
    %v1649 = vcombine.high %v1393, %v1393
    %v1650 = vcombine.high %v1394, %v1394
    %v1651 = vcombine.high %v1395, %v1395
    %v1652 = vcombine.high %v1396, %v1396
    %v1653 = vcombine.high %v1397, %v1397
    %v1654 = vcombine.high %v1398, %v1398
    %v1655 = vcombine.high %v1399, %v1399
    %v1656 = vcombine.high %v1400, %v1400
    %v1657 = vcombine.high %v1401, %v1401
    %v1658 = vcombine.high %v1402, %v1402
    %v1659 = vcombine.high %v1403, %v1403
    %v1660 = vcombine.high %v1404, %v1404
    %v1661 = vcombine.high %v1405, %v1405
    %v1662 = vcombine.high %v1406, %v1406
    %v1663 = vcombine.high %v1407, %v1407
    %v1664 = vcombine.high %v1408, %v1408
    %v1665 = vcombine.high %v1409, %v1409
    %v1666 = vcombine.high %v1410, %v1410
    %v1667 = vcombine.high %v1411, %v1411
    %v1668 = vcombine.high %v1412, %v1412
    %v1669 = vcombine.high %v1413, %v1413
    %v1670 = vcombine.high %v1414, %v1414
    %v1671 = vcombine.high %v1415, %v1415
    %v1672 = vcombine.high %v1416, %v1416
    %v1673 = vcombine.high %v1417, %v1417
    %v1674 = vcombine.high %v1418, %v1418
    %v1675 = vcombine.high %v1419, %v1419
    %v1676 = vcombine.high %v1420, %v1420
    %v1677 = vcombine.high %v1421, %v1421
    %v1678 = vcombine.high %v1422, %v1422
    %v1679 = vcombine.high %v1423, %v1423
    %v1680 = vcombine.high %v1424, %v1424
    %v1681 = vcombine.high %v1425, %v1425
    %v1682 = vcombine.high %v1426, %v1426
    %v1683 = vcombine.high %v1427, %v1427
    %v1684 = vcombine.high %v1428, %v1428
    %v1685 = vcombine.high %v1429, %v1429
    %v1686 = vcombine.high %v1430, %v1430
    %v1687 = vcombine.high %v1431, %v1431
    %v1688 = vcombine.high %v1432, %v1432
    %v1689 = vcombine.high %v1433, %v1433
    %v1690 = vcombine.high %v1434, %v1434
    %v1691 = vcombine.high %v1435, %v1435
    %v1692 = vcombine.high %v1436, %v1436
    %v1693 = vcombine.high %v1437, %v1437
    %v1694 = vcombine.high %v1438, %v1438
    %v1695 = vcombine.high %v1439, %v1439
    %v1696 = vcombine.high %v1440, %v1440
    %v1697 = vcombine.high %v1441, %v1441
    %v1698 = vcombine.high %v1442, %v1442
    %v1699 = vcombine.high %v1443, %v1443
    %v1700 = vcombine.high %v1444, %v1444
    %v1701 = vcombine.high %v1445, %v1445
    %v1702 = vcombine.high %v1446, %v1446
    %v1703 = vcombine.high %v1447, %v1447
    %v1704 = vcombine.high %v1448, %v1448
    %v1705 = vcombine.high %v1449, %v1449
    %v1706 = vcombine.high %v1450, %v1450
    %v1707 = vcombine.high %v1451, %v1451
    %v1708 = vcombine.high %v1452, %v1452
    %v1709 = vcombine.high %v1453, %v1453
    %v1710 = vcombine.high %v1454, %v1454
    %v1711 = vcombine.high %v1455, %v1455
    %v1712 = vcombine.high %v1456, %v1456
    %v1713 = vcombine.high %v1457, %v1457
    %v1714 = vcombine.high %v1458, %v1458
    %v1715 = vcombine.high %v1459, %v1459
    %v1716 = vcombine.high %v1460, %v1460
    %v1717 = vcombine.high %v1461, %v1461
    %v1718 = vcombine.high %v1462, %v1462
    %v1719 = vcombine.high %v1463, %v1463
    %v1720 = vcombine.high %v1464, %v1464
    %v1721 = vcombine.high %v1465, %v1465
    %v1722 = vcombine.high %v1466, %v1466
    %v1723 = vcombine.high %v1467, %v1467
    %v1724 = vcombine.high %v1468, %v1468
    %v1725 = vcombine.high %v1469, %v1469
    %v1726 = vcombine.high %v1470, %v1470
    %v1727 = vcombine.high %v1471, %v1471
    %v1728 = vcombine.high %v1472, %v1472
    %v1729 = vcombine.high %v1473, %v1473
    %v1730 = vcombine.high %v1474, %v1474
    %v1731 = vcombine.high %v1475, %v1475
    %v1732 = vcombine.high %v1476, %v1476
    %v1733 = vcombine.high %v1477, %v1477
    %v1734 = vcombine.high %v1478, %v1478
    %v1735 = vcombine.high %v1479, %v1479
    %v1736 = vcombine.high %v1480, %v1480
    %v1737 = vcombine.high %v1481, %v1481
    %v1738 = vcombine.high %v1482, %v1482
    %v1739 = vcombine.high %v1483, %v1483
    %v1740 = vcombine.high %v1484, %v1484
    %v1741 = vcombine.high %v1485, %v1485
    %v1742 = vcombine.high %v1486, %v1486
    %v1743 = vcombine.high %v1487, %v1487
    %v1744 = vcombine.high %v1488, %v1488
    %v1745 = vcombine.high %v1489, %v1489
    %v1746 = vcombine.high %v1490, %v1490
    %v1747 = vcombine.high %v1491, %v1491
    %v1748 = vcombine.high %v1492, %v1492
    %v1749 = vcombine.high %v1493, %v1493
    %v1750 = vcombine.high %v1494, %v1494
    %v1751 = vcombine.high %v1495, %v1495
    %v1752 = vcombine.high %v1496, %v1496
    %v1753 = vcombine.high %v1497, %v1497
    %v1754 = vcombine.high %v1498, %v1498
    %v1755 = vcombine.high %v1499, %v1499
    %v1756 = vcombine.high %v1500, %v1500
    %v1757 = vrot.slane %v1373, 1
    %v1758 = vrot.slane %v1629, 1
    %v1759 = vrot.slane %v1374, 1
    %v1760 = vrot.slane %v1630, 1
    %v1761 = vrot.slane %v1375, 1
    %v1762 = vrot.slane %v1631, 1
    %v1763 = vrot.slane %v1376, 1
    %v1764 = vrot.slane %v1632, 1
    %v1765 = vrot.slane %v1377, 1
    %v1766 = vrot.slane %v1633, 1
    %v1767 = vrot.slane %v1378, 1
    %v1768 = vrot.slane %v1634, 1
    %v1769 = vrot.slane %v1379, 1
    %v1770 = vrot.slane %v1635, 1
    %v1771 = vrot.slane %v1380, 1
    %v1772 = vrot.slane %v1636, 1
    %v1773 = vrot.slane %v1381, 1
    %v1774 = vrot.slane %v1637, 1
    %v1775 = vrot.slane %v1382, 1
    %v1776 = vrot.slane %v1638, 1
    %v1777 = vrot.slane %v1383, 1
    %v1778 = vrot.slane %v1639, 1
    %v1779 = vrot.slane %v1384, 1
    %v1780 = vrot.slane %v1640, 1
    %v1781 = vrot.slane %v1385, 1
    %v1782 = vrot.slane %v1641, 1
    %v1783 = vrot.slane %v1386, 1
    %v1784 = vrot.slane %v1642, 1
    %v1785 = vrot.slane %v1387, 1
    %v1786 = vrot.slane %v1643, 1
    %v1787 = vrot.slane %v1388, 1
    %v1788 = vrot.slane %v1644, 1
    %v1789 = vrot.slane %v1389, 1
    %v1790 = vrot.slane %v1645, 1
    %v1791 = vrot.slane %v1390, 1
    %v1792 = vrot.slane %v1646, 1
    %v1793 = vrot.slane %v1391, 1
    %v1794 = vrot.slane %v1647, 1
    %v1795 = vrot.slane %v1392, 1
    %v1796 = vrot.slane %v1648, 1
    %v1797 = vrot.slane %v1393, 1
    %v1798 = vrot.slane %v1649, 1
    %v1799 = vrot.slane %v1394, 1
    %v1800 = vrot.slane %v1650, 1
    %v1801 = vrot.slane %v1395, 1
    %v1802 = vrot.slane %v1651, 1
    %v1803 = vrot.slane %v1396, 1
    %v1804 = vrot.slane %v1652, 1
    %v1805 = vrot.slane %v1397, 1
    %v1806 = vrot.slane %v1653, 1
    %v1807 = vrot.slane %v1398, 1
    %v1808 = vrot.slane %v1654, 1
    %v1809 = vrot.slane %v1399, 1
    %v1810 = vrot.slane %v1655, 1
    %v1811 = vrot.slane %v1400, 1
    %v1812 = vrot.slane %v1656, 1
    %v1813 = vrot.slane %v1401, 1
    %v1814 = vrot.slane %v1657, 1
    %v1815 = vrot.slane %v1402, 1
    %v1816 = vrot.slane %v1658, 1
    %v1817 = vrot.slane %v1403, 1
    %v1818 = vrot.slane %v1659, 1
    %v1819 = vrot.slane %v1404, 1
    %v1820 = vrot.slane %v1660, 1
    %v1821 = vrot.slane %v1405, 1
    %v1822 = vrot.slane %v1661, 1
    %v1823 = vrot.slane %v1406, 1
    %v1824 = vrot.slane %v1662, 1
    %v1825 = vrot.slane %v1407, 1
    %v1826 = vrot.slane %v1663, 1
    %v1827 = vrot.slane %v1408, 1
    %v1828 = vrot.slane %v1664, 1
    %v1829 = vrot.slane %v1409, 1
    %v1830 = vrot.slane %v1665, 1
    %v1831 = vrot.slane %v1410, 1
    %v1832 = vrot.slane %v1666, 1
    %v1833 = vrot.slane %v1411, 1
    %v1834 = vrot.slane %v1667, 1
    %v1835 = vrot.slane %v1412, 1
    %v1836 = vrot.slane %v1668, 1
    %v1837 = vrot.slane %v1413, 1
    %v1838 = vrot.slane %v1669, 1
    %v1839 = vrot.slane %v1414, 1
    %v1840 = vrot.slane %v1670, 1
    %v1841 = vrot.slane %v1415, 1
    %v1842 = vrot.slane %v1671, 1
    %v1843 = vrot.slane %v1416, 1
    %v1844 = vrot.slane %v1672, 1
    %v1845 = vrot.slane %v1417, 1
    %v1846 = vrot.slane %v1673, 1
    %v1847 = vrot.slane %v1418, 1
    %v1848 = vrot.slane %v1674, 1
    %v1849 = vrot.slane %v1419, 1
    %v1850 = vrot.slane %v1675, 1
    %v1851 = vrot.slane %v1420, 1
    %v1852 = vrot.slane %v1676, 1
    %v1853 = vrot.slane %v1421, 1
    %v1854 = vrot.slane %v1677, 1
    %v1855 = vrot.slane %v1422, 1
    %v1856 = vrot.slane %v1678, 1
    %v1857 = vrot.slane %v1423, 1
    %v1858 = vrot.slane %v1679, 1
    %v1859 = vrot.slane %v1424, 1
    %v1860 = vrot.slane %v1680, 1
    %v1861 = vrot.slane %v1425, 1
    %v1862 = vrot.slane %v1681, 1
    %v1863 = vrot.slane %v1426, 1
    %v1864 = vrot.slane %v1682, 1
    %v1865 = vrot.slane %v1427, 1
    %v1866 = vrot.slane %v1683, 1
    %v1867 = vrot.slane %v1428, 1
    %v1868 = vrot.slane %v1684, 1
    %v1869 = vrot.slane %v1429, 1
    %v1870 = vrot.slane %v1685, 1
    %v1871 = vrot.slane %v1430, 1
    %v1872 = vrot.slane %v1686, 1
    %v1873 = vrot.slane %v1431, 1
    %v1874 = vrot.slane %v1687, 1
    %v1875 = vrot.slane %v1432, 1
    %v1876 = vrot.slane %v1688, 1
    %v1877 = vrot.slane %v1433, 1
    %v1878 = vrot.slane %v1689, 1
    %v1879 = vrot.slane %v1434, 1
    %v1880 = vrot.slane %v1690, 1
    %v1881 = vrot.slane %v1435, 1
    %v1882 = vrot.slane %v1691, 1
    %v1883 = vrot.slane %v1436, 1
    %v1884 = vrot.slane %v1692, 1
    %v1885 = vrot.slane %v1437, 1
    %v1886 = vrot.slane %v1693, 1
    %v1887 = vrot.slane %v1438, 1
    %v1888 = vrot.slane %v1694, 1
    %v1889 = vrot.slane %v1439, 1
    %v1890 = vrot.slane %v1695, 1
    %v1891 = vrot.slane %v1440, 1
    %v1892 = vrot.slane %v1696, 1
    %v1893 = vrot.slane %v1441, 1
    %v1894 = vrot.slane %v1697, 1
    %v1895 = vrot.slane %v1442, 1
    %v1896 = vrot.slane %v1698, 1
    %v1897 = vrot.slane %v1443, 1
    %v1898 = vrot.slane %v1699, 1
    %v1899 = vrot.slane %v1444, 1
    %v1900 = vrot.slane %v1700, 1
    %v1901 = vrot.slane %v1445, 1
    %v1902 = vrot.slane %v1701, 1
    %v1903 = vrot.slane %v1446, 1
    %v1904 = vrot.slane %v1702, 1
    %v1905 = vrot.slane %v1447, 1
    %v1906 = vrot.slane %v1703, 1
    %v1907 = vrot.slane %v1448, 1
    %v1908 = vrot.slane %v1704, 1
    %v1909 = vrot.slane %v1449, 1
    %v1910 = vrot.slane %v1705, 1
    %v1911 = vrot.slane %v1450, 1
    %v1912 = vrot.slane %v1706, 1
    %v1913 = vrot.slane %v1451, 1
    %v1914 = vrot.slane %v1707, 1
    %v1915 = vrot.slane %v1452, 1
    %v1916 = vrot.slane %v1708, 1
    %v1917 = vrot.slane %v1453, 1
    %v1918 = vrot.slane %v1709, 1
    %v1919 = vrot.slane %v1454, 1
    %v1920 = vrot.slane %v1710, 1
    %v1921 = vrot.slane %v1455, 1
    %v1922 = vrot.slane %v1711, 1
    %v1923 = vrot.slane %v1456, 1
    %v1924 = vrot.slane %v1712, 1
    %v1925 = vrot.slane %v1457, 1
    %v1926 = vrot.slane %v1713, 1
    %v1927 = vrot.slane %v1458, 1
    %v1928 = vrot.slane %v1714, 1
    %v1929 = vrot.slane %v1459, 1
    %v1930 = vrot.slane %v1715, 1
    %v1931 = vrot.slane %v1460, 1
    %v1932 = vrot.slane %v1716, 1
    %v1933 = vrot.slane %v1461, 1
    %v1934 = vrot.slane %v1717, 1
    %v1935 = vrot.slane %v1462, 1
    %v1936 = vrot.slane %v1718, 1
    %v1937 = vrot.slane %v1463, 1
    %v1938 = vrot.slane %v1719, 1
    %v1939 = vrot.slane %v1464, 1
    %v1940 = vrot.slane %v1720, 1
    %v1941 = vrot.slane %v1465, 1
    %v1942 = vrot.slane %v1721, 1
    %v1943 = vrot.slane %v1466, 1
    %v1944 = vrot.slane %v1722, 1
    %v1945 = vrot.slane %v1467, 1
    %v1946 = vrot.slane %v1723, 1
    %v1947 = vrot.slane %v1468, 1
    %v1948 = vrot.slane %v1724, 1
    %v1949 = vrot.slane %v1469, 1
    %v1950 = vrot.slane %v1725, 1
    %v1951 = vrot.slane %v1470, 1
    %v1952 = vrot.slane %v1726, 1
    %v1953 = vrot.slane %v1471, 1
    %v1954 = vrot.slane %v1727, 1
    %v1955 = vrot.slane %v1472, 1
    %v1956 = vrot.slane %v1728, 1
    %v1957 = vrot.slane %v1473, 1
    %v1958 = vrot.slane %v1729, 1
    %v1959 = vrot.slane %v1474, 1
    %v1960 = vrot.slane %v1730, 1
    %v1961 = vrot.slane %v1475, 1
    %v1962 = vrot.slane %v1731, 1
    %v1963 = vrot.slane %v1476, 1
    %v1964 = vrot.slane %v1732, 1
    %v1965 = vrot.slane %v1477, 1
    %v1966 = vrot.slane %v1733, 1
    %v1967 = vrot.slane %v1478, 1
    %v1968 = vrot.slane %v1734, 1
    %v1969 = vrot.slane %v1479, 1
    %v1970 = vrot.slane %v1735, 1
    %v1971 = vrot.slane %v1480, 1
    %v1972 = vrot.slane %v1736, 1
    %v1973 = vrot.slane %v1481, 1
    %v1974 = vrot.slane %v1737, 1
    %v1975 = vrot.slane %v1482, 1
    %v1976 = vrot.slane %v1738, 1
    %v1977 = vrot.slane %v1483, 1
    %v1978 = vrot.slane %v1739, 1
    %v1979 = vrot.slane %v1484, 1
    %v1980 = vrot.slane %v1740, 1
    %v1981 = vrot.slane %v1485, 1
    %v1982 = vrot.slane %v1741, 1
    %v1983 = vrot.slane %v1486, 1
    %v1984 = vrot.slane %v1742, 1
    %v1985 = vrot.slane %v1487, 1
    %v1986 = vrot.slane %v1743, 1
    %v1987 = vrot.slane %v1488, 1
    %v1988 = vrot.slane %v1744, 1
    %v1989 = vrot.slane %v1489, 1
    %v1990 = vrot.slane %v1745, 1
    %v1991 = vrot.slane %v1490, 1
    %v1992 = vrot.slane %v1746, 1
    %v1993 = vrot.slane %v1491, 1
    %v1994 = vrot.slane %v1747, 1
    %v1995 = vrot.slane %v1492, 1
    %v1996 = vrot.slane %v1748, 1
    %v1997 = vrot.slane %v1493, 1
    %v1998 = vrot.slane %v1749, 1
    %v1999 = vrot.slane %v1494, 1
    %v2000 = vrot.slane %v1750, 1
    %v2001 = vrot.slane %v1495, 1
    %v2002 = vrot.slane %v1751, 1
    %v2003 = vrot.slane %v1496, 1
    %v2004 = vrot.slane %v1752, 1
    %v2005 = vrot.slane %v1497, 1
    %v2006 = vrot.slane %v1753, 1
    %v2007 = vrot.slane %v1498, 1
    %v2008 = vrot.slane %v1754, 1
    %v2009 = vrot.slane %v1499, 1
    %v2010 = vrot.slane %v1755, 1
    %v2011 = vrot.slane %v1500, 1
    %v2012 = vrot.slane %v1756, 1
    %vm2269 = vcmask 1042432
    %v2270 = vsel %vm2269, %v1757, 0.0
    %v2271 = vrot.slane %v2270, 4
    %v2272 = vadd.f32 %v2270, %v2271
    %v2273 = vrot.slane %v2272, 2
    %v2274 = vadd.f32 %v2272, %v2273
    %v2275 = vrot.slane %v2274, 1
    %v2276 = vadd.f32 %v2274, %v2275
    %v2277 = vsel %vm2269, %v1758, 0.0
    %v2278 = vrot.slane %v2277, 4
    %v2279 = vadd.f32 %v2277, %v2278
    %v2280 = vrot.slane %v2279, 2
    %v2281 = vadd.f32 %v2279, %v2280
    %v2282 = vrot.slane %v2281, 1
    %v2283 = vadd.f32 %v2281, %v2282
    %v2284 = vsel %vm2269, %v1759, 0.0
    %v2285 = vrot.slane %v2284, 4
    %v2286 = vadd.f32 %v2284, %v2285
    %v2287 = vrot.slane %v2286, 2
    %v2288 = vadd.f32 %v2286, %v2287
    %v2289 = vrot.slane %v2288, 1
    %v2290 = vadd.f32 %v2288, %v2289
    %v2291 = vsel %vm2269, %v1760, 0.0
    %v2292 = vrot.slane %v2291, 4
    %v2293 = vadd.f32 %v2291, %v2292
    %v2294 = vrot.slane %v2293, 2
    %v2295 = vadd.f32 %v2293, %v2294
    %v2296 = vrot.slane %v2295, 1
    %v2297 = vadd.f32 %v2295, %v2296
    %v2298 = vsel %vm2269, %v1761, 0.0
    %v2299 = vrot.slane %v2298, 4
    %v2300 = vadd.f32 %v2298, %v2299
    %v2301 = vrot.slane %v2300, 2
    %v2302 = vadd.f32 %v2300, %v2301
    %v2303 = vrot.slane %v2302, 1
    %v2304 = vadd.f32 %v2302, %v2303
    %v2305 = vsel %vm2269, %v1762, 0.0
    %v2306 = vrot.slane %v2305, 4
    %v2307 = vadd.f32 %v2305, %v2306
    %v2308 = vrot.slane %v2307, 2
    %v2309 = vadd.f32 %v2307, %v2308
    %v2310 = vrot.slane %v2309, 1
    %v2311 = vadd.f32 %v2309, %v2310
    %v2312 = vsel %vm2269, %v1763, 0.0
    %v2313 = vrot.slane %v2312, 4
    %v2314 = vadd.f32 %v2312, %v2313
    %v2315 = vrot.slane %v2314, 2
    %v2316 = vadd.f32 %v2314, %v2315
    %v2317 = vrot.slane %v2316, 1
    %v2318 = vadd.f32 %v2316, %v2317
    %v2319 = vsel %vm2269, %v1764, 0.0
    %v2320 = vrot.slane %v2319, 4
    %v2321 = vadd.f32 %v2319, %v2320
    %v2322 = vrot.slane %v2321, 2
    %v2323 = vadd.f32 %v2321, %v2322
    %v2324 = vrot.slane %v2323, 1
    %v2325 = vadd.f32 %v2323, %v2324
    %v2326 = vsel %vm2269, %v1765, 0.0
    %v2327 = vrot.slane %v2326, 4
    %v2328 = vadd.f32 %v2326, %v2327
    %v2329 = vrot.slane %v2328, 2
    %v2330 = vadd.f32 %v2328, %v2329
    %v2331 = vrot.slane %v2330, 1
    %v2332 = vadd.f32 %v2330, %v2331
    %v2333 = vsel %vm2269, %v1766, 0.0
    %v2334 = vrot.slane %v2333, 4
    %v2335 = vadd.f32 %v2333, %v2334
    %v2336 = vrot.slane %v2335, 2
    %v2337 = vadd.f32 %v2335, %v2336
    %v2338 = vrot.slane %v2337, 1
    %v2339 = vadd.f32 %v2337, %v2338
    %v2340 = vsel %vm2269, %v1767, 0.0
    %v2341 = vrot.slane %v2340, 4
    %v2342 = vadd.f32 %v2340, %v2341
    %v2343 = vrot.slane %v2342, 2
    %v2344 = vadd.f32 %v2342, %v2343
    %v2345 = vrot.slane %v2344, 1
    %v2346 = vadd.f32 %v2344, %v2345
    %v2347 = vsel %vm2269, %v1768, 0.0
    %v2348 = vrot.slane %v2347, 4
    %v2349 = vadd.f32 %v2347, %v2348
    %v2350 = vrot.slane %v2349, 2
    %v2351 = vadd.f32 %v2349, %v2350
    %v2352 = vrot.slane %v2351, 1
    %v2353 = vadd.f32 %v2351, %v2352
    %v2354 = vsel %vm2269, %v1769, 0.0
    %v2355 = vrot.slane %v2354, 4
    %v2356 = vadd.f32 %v2354, %v2355
    %v2357 = vrot.slane %v2356, 2
    %v2358 = vadd.f32 %v2356, %v2357
    %v2359 = vrot.slane %v2358, 1
    %v2360 = vadd.f32 %v2358, %v2359
    %v2361 = vsel %vm2269, %v1770, 0.0
    %v2362 = vrot.slane %v2361, 4
    %v2363 = vadd.f32 %v2361, %v2362
    %v2364 = vrot.slane %v2363, 2
    %v2365 = vadd.f32 %v2363, %v2364
    %v2366 = vrot.slane %v2365, 1
    %v2367 = vadd.f32 %v2365, %v2366
    %v2368 = vsel %vm2269, %v1771, 0.0
    %v2369 = vrot.slane %v2368, 4
    %v2370 = vadd.f32 %v2368, %v2369
    %v2371 = vrot.slane %v2370, 2
    %v2372 = vadd.f32 %v2370, %v2371
    %v2373 = vrot.slane %v2372, 1
    %v2374 = vadd.f32 %v2372, %v2373
    %v2375 = vsel %vm2269, %v1772, 0.0
    %v2376 = vrot.slane %v2375, 4
    %v2377 = vadd.f32 %v2375, %v2376
    %v2378 = vrot.slane %v2377, 2
    %v2379 = vadd.f32 %v2377, %v2378
    %v2380 = vrot.slane %v2379, 1
    %v2381 = vadd.f32 %v2379, %v2380
    %v2382 = vsel %vm2269, %v1773, 0.0
    %v2383 = vrot.slane %v2382, 4
    %v2384 = vadd.f32 %v2382, %v2383
    %v2385 = vrot.slane %v2384, 2
    %v2386 = vadd.f32 %v2384, %v2385
    %v2387 = vrot.slane %v2386, 1
    %v2388 = vadd.f32 %v2386, %v2387
    %v2389 = vsel %vm2269, %v1774, 0.0
    %v2390 = vrot.slane %v2389, 4
    %v2391 = vadd.f32 %v2389, %v2390
    %v2392 = vrot.slane %v2391, 2
    %v2393 = vadd.f32 %v2391, %v2392
    %v2394 = vrot.slane %v2393, 1
    %v2395 = vadd.f32 %v2393, %v2394
    %v2396 = vsel %vm2269, %v1775, 0.0
    %v2397 = vrot.slane %v2396, 4
    %v2398 = vadd.f32 %v2396, %v2397
    %v2399 = vrot.slane %v2398, 2
    %v2400 = vadd.f32 %v2398, %v2399
    %v2401 = vrot.slane %v2400, 1
    %v2402 = vadd.f32 %v2400, %v2401
    %v2403 = vsel %vm2269, %v1776, 0.0
    %v2404 = vrot.slane %v2403, 4
    %v2405 = vadd.f32 %v2403, %v2404
    %v2406 = vrot.slane %v2405, 2
    %v2407 = vadd.f32 %v2405, %v2406
    %v2408 = vrot.slane %v2407, 1
    %v2409 = vadd.f32 %v2407, %v2408
    %v2410 = vsel %vm2269, %v1777, 0.0
    %v2411 = vrot.slane %v2410, 4
    %v2412 = vadd.f32 %v2410, %v2411
    %v2413 = vrot.slane %v2412, 2
    %v2414 = vadd.f32 %v2412, %v2413
    %v2415 = vrot.slane %v2414, 1
    %v2416 = vadd.f32 %v2414, %v2415
    %v2417 = vsel %vm2269, %v1778, 0.0
    %v2418 = vrot.slane %v2417, 4
    %v2419 = vadd.f32 %v2417, %v2418
    %v2420 = vrot.slane %v2419, 2
    %v2421 = vadd.f32 %v2419, %v2420
    %v2422 = vrot.slane %v2421, 1
    %v2423 = vadd.f32 %v2421, %v2422
    %v2424 = vsel %vm2269, %v1779, 0.0
    %v2425 = vrot.slane %v2424, 4
    %v2426 = vadd.f32 %v2424, %v2425
    %v2427 = vrot.slane %v2426, 2
    %v2428 = vadd.f32 %v2426, %v2427
    %v2429 = vrot.slane %v2428, 1
    %v2430 = vadd.f32 %v2428, %v2429
    %v2431 = vsel %vm2269, %v1780, 0.0
    %v2432 = vrot.slane %v2431, 4
    %v2433 = vadd.f32 %v2431, %v2432
    %v2434 = vrot.slane %v2433, 2
    %v2435 = vadd.f32 %v2433, %v2434
    %v2436 = vrot.slane %v2435, 1
    %v2437 = vadd.f32 %v2435, %v2436
    %v2438 = vsel %vm2269, %v1781, 0.0
    %v2439 = vrot.slane %v2438, 4
    %v2440 = vadd.f32 %v2438, %v2439
    %v2441 = vrot.slane %v2440, 2
    %v2442 = vadd.f32 %v2440, %v2441
    %v2443 = vrot.slane %v2442, 1
    %v2444 = vadd.f32 %v2442, %v2443
    %v2445 = vsel %vm2269, %v1782, 0.0
    %v2446 = vrot.slane %v2445, 4
    %v2447 = vadd.f32 %v2445, %v2446
    %v2448 = vrot.slane %v2447, 2
    %v2449 = vadd.f32 %v2447, %v2448
    %v2450 = vrot.slane %v2449, 1
    %v2451 = vadd.f32 %v2449, %v2450
    %v2452 = vsel %vm2269, %v1783, 0.0
    %v2453 = vrot.slane %v2452, 4
    %v2454 = vadd.f32 %v2452, %v2453
    %v2455 = vrot.slane %v2454, 2
    %v2456 = vadd.f32 %v2454, %v2455
    %v2457 = vrot.slane %v2456, 1
    %v2458 = vadd.f32 %v2456, %v2457
    %v2459 = vsel %vm2269, %v1784, 0.0
    %v2460 = vrot.slane %v2459, 4
    %v2461 = vadd.f32 %v2459, %v2460
    %v2462 = vrot.slane %v2461, 2
    %v2463 = vadd.f32 %v2461, %v2462
    %v2464 = vrot.slane %v2463, 1
    %v2465 = vadd.f32 %v2463, %v2464
    %v2466 = vsel %vm2269, %v1785, 0.0
    %v2467 = vrot.slane %v2466, 4
    %v2468 = vadd.f32 %v2466, %v2467
    %v2469 = vrot.slane %v2468, 2
    %v2470 = vadd.f32 %v2468, %v2469
    %v2471 = vrot.slane %v2470, 1
    %v2472 = vadd.f32 %v2470, %v2471
    %v2473 = vsel %vm2269, %v1786, 0.0
    %v2474 = vrot.slane %v2473, 4
    %v2475 = vadd.f32 %v2473, %v2474
    %v2476 = vrot.slane %v2475, 2
    %v2477 = vadd.f32 %v2475, %v2476
    %v2478 = vrot.slane %v2477, 1
    %v2479 = vadd.f32 %v2477, %v2478
    %v2480 = vsel %vm2269, %v1787, 0.0
    %v2481 = vrot.slane %v2480, 4
    %v2482 = vadd.f32 %v2480, %v2481
    %v2483 = vrot.slane %v2482, 2
    %v2484 = vadd.f32 %v2482, %v2483
    %v2485 = vrot.slane %v2484, 1
    %v2486 = vadd.f32 %v2484, %v2485
    %v2487 = vsel %vm2269, %v1788, 0.0
    %v2488 = vrot.slane %v2487, 4
    %v2489 = vadd.f32 %v2487, %v2488
    %v2490 = vrot.slane %v2489, 2
    %v2491 = vadd.f32 %v2489, %v2490
    %v2492 = vrot.slane %v2491, 1
    %v2493 = vadd.f32 %v2491, %v2492
    %v2494 = vsel %vm2269, %v1789, 0.0
    %v2495 = vrot.slane %v2494, 4
    %v2496 = vadd.f32 %v2494, %v2495
    %v2497 = vrot.slane %v2496, 2
    %v2498 = vadd.f32 %v2496, %v2497
    %v2499 = vrot.slane %v2498, 1
    %v2500 = vadd.f32 %v2498, %v2499
    %v2501 = vsel %vm2269, %v1790, 0.0
    %v2502 = vrot.slane %v2501, 4
    %v2503 = vadd.f32 %v2501, %v2502
    %v2504 = vrot.slane %v2503, 2
    %v2505 = vadd.f32 %v2503, %v2504
    %v2506 = vrot.slane %v2505, 1
    %v2507 = vadd.f32 %v2505, %v2506
    %v2508 = vsel %vm2269, %v1791, 0.0
    %v2509 = vrot.slane %v2508, 4
    %v2510 = vadd.f32 %v2508, %v2509
    %v2511 = vrot.slane %v2510, 2
    %v2512 = vadd.f32 %v2510, %v2511
    %v2513 = vrot.slane %v2512, 1
    %v2514 = vadd.f32 %v2512, %v2513
    %v2515 = vsel %vm2269, %v1792, 0.0
    %v2516 = vrot.slane %v2515, 4
    %v2517 = vadd.f32 %v2515, %v2516
    %v2518 = vrot.slane %v2517, 2
    %v2519 = vadd.f32 %v2517, %v2518
    %v2520 = vrot.slane %v2519, 1
    %v2521 = vadd.f32 %v2519, %v2520
    %v2522 = vsel %vm2269, %v1793, 0.0
    %v2523 = vrot.slane %v2522, 4
    %v2524 = vadd.f32 %v2522, %v2523
    %v2525 = vrot.slane %v2524, 2
    %v2526 = vadd.f32 %v2524, %v2525
    %v2527 = vrot.slane %v2526, 1
    %v2528 = vadd.f32 %v2526, %v2527
    %v2529 = vsel %vm2269, %v1794, 0.0
    %v2530 = vrot.slane %v2529, 4
    %v2531 = vadd.f32 %v2529, %v2530
    %v2532 = vrot.slane %v2531, 2
    %v2533 = vadd.f32 %v2531, %v2532
    %v2534 = vrot.slane %v2533, 1
    %v2535 = vadd.f32 %v2533, %v2534
    %v2536 = vsel %vm2269, %v1795, 0.0
    %v2537 = vrot.slane %v2536, 4
    %v2538 = vadd.f32 %v2536, %v2537
    %v2539 = vrot.slane %v2538, 2
    %v2540 = vadd.f32 %v2538, %v2539
    %v2541 = vrot.slane %v2540, 1
    %v2542 = vadd.f32 %v2540, %v2541
    %v2543 = vsel %vm2269, %v1796, 0.0
    %v2544 = vrot.slane %v2543, 4
    %v2545 = vadd.f32 %v2543, %v2544
    %v2546 = vrot.slane %v2545, 2
    %v2547 = vadd.f32 %v2545, %v2546
    %v2548 = vrot.slane %v2547, 1
    %v2549 = vadd.f32 %v2547, %v2548
    %v2550 = vsel %vm2269, %v1797, 0.0
    %v2551 = vrot.slane %v2550, 4
    %v2552 = vadd.f32 %v2550, %v2551
    %v2553 = vrot.slane %v2552, 2
    %v2554 = vadd.f32 %v2552, %v2553
    %v2555 = vrot.slane %v2554, 1
    %v2556 = vadd.f32 %v2554, %v2555
    %v2557 = vsel %vm2269, %v1798, 0.0
    %v2558 = vrot.slane %v2557, 4
    %v2559 = vadd.f32 %v2557, %v2558
    %v2560 = vrot.slane %v2559, 2
    %v2561 = vadd.f32 %v2559, %v2560
    %v2562 = vrot.slane %v2561, 1
    %v2563 = vadd.f32 %v2561, %v2562
    %v2564 = vsel %vm2269, %v1799, 0.0
    %v2565 = vrot.slane %v2564, 4
    %v2566 = vadd.f32 %v2564, %v2565
    %v2567 = vrot.slane %v2566, 2
    %v2568 = vadd.f32 %v2566, %v2567
    %v2569 = vrot.slane %v2568, 1
    %v2570 = vadd.f32 %v2568, %v2569
    %v2571 = vsel %vm2269, %v1800, 0.0
    %v2572 = vrot.slane %v2571, 4
    %v2573 = vadd.f32 %v2571, %v2572
    %v2574 = vrot.slane %v2573, 2
    %v2575 = vadd.f32 %v2573, %v2574
    %v2576 = vrot.slane %v2575, 1
    %v2577 = vadd.f32 %v2575, %v2576
    %v2578 = vsel %vm2269, %v1801, 0.0
    %v2579 = vrot.slane %v2578, 4
    %v2580 = vadd.f32 %v2578, %v2579
    %v2581 = vrot.slane %v2580, 2
    %v2582 = vadd.f32 %v2580, %v2581
    %v2583 = vrot.slane %v2582, 1
    %v2584 = vadd.f32 %v2582, %v2583
    %v2585 = vsel %vm2269, %v1802, 0.0
    %v2586 = vrot.slane %v2585, 4
    %v2587 = vadd.f32 %v2585, %v2586
    %v2588 = vrot.slane %v2587, 2
    %v2589 = vadd.f32 %v2587, %v2588
    %v2590 = vrot.slane %v2589, 1
    %v2591 = vadd.f32 %v2589, %v2590
    %v2592 = vsel %vm2269, %v1803, 0.0
    %v2593 = vrot.slane %v2592, 4
    %v2594 = vadd.f32 %v2592, %v2593
    %v2595 = vrot.slane %v2594, 2
    %v2596 = vadd.f32 %v2594, %v2595
    %v2597 = vrot.slane %v2596, 1
    %v2598 = vadd.f32 %v2596, %v2597
    %v2599 = vsel %vm2269, %v1804, 0.0
    %v2600 = vrot.slane %v2599, 4
    %v2601 = vadd.f32 %v2599, %v2600
    %v2602 = vrot.slane %v2601, 2
    %v2603 = vadd.f32 %v2601, %v2602
    %v2604 = vrot.slane %v2603, 1
    %v2605 = vadd.f32 %v2603, %v2604
    %v2606 = vsel %vm2269, %v1805, 0.0
    %v2607 = vrot.slane %v2606, 4
    %v2608 = vadd.f32 %v2606, %v2607
    %v2609 = vrot.slane %v2608, 2
    %v2610 = vadd.f32 %v2608, %v2609
    %v2611 = vrot.slane %v2610, 1
    %v2612 = vadd.f32 %v2610, %v2611
    %v2613 = vsel %vm2269, %v1806, 0.0
    %v2614 = vrot.slane %v2613, 4
    %v2615 = vadd.f32 %v2613, %v2614
    %v2616 = vrot.slane %v2615, 2
    %v2617 = vadd.f32 %v2615, %v2616
    %v2618 = vrot.slane %v2617, 1
    %v2619 = vadd.f32 %v2617, %v2618
    %v2620 = vsel %vm2269, %v1807, 0.0
    %v2621 = vrot.slane %v2620, 4
    %v2622 = vadd.f32 %v2620, %v2621
    %v2623 = vrot.slane %v2622, 2
    %v2624 = vadd.f32 %v2622, %v2623
    %v2625 = vrot.slane %v2624, 1
    %v2626 = vadd.f32 %v2624, %v2625
    %v2627 = vsel %vm2269, %v1808, 0.0
    %v2628 = vrot.slane %v2627, 4
    %v2629 = vadd.f32 %v2627, %v2628
    %v2630 = vrot.slane %v2629, 2
    %v2631 = vadd.f32 %v2629, %v2630
    %v2632 = vrot.slane %v2631, 1
    %v2633 = vadd.f32 %v2631, %v2632
    %v2634 = vsel %vm2269, %v1809, 0.0
    %v2635 = vrot.slane %v2634, 4
    %v2636 = vadd.f32 %v2634, %v2635
    %v2637 = vrot.slane %v2636, 2
    %v2638 = vadd.f32 %v2636, %v2637
    %v2639 = vrot.slane %v2638, 1
    %v2640 = vadd.f32 %v2638, %v2639
    %v2641 = vsel %vm2269, %v1810, 0.0
    %v2642 = vrot.slane %v2641, 4
    %v2643 = vadd.f32 %v2641, %v2642
    %v2644 = vrot.slane %v2643, 2
    %v2645 = vadd.f32 %v2643, %v2644
    %v2646 = vrot.slane %v2645, 1
    %v2647 = vadd.f32 %v2645, %v2646
    %v2648 = vsel %vm2269, %v1811, 0.0
    %v2649 = vrot.slane %v2648, 4
    %v2650 = vadd.f32 %v2648, %v2649
    %v2651 = vrot.slane %v2650, 2
    %v2652 = vadd.f32 %v2650, %v2651
    %v2653 = vrot.slane %v2652, 1
    %v2654 = vadd.f32 %v2652, %v2653
    %v2655 = vsel %vm2269, %v1812, 0.0
    %v2656 = vrot.slane %v2655, 4
    %v2657 = vadd.f32 %v2655, %v2656
    %v2658 = vrot.slane %v2657, 2
    %v2659 = vadd.f32 %v2657, %v2658
    %v2660 = vrot.slane %v2659, 1
    %v2661 = vadd.f32 %v2659, %v2660
    %v2662 = vsel %vm2269, %v1813, 0.0
    %v2663 = vrot.slane %v2662, 4
    %v2664 = vadd.f32 %v2662, %v2663
    %v2665 = vrot.slane %v2664, 2
    %v2666 = vadd.f32 %v2664, %v2665
    %v2667 = vrot.slane %v2666, 1
    %v2668 = vadd.f32 %v2666, %v2667
    %v2669 = vsel %vm2269, %v1814, 0.0
    %v2670 = vrot.slane %v2669, 4
    %v2671 = vadd.f32 %v2669, %v2670
    %v2672 = vrot.slane %v2671, 2
    %v2673 = vadd.f32 %v2671, %v2672
    %v2674 = vrot.slane %v2673, 1
    %v2675 = vadd.f32 %v2673, %v2674
    %v2676 = vsel %vm2269, %v1815, 0.0
    %v2677 = vrot.slane %v2676, 4
    %v2678 = vadd.f32 %v2676, %v2677
    %v2679 = vrot.slane %v2678, 2
    %v2680 = vadd.f32 %v2678, %v2679
    %v2681 = vrot.slane %v2680, 1
    %v2682 = vadd.f32 %v2680, %v2681
    %v2683 = vsel %vm2269, %v1816, 0.0
    %v2684 = vrot.slane %v2683, 4
    %v2685 = vadd.f32 %v2683, %v2684
    %v2686 = vrot.slane %v2685, 2
    %v2687 = vadd.f32 %v2685, %v2686
    %v2688 = vrot.slane %v2687, 1
    %v2689 = vadd.f32 %v2687, %v2688
    %v2690 = vsel %vm2269, %v1817, 0.0
    %v2691 = vrot.slane %v2690, 4
    %v2692 = vadd.f32 %v2690, %v2691
    %v2693 = vrot.slane %v2692, 2
    %v2694 = vadd.f32 %v2692, %v2693
    %v2695 = vrot.slane %v2694, 1
    %v2696 = vadd.f32 %v2694, %v2695
    %v2697 = vsel %vm2269, %v1818, 0.0
    %v2698 = vrot.slane %v2697, 4
    %v2699 = vadd.f32 %v2697, %v2698
    %v2700 = vrot.slane %v2699, 2
    %v2701 = vadd.f32 %v2699, %v2700
    %v2702 = vrot.slane %v2701, 1
    %v2703 = vadd.f32 %v2701, %v2702
    %v2704 = vsel %vm2269, %v1819, 0.0
    %v2705 = vrot.slane %v2704, 4
    %v2706 = vadd.f32 %v2704, %v2705
    %v2707 = vrot.slane %v2706, 2
    %v2708 = vadd.f32 %v2706, %v2707
    %v2709 = vrot.slane %v2708, 1
    %v2710 = vadd.f32 %v2708, %v2709
    %v2711 = vsel %vm2269, %v1820, 0.0
    %v2712 = vrot.slane %v2711, 4
    %v2713 = vadd.f32 %v2711, %v2712
    %v2714 = vrot.slane %v2713, 2
    %v2715 = vadd.f32 %v2713, %v2714
    %v2716 = vrot.slane %v2715, 1
    %v2717 = vadd.f32 %v2715, %v2716
    %v2718 = vsel %vm2269, %v1821, 0.0
    %v2719 = vrot.slane %v2718, 4
    %v2720 = vadd.f32 %v2718, %v2719
    %v2721 = vrot.slane %v2720, 2
    %v2722 = vadd.f32 %v2720, %v2721
    %v2723 = vrot.slane %v2722, 1
    %v2724 = vadd.f32 %v2722, %v2723
    %v2725 = vsel %vm2269, %v1822, 0.0
    %v2726 = vrot.slane %v2725, 4
    %v2727 = vadd.f32 %v2725, %v2726
    %v2728 = vrot.slane %v2727, 2
    %v2729 = vadd.f32 %v2727, %v2728
    %v2730 = vrot.slane %v2729, 1
    %v2731 = vadd.f32 %v2729, %v2730
    %v2732 = vsel %vm2269, %v1823, 0.0
    %v2733 = vrot.slane %v2732, 4
    %v2734 = vadd.f32 %v2732, %v2733
    %v2735 = vrot.slane %v2734, 2
    %v2736 = vadd.f32 %v2734, %v2735
    %v2737 = vrot.slane %v2736, 1
    %v2738 = vadd.f32 %v2736, %v2737
    %v2739 = vsel %vm2269, %v1824, 0.0
    %v2740 = vrot.slane %v2739, 4
    %v2741 = vadd.f32 %v2739, %v2740
    %v2742 = vrot.slane %v2741, 2
    %v2743 = vadd.f32 %v2741, %v2742
    %v2744 = vrot.slane %v2743, 1
    %v2745 = vadd.f32 %v2743, %v2744
    %v2746 = vsel %vm2269, %v1825, 0.0
    %v2747 = vrot.slane %v2746, 4
    %v2748 = vadd.f32 %v2746, %v2747
    %v2749 = vrot.slane %v2748, 2
    %v2750 = vadd.f32 %v2748, %v2749
    %v2751 = vrot.slane %v2750, 1
    %v2752 = vadd.f32 %v2750, %v2751
    %v2753 = vsel %vm2269, %v1826, 0.0
    %v2754 = vrot.slane %v2753, 4
    %v2755 = vadd.f32 %v2753, %v2754
    %v2756 = vrot.slane %v2755, 2
    %v2757 = vadd.f32 %v2755, %v2756
    %v2758 = vrot.slane %v2757, 1
    %v2759 = vadd.f32 %v2757, %v2758
    %v2760 = vsel %vm2269, %v1827, 0.0
    %v2761 = vrot.slane %v2760, 4
    %v2762 = vadd.f32 %v2760, %v2761
    %v2763 = vrot.slane %v2762, 2
    %v2764 = vadd.f32 %v2762, %v2763
    %v2765 = vrot.slane %v2764, 1
    %v2766 = vadd.f32 %v2764, %v2765
    %v2767 = vsel %vm2269, %v1828, 0.0
    %v2768 = vrot.slane %v2767, 4
    %v2769 = vadd.f32 %v2767, %v2768
    %v2770 = vrot.slane %v2769, 2
    %v2771 = vadd.f32 %v2769, %v2770
    %v2772 = vrot.slane %v2771, 1
    %v2773 = vadd.f32 %v2771, %v2772
    %v2774 = vsel %vm2269, %v1829, 0.0
    %v2775 = vrot.slane %v2774, 4
    %v2776 = vadd.f32 %v2774, %v2775
    %v2777 = vrot.slane %v2776, 2
    %v2778 = vadd.f32 %v2776, %v2777
    %v2779 = vrot.slane %v2778, 1
    %v2780 = vadd.f32 %v2778, %v2779
    %v2781 = vsel %vm2269, %v1830, 0.0
    %v2782 = vrot.slane %v2781, 4
    %v2783 = vadd.f32 %v2781, %v2782
    %v2784 = vrot.slane %v2783, 2
    %v2785 = vadd.f32 %v2783, %v2784
    %v2786 = vrot.slane %v2785, 1
    %v2787 = vadd.f32 %v2785, %v2786
    %v2788 = vsel %vm2269, %v1831, 0.0
    %v2789 = vrot.slane %v2788, 4
    %v2790 = vadd.f32 %v2788, %v2789
    %v2791 = vrot.slane %v2790, 2
    %v2792 = vadd.f32 %v2790, %v2791
    %v2793 = vrot.slane %v2792, 1
    %v2794 = vadd.f32 %v2792, %v2793
    %v2795 = vsel %vm2269, %v1832, 0.0
    %v2796 = vrot.slane %v2795, 4
    %v2797 = vadd.f32 %v2795, %v2796
    %v2798 = vrot.slane %v2797, 2
    %v2799 = vadd.f32 %v2797, %v2798
    %v2800 = vrot.slane %v2799, 1
    %v2801 = vadd.f32 %v2799, %v2800
    %v2802 = vsel %vm2269, %v1833, 0.0
    %v2803 = vrot.slane %v2802, 4
    %v2804 = vadd.f32 %v2802, %v2803
    %v2805 = vrot.slane %v2804, 2
    %v2806 = vadd.f32 %v2804, %v2805
    %v2807 = vrot.slane %v2806, 1
    %v2808 = vadd.f32 %v2806, %v2807
    %v2809 = vsel %vm2269, %v1834, 0.0
    %v2810 = vrot.slane %v2809, 4
    %v2811 = vadd.f32 %v2809, %v2810
    %v2812 = vrot.slane %v2811, 2
    %v2813 = vadd.f32 %v2811, %v2812
    %v2814 = vrot.slane %v2813, 1
    %v2815 = vadd.f32 %v2813, %v2814
    %v2816 = vsel %vm2269, %v1835, 0.0
    %v2817 = vrot.slane %v2816, 4
    %v2818 = vadd.f32 %v2816, %v2817
    %v2819 = vrot.slane %v2818, 2
    %v2820 = vadd.f32 %v2818, %v2819
    %v2821 = vrot.slane %v2820, 1
    %v2822 = vadd.f32 %v2820, %v2821
    %v2823 = vsel %vm2269, %v1836, 0.0
    %v2824 = vrot.slane %v2823, 4
    %v2825 = vadd.f32 %v2823, %v2824
    %v2826 = vrot.slane %v2825, 2
    %v2827 = vadd.f32 %v2825, %v2826
    %v2828 = vrot.slane %v2827, 1
    %v2829 = vadd.f32 %v2827, %v2828
    %v2830 = vsel %vm2269, %v1837, 0.0
    %v2831 = vrot.slane %v2830, 4
    %v2832 = vadd.f32 %v2830, %v2831
    %v2833 = vrot.slane %v2832, 2
    %v2834 = vadd.f32 %v2832, %v2833
    %v2835 = vrot.slane %v2834, 1
    %v2836 = vadd.f32 %v2834, %v2835
    %v2837 = vsel %vm2269, %v1838, 0.0
    %v2838 = vrot.slane %v2837, 4
    %v2839 = vadd.f32 %v2837, %v2838
    %v2840 = vrot.slane %v2839, 2
    %v2841 = vadd.f32 %v2839, %v2840
    %v2842 = vrot.slane %v2841, 1
    %v2843 = vadd.f32 %v2841, %v2842
    %v2844 = vsel %vm2269, %v1839, 0.0
    %v2845 = vrot.slane %v2844, 4
    %v2846 = vadd.f32 %v2844, %v2845
    %v2847 = vrot.slane %v2846, 2
    %v2848 = vadd.f32 %v2846, %v2847
    %v2849 = vrot.slane %v2848, 1
    %v2850 = vadd.f32 %v2848, %v2849
    %v2851 = vsel %vm2269, %v1840, 0.0
    %v2852 = vrot.slane %v2851, 4
    %v2853 = vadd.f32 %v2851, %v2852
    %v2854 = vrot.slane %v2853, 2
    %v2855 = vadd.f32 %v2853, %v2854
    %v2856 = vrot.slane %v2855, 1
    %v2857 = vadd.f32 %v2855, %v2856
    %v2858 = vsel %vm2269, %v1841, 0.0
    %v2859 = vrot.slane %v2858, 4
    %v2860 = vadd.f32 %v2858, %v2859
    %v2861 = vrot.slane %v2860, 2
    %v2862 = vadd.f32 %v2860, %v2861
    %v2863 = vrot.slane %v2862, 1
    %v2864 = vadd.f32 %v2862, %v2863
    %v2865 = vsel %vm2269, %v1842, 0.0
    %v2866 = vrot.slane %v2865, 4
    %v2867 = vadd.f32 %v2865, %v2866
    %v2868 = vrot.slane %v2867, 2
    %v2869 = vadd.f32 %v2867, %v2868
    %v2870 = vrot.slane %v2869, 1
    %v2871 = vadd.f32 %v2869, %v2870
    %v2872 = vsel %vm2269, %v1843, 0.0
    %v2873 = vrot.slane %v2872, 4
    %v2874 = vadd.f32 %v2872, %v2873
    %v2875 = vrot.slane %v2874, 2
    %v2876 = vadd.f32 %v2874, %v2875
    %v2877 = vrot.slane %v2876, 1
    %v2878 = vadd.f32 %v2876, %v2877
    %v2879 = vsel %vm2269, %v1844, 0.0
    %v2880 = vrot.slane %v2879, 4
    %v2881 = vadd.f32 %v2879, %v2880
    %v2882 = vrot.slane %v2881, 2
    %v2883 = vadd.f32 %v2881, %v2882
    %v2884 = vrot.slane %v2883, 1
    %v2885 = vadd.f32 %v2883, %v2884
    %v2886 = vsel %vm2269, %v1845, 0.0
    %v2887 = vrot.slane %v2886, 4
    %v2888 = vadd.f32 %v2886, %v2887
    %v2889 = vrot.slane %v2888, 2
    %v2890 = vadd.f32 %v2888, %v2889
    %v2891 = vrot.slane %v2890, 1
    %v2892 = vadd.f32 %v2890, %v2891
    %v2893 = vsel %vm2269, %v1846, 0.0
    %v2894 = vrot.slane %v2893, 4
    %v2895 = vadd.f32 %v2893, %v2894
    %v2896 = vrot.slane %v2895, 2
    %v2897 = vadd.f32 %v2895, %v2896
    %v2898 = vrot.slane %v2897, 1
    %v2899 = vadd.f32 %v2897, %v2898
    %v2900 = vsel %vm2269, %v1847, 0.0
    %v2901 = vrot.slane %v2900, 4
    %v2902 = vadd.f32 %v2900, %v2901
    %v2903 = vrot.slane %v2902, 2
    %v2904 = vadd.f32 %v2902, %v2903
    %v2905 = vrot.slane %v2904, 1
    %v2906 = vadd.f32 %v2904, %v2905
    %v2907 = vsel %vm2269, %v1848, 0.0
    %v2908 = vrot.slane %v2907, 4
    %v2909 = vadd.f32 %v2907, %v2908
    %v2910 = vrot.slane %v2909, 2
    %v2911 = vadd.f32 %v2909, %v2910
    %v2912 = vrot.slane %v2911, 1
    %v2913 = vadd.f32 %v2911, %v2912
    %v2914 = vsel %vm2269, %v1849, 0.0
    %v2915 = vrot.slane %v2914, 4
    %v2916 = vadd.f32 %v2914, %v2915
    %v2917 = vrot.slane %v2916, 2
    %v2918 = vadd.f32 %v2916, %v2917
    %v2919 = vrot.slane %v2918, 1
    %v2920 = vadd.f32 %v2918, %v2919
    %v2921 = vsel %vm2269, %v1850, 0.0
    %v2922 = vrot.slane %v2921, 4
    %v2923 = vadd.f32 %v2921, %v2922
    %v2924 = vrot.slane %v2923, 2
    %v2925 = vadd.f32 %v2923, %v2924
    %v2926 = vrot.slane %v2925, 1
    %v2927 = vadd.f32 %v2925, %v2926
    %v2928 = vsel %vm2269, %v1851, 0.0
    %v2929 = vrot.slane %v2928, 4
    %v2930 = vadd.f32 %v2928, %v2929
    %v2931 = vrot.slane %v2930, 2
    %v2932 = vadd.f32 %v2930, %v2931
    %v2933 = vrot.slane %v2932, 1
    %v2934 = vadd.f32 %v2932, %v2933
    %v2935 = vsel %vm2269, %v1852, 0.0
    %v2936 = vrot.slane %v2935, 4
    %v2937 = vadd.f32 %v2935, %v2936
    %v2938 = vrot.slane %v2937, 2
    %v2939 = vadd.f32 %v2937, %v2938
    %v2940 = vrot.slane %v2939, 1
    %v2941 = vadd.f32 %v2939, %v2940
    %v2942 = vsel %vm2269, %v1853, 0.0
    %v2943 = vrot.slane %v2942, 4
    %v2944 = vadd.f32 %v2942, %v2943
    %v2945 = vrot.slane %v2944, 2
    %v2946 = vadd.f32 %v2944, %v2945
    %v2947 = vrot.slane %v2946, 1
    %v2948 = vadd.f32 %v2946, %v2947
    %v2949 = vsel %vm2269, %v1854, 0.0
    %v2950 = vrot.slane %v2949, 4
    %v2951 = vadd.f32 %v2949, %v2950
    %v2952 = vrot.slane %v2951, 2
    %v2953 = vadd.f32 %v2951, %v2952
    %v2954 = vrot.slane %v2953, 1
    %v2955 = vadd.f32 %v2953, %v2954
    %v2956 = vsel %vm2269, %v1855, 0.0
    %v2957 = vrot.slane %v2956, 4
    %v2958 = vadd.f32 %v2956, %v2957
    %v2959 = vrot.slane %v2958, 2
    %v2960 = vadd.f32 %v2958, %v2959
    %v2961 = vrot.slane %v2960, 1
    %v2962 = vadd.f32 %v2960, %v2961
    %v2963 = vsel %vm2269, %v1856, 0.0
    %v2964 = vrot.slane %v2963, 4
    %v2965 = vadd.f32 %v2963, %v2964
    %v2966 = vrot.slane %v2965, 2
    %v2967 = vadd.f32 %v2965, %v2966
    %v2968 = vrot.slane %v2967, 1
    %v2969 = vadd.f32 %v2967, %v2968
    %v2970 = vsel %vm2269, %v1857, 0.0
    %v2971 = vrot.slane %v2970, 4
    %v2972 = vadd.f32 %v2970, %v2971
    %v2973 = vrot.slane %v2972, 2
    %v2974 = vadd.f32 %v2972, %v2973
    %v2975 = vrot.slane %v2974, 1
    %v2976 = vadd.f32 %v2974, %v2975
    %v2977 = vsel %vm2269, %v1858, 0.0
    %v2978 = vrot.slane %v2977, 4
    %v2979 = vadd.f32 %v2977, %v2978
    %v2980 = vrot.slane %v2979, 2
    %v2981 = vadd.f32 %v2979, %v2980
    %v2982 = vrot.slane %v2981, 1
    %v2983 = vadd.f32 %v2981, %v2982
    %v2984 = vsel %vm2269, %v1859, 0.0
    %v2985 = vrot.slane %v2984, 4
    %v2986 = vadd.f32 %v2984, %v2985
    %v2987 = vrot.slane %v2986, 2
    %v2988 = vadd.f32 %v2986, %v2987
    %v2989 = vrot.slane %v2988, 1
    %v2990 = vadd.f32 %v2988, %v2989
    %v2991 = vsel %vm2269, %v1860, 0.0
    %v2992 = vrot.slane %v2991, 4
    %v2993 = vadd.f32 %v2991, %v2992
    %v2994 = vrot.slane %v2993, 2
    %v2995 = vadd.f32 %v2993, %v2994
    %v2996 = vrot.slane %v2995, 1
    %v2997 = vadd.f32 %v2995, %v2996
    %v2998 = vsel %vm2269, %v1861, 0.0
    %v2999 = vrot.slane %v2998, 4
    %v3000 = vadd.f32 %v2998, %v2999
    %v3001 = vrot.slane %v3000, 2
    %v3002 = vadd.f32 %v3000, %v3001
    %v3003 = vrot.slane %v3002, 1
    %v3004 = vadd.f32 %v3002, %v3003
    %v3005 = vsel %vm2269, %v1862, 0.0
    %v3006 = vrot.slane %v3005, 4
    %v3007 = vadd.f32 %v3005, %v3006
    %v3008 = vrot.slane %v3007, 2
    %v3009 = vadd.f32 %v3007, %v3008
    %v3010 = vrot.slane %v3009, 1
    %v3011 = vadd.f32 %v3009, %v3010
    %v3012 = vsel %vm2269, %v1863, 0.0
    %v3013 = vrot.slane %v3012, 4
    %v3014 = vadd.f32 %v3012, %v3013
    %v3015 = vrot.slane %v3014, 2
    %v3016 = vadd.f32 %v3014, %v3015
    %v3017 = vrot.slane %v3016, 1
    %v3018 = vadd.f32 %v3016, %v3017
    %v3019 = vsel %vm2269, %v1864, 0.0
    %v3020 = vrot.slane %v3019, 4
    %v3021 = vadd.f32 %v3019, %v3020
    %v3022 = vrot.slane %v3021, 2
    %v3023 = vadd.f32 %v3021, %v3022
    %v3024 = vrot.slane %v3023, 1
    %v3025 = vadd.f32 %v3023, %v3024
    %v3026 = vsel %vm2269, %v1865, 0.0
    %v3027 = vrot.slane %v3026, 4
    %v3028 = vadd.f32 %v3026, %v3027
    %v3029 = vrot.slane %v3028, 2
    %v3030 = vadd.f32 %v3028, %v3029
    %v3031 = vrot.slane %v3030, 1
    %v3032 = vadd.f32 %v3030, %v3031
    %v3033 = vsel %vm2269, %v1866, 0.0
    %v3034 = vrot.slane %v3033, 4
    %v3035 = vadd.f32 %v3033, %v3034
    %v3036 = vrot.slane %v3035, 2
    %v3037 = vadd.f32 %v3035, %v3036
    %v3038 = vrot.slane %v3037, 1
    %v3039 = vadd.f32 %v3037, %v3038
    %v3040 = vsel %vm2269, %v1867, 0.0
    %v3041 = vrot.slane %v3040, 4
    %v3042 = vadd.f32 %v3040, %v3041
    %v3043 = vrot.slane %v3042, 2
    %v3044 = vadd.f32 %v3042, %v3043
    %v3045 = vrot.slane %v3044, 1
    %v3046 = vadd.f32 %v3044, %v3045
    %v3047 = vsel %vm2269, %v1868, 0.0
    %v3048 = vrot.slane %v3047, 4
    %v3049 = vadd.f32 %v3047, %v3048
    %v3050 = vrot.slane %v3049, 2
    %v3051 = vadd.f32 %v3049, %v3050
    %v3052 = vrot.slane %v3051, 1
    %v3053 = vadd.f32 %v3051, %v3052
    %v3054 = vsel %vm2269, %v1869, 0.0
    %v3055 = vrot.slane %v3054, 4
    %v3056 = vadd.f32 %v3054, %v3055
    %v3057 = vrot.slane %v3056, 2
    %v3058 = vadd.f32 %v3056, %v3057
    %v3059 = vrot.slane %v3058, 1
    %v3060 = vadd.f32 %v3058, %v3059
    %v3061 = vsel %vm2269, %v1870, 0.0
    %v3062 = vrot.slane %v3061, 4
    %v3063 = vadd.f32 %v3061, %v3062
    %v3064 = vrot.slane %v3063, 2
    %v3065 = vadd.f32 %v3063, %v3064
    %v3066 = vrot.slane %v3065, 1
    %v3067 = vadd.f32 %v3065, %v3066
    %v3068 = vsel %vm2269, %v1871, 0.0
    %v3069 = vrot.slane %v3068, 4
    %v3070 = vadd.f32 %v3068, %v3069
    %v3071 = vrot.slane %v3070, 2
    %v3072 = vadd.f32 %v3070, %v3071
    %v3073 = vrot.slane %v3072, 1
    %v3074 = vadd.f32 %v3072, %v3073
    %v3075 = vsel %vm2269, %v1872, 0.0
    %v3076 = vrot.slane %v3075, 4
    %v3077 = vadd.f32 %v3075, %v3076
    %v3078 = vrot.slane %v3077, 2
    %v3079 = vadd.f32 %v3077, %v3078
    %v3080 = vrot.slane %v3079, 1
    %v3081 = vadd.f32 %v3079, %v3080
    %v3082 = vsel %vm2269, %v1873, 0.0
    %v3083 = vrot.slane %v3082, 4
    %v3084 = vadd.f32 %v3082, %v3083
    %v3085 = vrot.slane %v3084, 2
    %v3086 = vadd.f32 %v3084, %v3085
    %v3087 = vrot.slane %v3086, 1
    %v3088 = vadd.f32 %v3086, %v3087
    %v3089 = vsel %vm2269, %v1874, 0.0
    %v3090 = vrot.slane %v3089, 4
    %v3091 = vadd.f32 %v3089, %v3090
    %v3092 = vrot.slane %v3091, 2
    %v3093 = vadd.f32 %v3091, %v3092
    %v3094 = vrot.slane %v3093, 1
    %v3095 = vadd.f32 %v3093, %v3094
    %v3096 = vsel %vm2269, %v1875, 0.0
    %v3097 = vrot.slane %v3096, 4
    %v3098 = vadd.f32 %v3096, %v3097
    %v3099 = vrot.slane %v3098, 2
    %v3100 = vadd.f32 %v3098, %v3099
    %v3101 = vrot.slane %v3100, 1
    %v3102 = vadd.f32 %v3100, %v3101
    %v3103 = vsel %vm2269, %v1876, 0.0
    %v3104 = vrot.slane %v3103, 4
    %v3105 = vadd.f32 %v3103, %v3104
    %v3106 = vrot.slane %v3105, 2
    %v3107 = vadd.f32 %v3105, %v3106
    %v3108 = vrot.slane %v3107, 1
    %v3109 = vadd.f32 %v3107, %v3108
    %v3110 = vsel %vm2269, %v1877, 0.0
    %v3111 = vrot.slane %v3110, 4
    %v3112 = vadd.f32 %v3110, %v3111
    %v3113 = vrot.slane %v3112, 2
    %v3114 = vadd.f32 %v3112, %v3113
    %v3115 = vrot.slane %v3114, 1
    %v3116 = vadd.f32 %v3114, %v3115
    %v3117 = vsel %vm2269, %v1878, 0.0
    %v3118 = vrot.slane %v3117, 4
    %v3119 = vadd.f32 %v3117, %v3118
    %v3120 = vrot.slane %v3119, 2
    %v3121 = vadd.f32 %v3119, %v3120
    %v3122 = vrot.slane %v3121, 1
    %v3123 = vadd.f32 %v3121, %v3122
    %v3124 = vsel %vm2269, %v1879, 0.0
    %v3125 = vrot.slane %v3124, 4
    %v3126 = vadd.f32 %v3124, %v3125
    %v3127 = vrot.slane %v3126, 2
    %v3128 = vadd.f32 %v3126, %v3127
    %v3129 = vrot.slane %v3128, 1
    %v3130 = vadd.f32 %v3128, %v3129
    %v3131 = vsel %vm2269, %v1880, 0.0
    %v3132 = vrot.slane %v3131, 4
    %v3133 = vadd.f32 %v3131, %v3132
    %v3134 = vrot.slane %v3133, 2
    %v3135 = vadd.f32 %v3133, %v3134
    %v3136 = vrot.slane %v3135, 1
    %v3137 = vadd.f32 %v3135, %v3136
    %v3138 = vsel %vm2269, %v1881, 0.0
    %v3139 = vrot.slane %v3138, 4
    %v3140 = vadd.f32 %v3138, %v3139
    %v3141 = vrot.slane %v3140, 2
    %v3142 = vadd.f32 %v3140, %v3141
    %v3143 = vrot.slane %v3142, 1
    %v3144 = vadd.f32 %v3142, %v3143
    %v3145 = vsel %vm2269, %v1882, 0.0
    %v3146 = vrot.slane %v3145, 4
    %v3147 = vadd.f32 %v3145, %v3146
    %v3148 = vrot.slane %v3147, 2
    %v3149 = vadd.f32 %v3147, %v3148
    %v3150 = vrot.slane %v3149, 1
    %v3151 = vadd.f32 %v3149, %v3150
    %v3152 = vsel %vm2269, %v1883, 0.0
    %v3153 = vrot.slane %v3152, 4
    %v3154 = vadd.f32 %v3152, %v3153
    %v3155 = vrot.slane %v3154, 2
    %v3156 = vadd.f32 %v3154, %v3155
    %v3157 = vrot.slane %v3156, 1
    %v3158 = vadd.f32 %v3156, %v3157
    %v3159 = vsel %vm2269, %v1884, 0.0
    %v3160 = vrot.slane %v3159, 4
    %v3161 = vadd.f32 %v3159, %v3160
    %v3162 = vrot.slane %v3161, 2
    %v3163 = vadd.f32 %v3161, %v3162
    %v3164 = vrot.slane %v3163, 1
    %v3165 = vadd.f32 %v3163, %v3164
    %v3166 = vsel %vm2269, %v1885, 0.0
    %v3167 = vrot.slane %v3166, 4
    %v3168 = vadd.f32 %v3166, %v3167
    %v3169 = vrot.slane %v3168, 2
    %v3170 = vadd.f32 %v3168, %v3169
    %v3171 = vrot.slane %v3170, 1
    %v3172 = vadd.f32 %v3170, %v3171
    %v3173 = vsel %vm2269, %v1886, 0.0
    %v3174 = vrot.slane %v3173, 4
    %v3175 = vadd.f32 %v3173, %v3174
    %v3176 = vrot.slane %v3175, 2
    %v3177 = vadd.f32 %v3175, %v3176
    %v3178 = vrot.slane %v3177, 1
    %v3179 = vadd.f32 %v3177, %v3178
    %v3180 = vsel %vm2269, %v1887, 0.0
    %v3181 = vrot.slane %v3180, 4
    %v3182 = vadd.f32 %v3180, %v3181
    %v3183 = vrot.slane %v3182, 2
    %v3184 = vadd.f32 %v3182, %v3183
    %v3185 = vrot.slane %v3184, 1
    %v3186 = vadd.f32 %v3184, %v3185
    %v3187 = vsel %vm2269, %v1888, 0.0
    %v3188 = vrot.slane %v3187, 4
    %v3189 = vadd.f32 %v3187, %v3188
    %v3190 = vrot.slane %v3189, 2
    %v3191 = vadd.f32 %v3189, %v3190
    %v3192 = vrot.slane %v3191, 1
    %v3193 = vadd.f32 %v3191, %v3192
    %v3194 = vsel %vm2269, %v1889, 0.0
    %v3195 = vrot.slane %v3194, 4
    %v3196 = vadd.f32 %v3194, %v3195
    %v3197 = vrot.slane %v3196, 2
    %v3198 = vadd.f32 %v3196, %v3197
    %v3199 = vrot.slane %v3198, 1
    %v3200 = vadd.f32 %v3198, %v3199
    %v3201 = vsel %vm2269, %v1890, 0.0
    %v3202 = vrot.slane %v3201, 4
    %v3203 = vadd.f32 %v3201, %v3202
    %v3204 = vrot.slane %v3203, 2
    %v3205 = vadd.f32 %v3203, %v3204
    %v3206 = vrot.slane %v3205, 1
    %v3207 = vadd.f32 %v3205, %v3206
    %v3208 = vsel %vm2269, %v1891, 0.0
    %v3209 = vrot.slane %v3208, 4
    %v3210 = vadd.f32 %v3208, %v3209
    %v3211 = vrot.slane %v3210, 2
    %v3212 = vadd.f32 %v3210, %v3211
    %v3213 = vrot.slane %v3212, 1
    %v3214 = vadd.f32 %v3212, %v3213
    %v3215 = vsel %vm2269, %v1892, 0.0
    %v3216 = vrot.slane %v3215, 4
    %v3217 = vadd.f32 %v3215, %v3216
    %v3218 = vrot.slane %v3217, 2
    %v3219 = vadd.f32 %v3217, %v3218
    %v3220 = vrot.slane %v3219, 1
    %v3221 = vadd.f32 %v3219, %v3220
    %v3222 = vsel %vm2269, %v1893, 0.0
    %v3223 = vrot.slane %v3222, 4
    %v3224 = vadd.f32 %v3222, %v3223
    %v3225 = vrot.slane %v3224, 2
    %v3226 = vadd.f32 %v3224, %v3225
    %v3227 = vrot.slane %v3226, 1
    %v3228 = vadd.f32 %v3226, %v3227
    %v3229 = vsel %vm2269, %v1894, 0.0
    %v3230 = vrot.slane %v3229, 4
    %v3231 = vadd.f32 %v3229, %v3230
    %v3232 = vrot.slane %v3231, 2
    %v3233 = vadd.f32 %v3231, %v3232
    %v3234 = vrot.slane %v3233, 1
    %v3235 = vadd.f32 %v3233, %v3234
    %v3236 = vsel %vm2269, %v1895, 0.0
    %v3237 = vrot.slane %v3236, 4
    %v3238 = vadd.f32 %v3236, %v3237
    %v3239 = vrot.slane %v3238, 2
    %v3240 = vadd.f32 %v3238, %v3239
    %v3241 = vrot.slane %v3240, 1
    %v3242 = vadd.f32 %v3240, %v3241
    %v3243 = vsel %vm2269, %v1896, 0.0
    %v3244 = vrot.slane %v3243, 4
    %v3245 = vadd.f32 %v3243, %v3244
    %v3246 = vrot.slane %v3245, 2
    %v3247 = vadd.f32 %v3245, %v3246
    %v3248 = vrot.slane %v3247, 1
    %v3249 = vadd.f32 %v3247, %v3248
    %v3250 = vsel %vm2269, %v1897, 0.0
    %v3251 = vrot.slane %v3250, 4
    %v3252 = vadd.f32 %v3250, %v3251
    %v3253 = vrot.slane %v3252, 2
    %v3254 = vadd.f32 %v3252, %v3253
    %v3255 = vrot.slane %v3254, 1
    %v3256 = vadd.f32 %v3254, %v3255
    %v3257 = vsel %vm2269, %v1898, 0.0
    %v3258 = vrot.slane %v3257, 4
    %v3259 = vadd.f32 %v3257, %v3258
    %v3260 = vrot.slane %v3259, 2
    %v3261 = vadd.f32 %v3259, %v3260
    %v3262 = vrot.slane %v3261, 1
    %v3263 = vadd.f32 %v3261, %v3262
    %v3264 = vsel %vm2269, %v1899, 0.0
    %v3265 = vrot.slane %v3264, 4
    %v3266 = vadd.f32 %v3264, %v3265
    %v3267 = vrot.slane %v3266, 2
    %v3268 = vadd.f32 %v3266, %v3267
    %v3269 = vrot.slane %v3268, 1
    %v3270 = vadd.f32 %v3268, %v3269
    %v3271 = vsel %vm2269, %v1900, 0.0
    %v3272 = vrot.slane %v3271, 4
    %v3273 = vadd.f32 %v3271, %v3272
    %v3274 = vrot.slane %v3273, 2
    %v3275 = vadd.f32 %v3273, %v3274
    %v3276 = vrot.slane %v3275, 1
    %v3277 = vadd.f32 %v3275, %v3276
    %v3278 = vsel %vm2269, %v1901, 0.0
    %v3279 = vrot.slane %v3278, 4
    %v3280 = vadd.f32 %v3278, %v3279
    %v3281 = vrot.slane %v3280, 2
    %v3282 = vadd.f32 %v3280, %v3281
    %v3283 = vrot.slane %v3282, 1
    %v3284 = vadd.f32 %v3282, %v3283
    %v3285 = vsel %vm2269, %v1902, 0.0
    %v3286 = vrot.slane %v3285, 4
    %v3287 = vadd.f32 %v3285, %v3286
    %v3288 = vrot.slane %v3287, 2
    %v3289 = vadd.f32 %v3287, %v3288
    %v3290 = vrot.slane %v3289, 1
    %v3291 = vadd.f32 %v3289, %v3290
    %v3292 = vsel %vm2269, %v1903, 0.0
    %v3293 = vrot.slane %v3292, 4
    %v3294 = vadd.f32 %v3292, %v3293
    %v3295 = vrot.slane %v3294, 2
    %v3296 = vadd.f32 %v3294, %v3295
    %v3297 = vrot.slane %v3296, 1
    %v3298 = vadd.f32 %v3296, %v3297
    %v3299 = vsel %vm2269, %v1904, 0.0
    %v3300 = vrot.slane %v3299, 4
    %v3301 = vadd.f32 %v3299, %v3300
    %v3302 = vrot.slane %v3301, 2
    %v3303 = vadd.f32 %v3301, %v3302
    %v3304 = vrot.slane %v3303, 1
    %v3305 = vadd.f32 %v3303, %v3304
    %v3306 = vsel %vm2269, %v1905, 0.0
    %v3307 = vrot.slane %v3306, 4
    %v3308 = vadd.f32 %v3306, %v3307
    %v3309 = vrot.slane %v3308, 2
    %v3310 = vadd.f32 %v3308, %v3309
    %v3311 = vrot.slane %v3310, 1
    %v3312 = vadd.f32 %v3310, %v3311
    %v3313 = vsel %vm2269, %v1906, 0.0
    %v3314 = vrot.slane %v3313, 4
    %v3315 = vadd.f32 %v3313, %v3314
    %v3316 = vrot.slane %v3315, 2
    %v3317 = vadd.f32 %v3315, %v3316
    %v3318 = vrot.slane %v3317, 1
    %v3319 = vadd.f32 %v3317, %v3318
    %v3320 = vsel %vm2269, %v1907, 0.0
    %v3321 = vrot.slane %v3320, 4
    %v3322 = vadd.f32 %v3320, %v3321
    %v3323 = vrot.slane %v3322, 2
    %v3324 = vadd.f32 %v3322, %v3323
    %v3325 = vrot.slane %v3324, 1
    %v3326 = vadd.f32 %v3324, %v3325
    %v3327 = vsel %vm2269, %v1908, 0.0
    %v3328 = vrot.slane %v3327, 4
    %v3329 = vadd.f32 %v3327, %v3328
    %v3330 = vrot.slane %v3329, 2
    %v3331 = vadd.f32 %v3329, %v3330
    %v3332 = vrot.slane %v3331, 1
    %v3333 = vadd.f32 %v3331, %v3332
    %v3334 = vsel %vm2269, %v1909, 0.0
    %v3335 = vrot.slane %v3334, 4
    %v3336 = vadd.f32 %v3334, %v3335
    %v3337 = vrot.slane %v3336, 2
    %v3338 = vadd.f32 %v3336, %v3337
    %v3339 = vrot.slane %v3338, 1
    %v3340 = vadd.f32 %v3338, %v3339
    %v3341 = vsel %vm2269, %v1910, 0.0
    %v3342 = vrot.slane %v3341, 4
    %v3343 = vadd.f32 %v3341, %v3342
    %v3344 = vrot.slane %v3343, 2
    %v3345 = vadd.f32 %v3343, %v3344
    %v3346 = vrot.slane %v3345, 1
    %v3347 = vadd.f32 %v3345, %v3346
    %v3348 = vsel %vm2269, %v1911, 0.0
    %v3349 = vrot.slane %v3348, 4
    %v3350 = vadd.f32 %v3348, %v3349
    %v3351 = vrot.slane %v3350, 2
    %v3352 = vadd.f32 %v3350, %v3351
    %v3353 = vrot.slane %v3352, 1
    %v3354 = vadd.f32 %v3352, %v3353
    %v3355 = vsel %vm2269, %v1912, 0.0
    %v3356 = vrot.slane %v3355, 4
    %v3357 = vadd.f32 %v3355, %v3356
    %v3358 = vrot.slane %v3357, 2
    %v3359 = vadd.f32 %v3357, %v3358
    %v3360 = vrot.slane %v3359, 1
    %v3361 = vadd.f32 %v3359, %v3360
    %v3362 = vsel %vm2269, %v1913, 0.0
    %v3363 = vrot.slane %v3362, 4
    %v3364 = vadd.f32 %v3362, %v3363
    %v3365 = vrot.slane %v3364, 2
    %v3366 = vadd.f32 %v3364, %v3365
    %v3367 = vrot.slane %v3366, 1
    %v3368 = vadd.f32 %v3366, %v3367
    %v3369 = vsel %vm2269, %v1914, 0.0
    %v3370 = vrot.slane %v3369, 4
    %v3371 = vadd.f32 %v3369, %v3370
    %v3372 = vrot.slane %v3371, 2
    %v3373 = vadd.f32 %v3371, %v3372
    %v3374 = vrot.slane %v3373, 1
    %v3375 = vadd.f32 %v3373, %v3374
    %v3376 = vsel %vm2269, %v1915, 0.0
    %v3377 = vrot.slane %v3376, 4
    %v3378 = vadd.f32 %v3376, %v3377
    %v3379 = vrot.slane %v3378, 2
    %v3380 = vadd.f32 %v3378, %v3379
    %v3381 = vrot.slane %v3380, 1
    %v3382 = vadd.f32 %v3380, %v3381
    %v3383 = vsel %vm2269, %v1916, 0.0
    %v3384 = vrot.slane %v3383, 4
    %v3385 = vadd.f32 %v3383, %v3384
    %v3386 = vrot.slane %v3385, 2
    %v3387 = vadd.f32 %v3385, %v3386
    %v3388 = vrot.slane %v3387, 1
    %v3389 = vadd.f32 %v3387, %v3388
    %v3390 = vsel %vm2269, %v1917, 0.0
    %v3391 = vrot.slane %v3390, 4
    %v3392 = vadd.f32 %v3390, %v3391
    %v3393 = vrot.slane %v3392, 2
    %v3394 = vadd.f32 %v3392, %v3393
    %v3395 = vrot.slane %v3394, 1
    %v3396 = vadd.f32 %v3394, %v3395
    %v3397 = vsel %vm2269, %v1918, 0.0
    %v3398 = vrot.slane %v3397, 4
    %v3399 = vadd.f32 %v3397, %v3398
    %v3400 = vrot.slane %v3399, 2
    %v3401 = vadd.f32 %v3399, %v3400
    %v3402 = vrot.slane %v3401, 1
    %v3403 = vadd.f32 %v3401, %v3402
    %v3404 = vsel %vm2269, %v1919, 0.0
    %v3405 = vrot.slane %v3404, 4
    %v3406 = vadd.f32 %v3404, %v3405
    %v3407 = vrot.slane %v3406, 2
    %v3408 = vadd.f32 %v3406, %v3407
    %v3409 = vrot.slane %v3408, 1
    %v3410 = vadd.f32 %v3408, %v3409
    %v3411 = vsel %vm2269, %v1920, 0.0
    %v3412 = vrot.slane %v3411, 4
    %v3413 = vadd.f32 %v3411, %v3412
    %v3414 = vrot.slane %v3413, 2
    %v3415 = vadd.f32 %v3413, %v3414
    %v3416 = vrot.slane %v3415, 1
    %v3417 = vadd.f32 %v3415, %v3416
    %v3418 = vsel %vm2269, %v1921, 0.0
    %v3419 = vrot.slane %v3418, 4
    %v3420 = vadd.f32 %v3418, %v3419
    %v3421 = vrot.slane %v3420, 2
    %v3422 = vadd.f32 %v3420, %v3421
    %v3423 = vrot.slane %v3422, 1
    %v3424 = vadd.f32 %v3422, %v3423
    %v3425 = vsel %vm2269, %v1922, 0.0
    %v3426 = vrot.slane %v3425, 4
    %v3427 = vadd.f32 %v3425, %v3426
    %v3428 = vrot.slane %v3427, 2
    %v3429 = vadd.f32 %v3427, %v3428
    %v3430 = vrot.slane %v3429, 1
    %v3431 = vadd.f32 %v3429, %v3430
    %v3432 = vsel %vm2269, %v1923, 0.0
    %v3433 = vrot.slane %v3432, 4
    %v3434 = vadd.f32 %v3432, %v3433
    %v3435 = vrot.slane %v3434, 2
    %v3436 = vadd.f32 %v3434, %v3435
    %v3437 = vrot.slane %v3436, 1
    %v3438 = vadd.f32 %v3436, %v3437
    %v3439 = vsel %vm2269, %v1924, 0.0
    %v3440 = vrot.slane %v3439, 4
    %v3441 = vadd.f32 %v3439, %v3440
    %v3442 = vrot.slane %v3441, 2
    %v3443 = vadd.f32 %v3441, %v3442
    %v3444 = vrot.slane %v3443, 1
    %v3445 = vadd.f32 %v3443, %v3444
    %v3446 = vsel %vm2269, %v1925, 0.0
    %v3447 = vrot.slane %v3446, 4
    %v3448 = vadd.f32 %v3446, %v3447
    %v3449 = vrot.slane %v3448, 2
    %v3450 = vadd.f32 %v3448, %v3449
    %v3451 = vrot.slane %v3450, 1
    %v3452 = vadd.f32 %v3450, %v3451
    %v3453 = vsel %vm2269, %v1926, 0.0
    %v3454 = vrot.slane %v3453, 4
    %v3455 = vadd.f32 %v3453, %v3454
    %v3456 = vrot.slane %v3455, 2
    %v3457 = vadd.f32 %v3455, %v3456
    %v3458 = vrot.slane %v3457, 1
    %v3459 = vadd.f32 %v3457, %v3458
    %v3460 = vsel %vm2269, %v1927, 0.0
    %v3461 = vrot.slane %v3460, 4
    %v3462 = vadd.f32 %v3460, %v3461
    %v3463 = vrot.slane %v3462, 2
    %v3464 = vadd.f32 %v3462, %v3463
    %v3465 = vrot.slane %v3464, 1
    %v3466 = vadd.f32 %v3464, %v3465
    %v3467 = vsel %vm2269, %v1928, 0.0
    %v3468 = vrot.slane %v3467, 4
    %v3469 = vadd.f32 %v3467, %v3468
    %v3470 = vrot.slane %v3469, 2
    %v3471 = vadd.f32 %v3469, %v3470
    %v3472 = vrot.slane %v3471, 1
    %v3473 = vadd.f32 %v3471, %v3472
    %v3474 = vsel %vm2269, %v1929, 0.0
    %v3475 = vrot.slane %v3474, 4
    %v3476 = vadd.f32 %v3474, %v3475
    %v3477 = vrot.slane %v3476, 2
    %v3478 = vadd.f32 %v3476, %v3477
    %v3479 = vrot.slane %v3478, 1
    %v3480 = vadd.f32 %v3478, %v3479
    %v3481 = vsel %vm2269, %v1930, 0.0
    %v3482 = vrot.slane %v3481, 4
    %v3483 = vadd.f32 %v3481, %v3482
    %v3484 = vrot.slane %v3483, 2
    %v3485 = vadd.f32 %v3483, %v3484
    %v3486 = vrot.slane %v3485, 1
    %v3487 = vadd.f32 %v3485, %v3486
    %v3488 = vsel %vm2269, %v1931, 0.0
    %v3489 = vrot.slane %v3488, 4
    %v3490 = vadd.f32 %v3488, %v3489
    %v3491 = vrot.slane %v3490, 2
    %v3492 = vadd.f32 %v3490, %v3491
    %v3493 = vrot.slane %v3492, 1
    %v3494 = vadd.f32 %v3492, %v3493
    %v3495 = vsel %vm2269, %v1932, 0.0
    %v3496 = vrot.slane %v3495, 4
    %v3497 = vadd.f32 %v3495, %v3496
    %v3498 = vrot.slane %v3497, 2
    %v3499 = vadd.f32 %v3497, %v3498
    %v3500 = vrot.slane %v3499, 1
    %v3501 = vadd.f32 %v3499, %v3500
    %v3502 = vsel %vm2269, %v1933, 0.0
    %v3503 = vrot.slane %v3502, 4
    %v3504 = vadd.f32 %v3502, %v3503
    %v3505 = vrot.slane %v3504, 2
    %v3506 = vadd.f32 %v3504, %v3505
    %v3507 = vrot.slane %v3506, 1
    %v3508 = vadd.f32 %v3506, %v3507
    %v3509 = vsel %vm2269, %v1934, 0.0
    %v3510 = vrot.slane %v3509, 4
    %v3511 = vadd.f32 %v3509, %v3510
    %v3512 = vrot.slane %v3511, 2
    %v3513 = vadd.f32 %v3511, %v3512
    %v3514 = vrot.slane %v3513, 1
    %v3515 = vadd.f32 %v3513, %v3514
    %v3516 = vsel %vm2269, %v1935, 0.0
    %v3517 = vrot.slane %v3516, 4
    %v3518 = vadd.f32 %v3516, %v3517
    %v3519 = vrot.slane %v3518, 2
    %v3520 = vadd.f32 %v3518, %v3519
    %v3521 = vrot.slane %v3520, 1
    %v3522 = vadd.f32 %v3520, %v3521
    %v3523 = vsel %vm2269, %v1936, 0.0
    %v3524 = vrot.slane %v3523, 4
    %v3525 = vadd.f32 %v3523, %v3524
    %v3526 = vrot.slane %v3525, 2
    %v3527 = vadd.f32 %v3525, %v3526
    %v3528 = vrot.slane %v3527, 1
    %v3529 = vadd.f32 %v3527, %v3528
    %v3530 = vsel %vm2269, %v1937, 0.0
    %v3531 = vrot.slane %v3530, 4
    %v3532 = vadd.f32 %v3530, %v3531
    %v3533 = vrot.slane %v3532, 2
    %v3534 = vadd.f32 %v3532, %v3533
    %v3535 = vrot.slane %v3534, 1
    %v3536 = vadd.f32 %v3534, %v3535
    %v3537 = vsel %vm2269, %v1938, 0.0
    %v3538 = vrot.slane %v3537, 4
    %v3539 = vadd.f32 %v3537, %v3538
    %v3540 = vrot.slane %v3539, 2
    %v3541 = vadd.f32 %v3539, %v3540
    %v3542 = vrot.slane %v3541, 1
    %v3543 = vadd.f32 %v3541, %v3542
    %v3544 = vsel %vm2269, %v1939, 0.0
    %v3545 = vrot.slane %v3544, 4
    %v3546 = vadd.f32 %v3544, %v3545
    %v3547 = vrot.slane %v3546, 2
    %v3548 = vadd.f32 %v3546, %v3547
    %v3549 = vrot.slane %v3548, 1
    %v3550 = vadd.f32 %v3548, %v3549
    %v3551 = vsel %vm2269, %v1940, 0.0
    %v3552 = vrot.slane %v3551, 4
    %v3553 = vadd.f32 %v3551, %v3552
    %v3554 = vrot.slane %v3553, 2
    %v3555 = vadd.f32 %v3553, %v3554
    %v3556 = vrot.slane %v3555, 1
    %v3557 = vadd.f32 %v3555, %v3556
    %v3558 = vsel %vm2269, %v1941, 0.0
    %v3559 = vrot.slane %v3558, 4
    %v3560 = vadd.f32 %v3558, %v3559
    %v3561 = vrot.slane %v3560, 2
    %v3562 = vadd.f32 %v3560, %v3561
    %v3563 = vrot.slane %v3562, 1
    %v3564 = vadd.f32 %v3562, %v3563
    %v3565 = vsel %vm2269, %v1942, 0.0
    %v3566 = vrot.slane %v3565, 4
    %v3567 = vadd.f32 %v3565, %v3566
    %v3568 = vrot.slane %v3567, 2
    %v3569 = vadd.f32 %v3567, %v3568
    %v3570 = vrot.slane %v3569, 1
    %v3571 = vadd.f32 %v3569, %v3570
    %v3572 = vsel %vm2269, %v1943, 0.0
    %v3573 = vrot.slane %v3572, 4
    %v3574 = vadd.f32 %v3572, %v3573
    %v3575 = vrot.slane %v3574, 2
    %v3576 = vadd.f32 %v3574, %v3575
    %v3577 = vrot.slane %v3576, 1
    %v3578 = vadd.f32 %v3576, %v3577
    %v3579 = vsel %vm2269, %v1944, 0.0
    %v3580 = vrot.slane %v3579, 4
    %v3581 = vadd.f32 %v3579, %v3580
    %v3582 = vrot.slane %v3581, 2
    %v3583 = vadd.f32 %v3581, %v3582
    %v3584 = vrot.slane %v3583, 1
    %v3585 = vadd.f32 %v3583, %v3584
    %v3586 = vsel %vm2269, %v1945, 0.0
    %v3587 = vrot.slane %v3586, 4
    %v3588 = vadd.f32 %v3586, %v3587
    %v3589 = vrot.slane %v3588, 2
    %v3590 = vadd.f32 %v3588, %v3589
    %v3591 = vrot.slane %v3590, 1
    %v3592 = vadd.f32 %v3590, %v3591
    %v3593 = vsel %vm2269, %v1946, 0.0
    %v3594 = vrot.slane %v3593, 4
    %v3595 = vadd.f32 %v3593, %v3594
    %v3596 = vrot.slane %v3595, 2
    %v3597 = vadd.f32 %v3595, %v3596
    %v3598 = vrot.slane %v3597, 1
    %v3599 = vadd.f32 %v3597, %v3598
    %v3600 = vsel %vm2269, %v1947, 0.0
    %v3601 = vrot.slane %v3600, 4
    %v3602 = vadd.f32 %v3600, %v3601
    %v3603 = vrot.slane %v3602, 2
    %v3604 = vadd.f32 %v3602, %v3603
    %v3605 = vrot.slane %v3604, 1
    %v3606 = vadd.f32 %v3604, %v3605
    %v3607 = vsel %vm2269, %v1948, 0.0
    %v3608 = vrot.slane %v3607, 4
    %v3609 = vadd.f32 %v3607, %v3608
    %v3610 = vrot.slane %v3609, 2
    %v3611 = vadd.f32 %v3609, %v3610
    %v3612 = vrot.slane %v3611, 1
    %v3613 = vadd.f32 %v3611, %v3612
    %v3614 = vsel %vm2269, %v1949, 0.0
    %v3615 = vrot.slane %v3614, 4
    %v3616 = vadd.f32 %v3614, %v3615
    %v3617 = vrot.slane %v3616, 2
    %v3618 = vadd.f32 %v3616, %v3617
    %v3619 = vrot.slane %v3618, 1
    %v3620 = vadd.f32 %v3618, %v3619
    %v3621 = vsel %vm2269, %v1950, 0.0
    %v3622 = vrot.slane %v3621, 4
    %v3623 = vadd.f32 %v3621, %v3622
    %v3624 = vrot.slane %v3623, 2
    %v3625 = vadd.f32 %v3623, %v3624
    %v3626 = vrot.slane %v3625, 1
    %v3627 = vadd.f32 %v3625, %v3626
    %v3628 = vsel %vm2269, %v1951, 0.0
    %v3629 = vrot.slane %v3628, 4
    %v3630 = vadd.f32 %v3628, %v3629
    %v3631 = vrot.slane %v3630, 2
    %v3632 = vadd.f32 %v3630, %v3631
    %v3633 = vrot.slane %v3632, 1
    %v3634 = vadd.f32 %v3632, %v3633
    %v3635 = vsel %vm2269, %v1952, 0.0
    %v3636 = vrot.slane %v3635, 4
    %v3637 = vadd.f32 %v3635, %v3636
    %v3638 = vrot.slane %v3637, 2
    %v3639 = vadd.f32 %v3637, %v3638
    %v3640 = vrot.slane %v3639, 1
    %v3641 = vadd.f32 %v3639, %v3640
    %v3642 = vsel %vm2269, %v1953, 0.0
    %v3643 = vrot.slane %v3642, 4
    %v3644 = vadd.f32 %v3642, %v3643
    %v3645 = vrot.slane %v3644, 2
    %v3646 = vadd.f32 %v3644, %v3645
    %v3647 = vrot.slane %v3646, 1
    %v3648 = vadd.f32 %v3646, %v3647
    %v3649 = vsel %vm2269, %v1954, 0.0
    %v3650 = vrot.slane %v3649, 4
    %v3651 = vadd.f32 %v3649, %v3650
    %v3652 = vrot.slane %v3651, 2
    %v3653 = vadd.f32 %v3651, %v3652
    %v3654 = vrot.slane %v3653, 1
    %v3655 = vadd.f32 %v3653, %v3654
    %v3656 = vsel %vm2269, %v1955, 0.0
    %v3657 = vrot.slane %v3656, 4
    %v3658 = vadd.f32 %v3656, %v3657
    %v3659 = vrot.slane %v3658, 2
    %v3660 = vadd.f32 %v3658, %v3659
    %v3661 = vrot.slane %v3660, 1
    %v3662 = vadd.f32 %v3660, %v3661
    %v3663 = vsel %vm2269, %v1956, 0.0
    %v3664 = vrot.slane %v3663, 4
    %v3665 = vadd.f32 %v3663, %v3664
    %v3666 = vrot.slane %v3665, 2
    %v3667 = vadd.f32 %v3665, %v3666
    %v3668 = vrot.slane %v3667, 1
    %v3669 = vadd.f32 %v3667, %v3668
    %v3670 = vsel %vm2269, %v1957, 0.0
    %v3671 = vrot.slane %v3670, 4
    %v3672 = vadd.f32 %v3670, %v3671
    %v3673 = vrot.slane %v3672, 2
    %v3674 = vadd.f32 %v3672, %v3673
    %v3675 = vrot.slane %v3674, 1
    %v3676 = vadd.f32 %v3674, %v3675
    %v3677 = vsel %vm2269, %v1958, 0.0
    %v3678 = vrot.slane %v3677, 4
    %v3679 = vadd.f32 %v3677, %v3678
    %v3680 = vrot.slane %v3679, 2
    %v3681 = vadd.f32 %v3679, %v3680
    %v3682 = vrot.slane %v3681, 1
    %v3683 = vadd.f32 %v3681, %v3682
    %v3684 = vsel %vm2269, %v1959, 0.0
    %v3685 = vrot.slane %v3684, 4
    %v3686 = vadd.f32 %v3684, %v3685
    %v3687 = vrot.slane %v3686, 2
    %v3688 = vadd.f32 %v3686, %v3687
    %v3689 = vrot.slane %v3688, 1
    %v3690 = vadd.f32 %v3688, %v3689
    %v3691 = vsel %vm2269, %v1960, 0.0
    %v3692 = vrot.slane %v3691, 4
    %v3693 = vadd.f32 %v3691, %v3692
    %v3694 = vrot.slane %v3693, 2
    %v3695 = vadd.f32 %v3693, %v3694
    %v3696 = vrot.slane %v3695, 1
    %v3697 = vadd.f32 %v3695, %v3696
    %v3698 = vsel %vm2269, %v1961, 0.0
    %v3699 = vrot.slane %v3698, 4
    %v3700 = vadd.f32 %v3698, %v3699
    %v3701 = vrot.slane %v3700, 2
    %v3702 = vadd.f32 %v3700, %v3701
    %v3703 = vrot.slane %v3702, 1
    %v3704 = vadd.f32 %v3702, %v3703
    %v3705 = vsel %vm2269, %v1962, 0.0
    %v3706 = vrot.slane %v3705, 4
    %v3707 = vadd.f32 %v3705, %v3706
    %v3708 = vrot.slane %v3707, 2
    %v3709 = vadd.f32 %v3707, %v3708
    %v3710 = vrot.slane %v3709, 1
    %v3711 = vadd.f32 %v3709, %v3710
    %v3712 = vsel %vm2269, %v1963, 0.0
    %v3713 = vrot.slane %v3712, 4
    %v3714 = vadd.f32 %v3712, %v3713
    %v3715 = vrot.slane %v3714, 2
    %v3716 = vadd.f32 %v3714, %v3715
    %v3717 = vrot.slane %v3716, 1
    %v3718 = vadd.f32 %v3716, %v3717
    %v3719 = vsel %vm2269, %v1964, 0.0
    %v3720 = vrot.slane %v3719, 4
    %v3721 = vadd.f32 %v3719, %v3720
    %v3722 = vrot.slane %v3721, 2
    %v3723 = vadd.f32 %v3721, %v3722
    %v3724 = vrot.slane %v3723, 1
    %v3725 = vadd.f32 %v3723, %v3724
    %v3726 = vsel %vm2269, %v1965, 0.0
    %v3727 = vrot.slane %v3726, 4
    %v3728 = vadd.f32 %v3726, %v3727
    %v3729 = vrot.slane %v3728, 2
    %v3730 = vadd.f32 %v3728, %v3729
    %v3731 = vrot.slane %v3730, 1
    %v3732 = vadd.f32 %v3730, %v3731
    %v3733 = vsel %vm2269, %v1966, 0.0
    %v3734 = vrot.slane %v3733, 4
    %v3735 = vadd.f32 %v3733, %v3734
    %v3736 = vrot.slane %v3735, 2
    %v3737 = vadd.f32 %v3735, %v3736
    %v3738 = vrot.slane %v3737, 1
    %v3739 = vadd.f32 %v3737, %v3738
    %v3740 = vsel %vm2269, %v1967, 0.0
    %v3741 = vrot.slane %v3740, 4
    %v3742 = vadd.f32 %v3740, %v3741
    %v3743 = vrot.slane %v3742, 2
    %v3744 = vadd.f32 %v3742, %v3743
    %v3745 = vrot.slane %v3744, 1
    %v3746 = vadd.f32 %v3744, %v3745
    %v3747 = vsel %vm2269, %v1968, 0.0
    %v3748 = vrot.slane %v3747, 4
    %v3749 = vadd.f32 %v3747, %v3748
    %v3750 = vrot.slane %v3749, 2
    %v3751 = vadd.f32 %v3749, %v3750
    %v3752 = vrot.slane %v3751, 1
    %v3753 = vadd.f32 %v3751, %v3752
    %v3754 = vsel %vm2269, %v1969, 0.0
    %v3755 = vrot.slane %v3754, 4
    %v3756 = vadd.f32 %v3754, %v3755
    %v3757 = vrot.slane %v3756, 2
    %v3758 = vadd.f32 %v3756, %v3757
    %v3759 = vrot.slane %v3758, 1
    %v3760 = vadd.f32 %v3758, %v3759
    %v3761 = vsel %vm2269, %v1970, 0.0
    %v3762 = vrot.slane %v3761, 4
    %v3763 = vadd.f32 %v3761, %v3762
    %v3764 = vrot.slane %v3763, 2
    %v3765 = vadd.f32 %v3763, %v3764
    %v3766 = vrot.slane %v3765, 1
    %v3767 = vadd.f32 %v3765, %v3766
    %v3768 = vsel %vm2269, %v1971, 0.0
    %v3769 = vrot.slane %v3768, 4
    %v3770 = vadd.f32 %v3768, %v3769
    %v3771 = vrot.slane %v3770, 2
    %v3772 = vadd.f32 %v3770, %v3771
    %v3773 = vrot.slane %v3772, 1
    %v3774 = vadd.f32 %v3772, %v3773
    %v3775 = vsel %vm2269, %v1972, 0.0
    %v3776 = vrot.slane %v3775, 4
    %v3777 = vadd.f32 %v3775, %v3776
    %v3778 = vrot.slane %v3777, 2
    %v3779 = vadd.f32 %v3777, %v3778
    %v3780 = vrot.slane %v3779, 1
    %v3781 = vadd.f32 %v3779, %v3780
    %v3782 = vsel %vm2269, %v1973, 0.0
    %v3783 = vrot.slane %v3782, 4
    %v3784 = vadd.f32 %v3782, %v3783
    %v3785 = vrot.slane %v3784, 2
    %v3786 = vadd.f32 %v3784, %v3785
    %v3787 = vrot.slane %v3786, 1
    %v3788 = vadd.f32 %v3786, %v3787
    %v3789 = vsel %vm2269, %v1974, 0.0
    %v3790 = vrot.slane %v3789, 4
    %v3791 = vadd.f32 %v3789, %v3790
    %v3792 = vrot.slane %v3791, 2
    %v3793 = vadd.f32 %v3791, %v3792
    %v3794 = vrot.slane %v3793, 1
    %v3795 = vadd.f32 %v3793, %v3794
    %v3796 = vsel %vm2269, %v1975, 0.0
    %v3797 = vrot.slane %v3796, 4
    %v3798 = vadd.f32 %v3796, %v3797
    %v3799 = vrot.slane %v3798, 2
    %v3800 = vadd.f32 %v3798, %v3799
    %v3801 = vrot.slane %v3800, 1
    %v3802 = vadd.f32 %v3800, %v3801
    %v3803 = vsel %vm2269, %v1976, 0.0
    %v3804 = vrot.slane %v3803, 4
    %v3805 = vadd.f32 %v3803, %v3804
    %v3806 = vrot.slane %v3805, 2
    %v3807 = vadd.f32 %v3805, %v3806
    %v3808 = vrot.slane %v3807, 1
    %v3809 = vadd.f32 %v3807, %v3808
    %v3810 = vsel %vm2269, %v1977, 0.0
    %v3811 = vrot.slane %v3810, 4
    %v3812 = vadd.f32 %v3810, %v3811
    %v3813 = vrot.slane %v3812, 2
    %v3814 = vadd.f32 %v3812, %v3813
    %v3815 = vrot.slane %v3814, 1
    %v3816 = vadd.f32 %v3814, %v3815
    %v3817 = vsel %vm2269, %v1978, 0.0
    %v3818 = vrot.slane %v3817, 4
    %v3819 = vadd.f32 %v3817, %v3818
    %v3820 = vrot.slane %v3819, 2
    %v3821 = vadd.f32 %v3819, %v3820
    %v3822 = vrot.slane %v3821, 1
    %v3823 = vadd.f32 %v3821, %v3822
    %v3824 = vsel %vm2269, %v1979, 0.0
    %v3825 = vrot.slane %v3824, 4
    %v3826 = vadd.f32 %v3824, %v3825
    %v3827 = vrot.slane %v3826, 2
    %v3828 = vadd.f32 %v3826, %v3827
    %v3829 = vrot.slane %v3828, 1
    %v3830 = vadd.f32 %v3828, %v3829
    %v3831 = vsel %vm2269, %v1980, 0.0
    %v3832 = vrot.slane %v3831, 4
    %v3833 = vadd.f32 %v3831, %v3832
    %v3834 = vrot.slane %v3833, 2
    %v3835 = vadd.f32 %v3833, %v3834
    %v3836 = vrot.slane %v3835, 1
    %v3837 = vadd.f32 %v3835, %v3836
    %v3838 = vsel %vm2269, %v1981, 0.0
    %v3839 = vrot.slane %v3838, 4
    %v3840 = vadd.f32 %v3838, %v3839
    %v3841 = vrot.slane %v3840, 2
    %v3842 = vadd.f32 %v3840, %v3841
    %v3843 = vrot.slane %v3842, 1
    %v3844 = vadd.f32 %v3842, %v3843
    %v3845 = vsel %vm2269, %v1982, 0.0
    %v3846 = vrot.slane %v3845, 4
    %v3847 = vadd.f32 %v3845, %v3846
    %v3848 = vrot.slane %v3847, 2
    %v3849 = vadd.f32 %v3847, %v3848
    %v3850 = vrot.slane %v3849, 1
    %v3851 = vadd.f32 %v3849, %v3850
    %v3852 = vsel %vm2269, %v1983, 0.0
    %v3853 = vrot.slane %v3852, 4
    %v3854 = vadd.f32 %v3852, %v3853
    %v3855 = vrot.slane %v3854, 2
    %v3856 = vadd.f32 %v3854, %v3855
    %v3857 = vrot.slane %v3856, 1
    %v3858 = vadd.f32 %v3856, %v3857
    %v3859 = vsel %vm2269, %v1984, 0.0
    %v3860 = vrot.slane %v3859, 4
    %v3861 = vadd.f32 %v3859, %v3860
    %v3862 = vrot.slane %v3861, 2
    %v3863 = vadd.f32 %v3861, %v3862
    %v3864 = vrot.slane %v3863, 1
    %v3865 = vadd.f32 %v3863, %v3864
    %v3866 = vsel %vm2269, %v1985, 0.0
    %v3867 = vrot.slane %v3866, 4
    %v3868 = vadd.f32 %v3866, %v3867
    %v3869 = vrot.slane %v3868, 2
    %v3870 = vadd.f32 %v3868, %v3869
    %v3871 = vrot.slane %v3870, 1
    %v3872 = vadd.f32 %v3870, %v3871
    %v3873 = vsel %vm2269, %v1986, 0.0
    %v3874 = vrot.slane %v3873, 4
    %v3875 = vadd.f32 %v3873, %v3874
    %v3876 = vrot.slane %v3875, 2
    %v3877 = vadd.f32 %v3875, %v3876
    %v3878 = vrot.slane %v3877, 1
    %v3879 = vadd.f32 %v3877, %v3878
    %v3880 = vsel %vm2269, %v1987, 0.0
    %v3881 = vrot.slane %v3880, 4
    %v3882 = vadd.f32 %v3880, %v3881
    %v3883 = vrot.slane %v3882, 2
    %v3884 = vadd.f32 %v3882, %v3883
    %v3885 = vrot.slane %v3884, 1
    %v3886 = vadd.f32 %v3884, %v3885
    %v3887 = vsel %vm2269, %v1988, 0.0
    %v3888 = vrot.slane %v3887, 4
    %v3889 = vadd.f32 %v3887, %v3888
    %v3890 = vrot.slane %v3889, 2
    %v3891 = vadd.f32 %v3889, %v3890
    %v3892 = vrot.slane %v3891, 1
    %v3893 = vadd.f32 %v3891, %v3892
    %v3894 = vsel %vm2269, %v1989, 0.0
    %v3895 = vrot.slane %v3894, 4
    %v3896 = vadd.f32 %v3894, %v3895
    %v3897 = vrot.slane %v3896, 2
    %v3898 = vadd.f32 %v3896, %v3897
    %v3899 = vrot.slane %v3898, 1
    %v3900 = vadd.f32 %v3898, %v3899
    %v3901 = vsel %vm2269, %v1990, 0.0
    %v3902 = vrot.slane %v3901, 4
    %v3903 = vadd.f32 %v3901, %v3902
    %v3904 = vrot.slane %v3903, 2
    %v3905 = vadd.f32 %v3903, %v3904
    %v3906 = vrot.slane %v3905, 1
    %v3907 = vadd.f32 %v3905, %v3906
    %v3908 = vsel %vm2269, %v1991, 0.0
    %v3909 = vrot.slane %v3908, 4
    %v3910 = vadd.f32 %v3908, %v3909
    %v3911 = vrot.slane %v3910, 2
    %v3912 = vadd.f32 %v3910, %v3911
    %v3913 = vrot.slane %v3912, 1
    %v3914 = vadd.f32 %v3912, %v3913
    %v3915 = vsel %vm2269, %v1992, 0.0
    %v3916 = vrot.slane %v3915, 4
    %v3917 = vadd.f32 %v3915, %v3916
    %v3918 = vrot.slane %v3917, 2
    %v3919 = vadd.f32 %v3917, %v3918
    %v3920 = vrot.slane %v3919, 1
    %v3921 = vadd.f32 %v3919, %v3920
    %v3922 = vsel %vm2269, %v1993, 0.0
    %v3923 = vrot.slane %v3922, 4
    %v3924 = vadd.f32 %v3922, %v3923
    %v3925 = vrot.slane %v3924, 2
    %v3926 = vadd.f32 %v3924, %v3925
    %v3927 = vrot.slane %v3926, 1
    %v3928 = vadd.f32 %v3926, %v3927
    %v3929 = vsel %vm2269, %v1994, 0.0
    %v3930 = vrot.slane %v3929, 4
    %v3931 = vadd.f32 %v3929, %v3930
    %v3932 = vrot.slane %v3931, 2
    %v3933 = vadd.f32 %v3931, %v3932
    %v3934 = vrot.slane %v3933, 1
    %v3935 = vadd.f32 %v3933, %v3934
    %v3936 = vsel %vm2269, %v1995, 0.0
    %v3937 = vrot.slane %v3936, 4
    %v3938 = vadd.f32 %v3936, %v3937
    %v3939 = vrot.slane %v3938, 2
    %v3940 = vadd.f32 %v3938, %v3939
    %v3941 = vrot.slane %v3940, 1
    %v3942 = vadd.f32 %v3940, %v3941
    %v3943 = vsel %vm2269, %v1996, 0.0
    %v3944 = vrot.slane %v3943, 4
    %v3945 = vadd.f32 %v3943, %v3944
    %v3946 = vrot.slane %v3945, 2
    %v3947 = vadd.f32 %v3945, %v3946
    %v3948 = vrot.slane %v3947, 1
    %v3949 = vadd.f32 %v3947, %v3948
    %v3950 = vsel %vm2269, %v1997, 0.0
    %v3951 = vrot.slane %v3950, 4
    %v3952 = vadd.f32 %v3950, %v3951
    %v3953 = vrot.slane %v3952, 2
    %v3954 = vadd.f32 %v3952, %v3953
    %v3955 = vrot.slane %v3954, 1
    %v3956 = vadd.f32 %v3954, %v3955
    %v3957 = vsel %vm2269, %v1998, 0.0
    %v3958 = vrot.slane %v3957, 4
    %v3959 = vadd.f32 %v3957, %v3958
    %v3960 = vrot.slane %v3959, 2
    %v3961 = vadd.f32 %v3959, %v3960
    %v3962 = vrot.slane %v3961, 1
    %v3963 = vadd.f32 %v3961, %v3962
    %v3964 = vsel %vm2269, %v1999, 0.0
    %v3965 = vrot.slane %v3964, 4
    %v3966 = vadd.f32 %v3964, %v3965
    %v3967 = vrot.slane %v3966, 2
    %v3968 = vadd.f32 %v3966, %v3967
    %v3969 = vrot.slane %v3968, 1
    %v3970 = vadd.f32 %v3968, %v3969
    %v3971 = vsel %vm2269, %v2000, 0.0
    %v3972 = vrot.slane %v3971, 4
    %v3973 = vadd.f32 %v3971, %v3972
    %v3974 = vrot.slane %v3973, 2
    %v3975 = vadd.f32 %v3973, %v3974
    %v3976 = vrot.slane %v3975, 1
    %v3977 = vadd.f32 %v3975, %v3976
    %v3978 = vsel %vm2269, %v2001, 0.0
    %v3979 = vrot.slane %v3978, 4
    %v3980 = vadd.f32 %v3978, %v3979
    %v3981 = vrot.slane %v3980, 2
    %v3982 = vadd.f32 %v3980, %v3981
    %v3983 = vrot.slane %v3982, 1
    %v3984 = vadd.f32 %v3982, %v3983
    %v3985 = vsel %vm2269, %v2002, 0.0
    %v3986 = vrot.slane %v3985, 4
    %v3987 = vadd.f32 %v3985, %v3986
    %v3988 = vrot.slane %v3987, 2
    %v3989 = vadd.f32 %v3987, %v3988
    %v3990 = vrot.slane %v3989, 1
    %v3991 = vadd.f32 %v3989, %v3990
    %v3992 = vsel %vm2269, %v2003, 0.0
    %v3993 = vrot.slane %v3992, 4
    %v3994 = vadd.f32 %v3992, %v3993
    %v3995 = vrot.slane %v3994, 2
    %v3996 = vadd.f32 %v3994, %v3995
    %v3997 = vrot.slane %v3996, 1
    %v3998 = vadd.f32 %v3996, %v3997
    %v3999 = vsel %vm2269, %v2004, 0.0
    %v4000 = vrot.slane %v3999, 4
    %v4001 = vadd.f32 %v3999, %v4000
    %v4002 = vrot.slane %v4001, 2
    %v4003 = vadd.f32 %v4001, %v4002
    %v4004 = vrot.slane %v4003, 1
    %v4005 = vadd.f32 %v4003, %v4004
    %v4006 = vsel %vm2269, %v2005, 0.0
    %v4007 = vrot.slane %v4006, 4
    %v4008 = vadd.f32 %v4006, %v4007
    %v4009 = vrot.slane %v4008, 2
    %v4010 = vadd.f32 %v4008, %v4009
    %v4011 = vrot.slane %v4010, 1
    %v4012 = vadd.f32 %v4010, %v4011
    %v4013 = vsel %vm2269, %v2006, 0.0
    %v4014 = vrot.slane %v4013, 4
    %v4015 = vadd.f32 %v4013, %v4014
    %v4016 = vrot.slane %v4015, 2
    %v4017 = vadd.f32 %v4015, %v4016
    %v4018 = vrot.slane %v4017, 1
    %v4019 = vadd.f32 %v4017, %v4018
    %v4020 = vsel %vm2269, %v2007, 0.0
    %v4021 = vrot.slane %v4020, 4
    %v4022 = vadd.f32 %v4020, %v4021
    %v4023 = vrot.slane %v4022, 2
    %v4024 = vadd.f32 %v4022, %v4023
    %v4025 = vrot.slane %v4024, 1
    %v4026 = vadd.f32 %v4024, %v4025
    %v4027 = vsel %vm2269, %v2008, 0.0
    %v4028 = vrot.slane %v4027, 4
    %v4029 = vadd.f32 %v4027, %v4028
    %v4030 = vrot.slane %v4029, 2
    %v4031 = vadd.f32 %v4029, %v4030
    %v4032 = vrot.slane %v4031, 1
    %v4033 = vadd.f32 %v4031, %v4032
    %v4034 = vsel %vm2269, %v2009, 0.0
    %v4035 = vrot.slane %v4034, 4
    %v4036 = vadd.f32 %v4034, %v4035
    %v4037 = vrot.slane %v4036, 2
    %v4038 = vadd.f32 %v4036, %v4037
    %v4039 = vrot.slane %v4038, 1
    %v4040 = vadd.f32 %v4038, %v4039
    %v4041 = vsel %vm2269, %v2010, 0.0
    %v4042 = vrot.slane %v4041, 4
    %v4043 = vadd.f32 %v4041, %v4042
    %v4044 = vrot.slane %v4043, 2
    %v4045 = vadd.f32 %v4043, %v4044
    %v4046 = vrot.slane %v4045, 1
    %v4047 = vadd.f32 %v4045, %v4046
    %v4048 = vsel %vm2269, %v2011, 0.0
    %v4049 = vrot.slane %v4048, 4
    %v4050 = vadd.f32 %v4048, %v4049
    %v4051 = vrot.slane %v4050, 2
    %v4052 = vadd.f32 %v4050, %v4051
    %v4053 = vrot.slane %v4052, 1
    %v4054 = vadd.f32 %v4052, %v4053
    %v4055 = vsel %vm2269, %v2012, 0.0
    %v4056 = vrot.slane %v4055, 4
    %v4057 = vadd.f32 %v4055, %v4056
    %v4058 = vrot.slane %v4057, 2
    %v4059 = vadd.f32 %v4057, %v4058
    %v4060 = vrot.slane %v4059, 1
    %v4061 = vadd.f32 %v4059, %v4060
    %v4062 = vpack.c.bf16 %v2276, %v2276
    %v4063 = vpack.c.bf16 %v2283, %v2283
    %v4064 = vpack.c.bf16 %v2290, %v2290
    %v4065 = vpack.c.bf16 %v2297, %v2297
    %v4066 = vpack.c.bf16 %v2304, %v2304
    %v4067 = vpack.c.bf16 %v2311, %v2311
    %v4068 = vpack.c.bf16 %v2318, %v2318
    %v4069 = vpack.c.bf16 %v2325, %v2325
    %v4070 = vpack.c.bf16 %v2332, %v2332
    %v4071 = vpack.c.bf16 %v2339, %v2339
    %v4072 = vpack.c.bf16 %v2346, %v2346
    %v4073 = vpack.c.bf16 %v2353, %v2353
    %v4074 = vpack.c.bf16 %v2360, %v2360
    %v4075 = vpack.c.bf16 %v2367, %v2367
    %v4076 = vpack.c.bf16 %v2374, %v2374
    %v4077 = vpack.c.bf16 %v2381, %v2381
    %v4078 = vpack.c.bf16 %v2388, %v2388
    %v4079 = vpack.c.bf16 %v2395, %v2395
    %v4080 = vpack.c.bf16 %v2402, %v2402
    %v4081 = vpack.c.bf16 %v2409, %v2409
    %v4082 = vpack.c.bf16 %v2416, %v2416
    %v4083 = vpack.c.bf16 %v2423, %v2423
    %v4084 = vpack.c.bf16 %v2430, %v2430
    %v4085 = vpack.c.bf16 %v2437, %v2437
    %v4086 = vpack.c.bf16 %v2444, %v2444
    %v4087 = vpack.c.bf16 %v2451, %v2451
    %v4088 = vpack.c.bf16 %v2458, %v2458
    %v4089 = vpack.c.bf16 %v2465, %v2465
    %v4090 = vpack.c.bf16 %v2472, %v2472
    %v4091 = vpack.c.bf16 %v2479, %v2479
    %v4092 = vpack.c.bf16 %v2486, %v2486
    %v4093 = vpack.c.bf16 %v2493, %v2493
    %v4094 = vpack.c.bf16 %v2500, %v2500
    %v4095 = vpack.c.bf16 %v2507, %v2507
    %v4096 = vpack.c.bf16 %v2514, %v2514
    %v4097 = vpack.c.bf16 %v2521, %v2521
    %v4098 = vpack.c.bf16 %v2528, %v2528
    %v4099 = vpack.c.bf16 %v2535, %v2535
    %v4100 = vpack.c.bf16 %v2542, %v2542
    %v4101 = vpack.c.bf16 %v2549, %v2549
    %v4102 = vpack.c.bf16 %v2556, %v2556
    %v4103 = vpack.c.bf16 %v2563, %v2563
    %v4104 = vpack.c.bf16 %v2570, %v2570
    %v4105 = vpack.c.bf16 %v2577, %v2577
    %v4106 = vpack.c.bf16 %v2584, %v2584
    %v4107 = vpack.c.bf16 %v2591, %v2591
    %v4108 = vpack.c.bf16 %v2598, %v2598
    %v4109 = vpack.c.bf16 %v2605, %v2605
    %v4110 = vpack.c.bf16 %v2612, %v2612
    %v4111 = vpack.c.bf16 %v2619, %v2619
    %v4112 = vpack.c.bf16 %v2626, %v2626
    %v4113 = vpack.c.bf16 %v2633, %v2633
    %v4114 = vpack.c.bf16 %v2640, %v2640
    %v4115 = vpack.c.bf16 %v2647, %v2647
    %v4116 = vpack.c.bf16 %v2654, %v2654
    %v4117 = vpack.c.bf16 %v2661, %v2661
    %v4118 = vpack.c.bf16 %v2668, %v2668
    %v4119 = vpack.c.bf16 %v2675, %v2675
    %v4120 = vpack.c.bf16 %v2682, %v2682
    %v4121 = vpack.c.bf16 %v2689, %v2689
    %v4122 = vpack.c.bf16 %v2696, %v2696
    %v4123 = vpack.c.bf16 %v2703, %v2703
    %v4124 = vpack.c.bf16 %v2710, %v2710
    %v4125 = vpack.c.bf16 %v2717, %v2717
    %v4126 = vpack.c.bf16 %v2724, %v2724
    %v4127 = vpack.c.bf16 %v2731, %v2731
    %v4128 = vpack.c.bf16 %v2738, %v2738
    %v4129 = vpack.c.bf16 %v2745, %v2745
    %v4130 = vpack.c.bf16 %v2752, %v2752
    %v4131 = vpack.c.bf16 %v2759, %v2759
    %v4132 = vpack.c.bf16 %v2766, %v2766
    %v4133 = vpack.c.bf16 %v2773, %v2773
    %v4134 = vpack.c.bf16 %v2780, %v2780
    %v4135 = vpack.c.bf16 %v2787, %v2787
    %v4136 = vpack.c.bf16 %v2794, %v2794
    %v4137 = vpack.c.bf16 %v2801, %v2801
    %v4138 = vpack.c.bf16 %v2808, %v2808
    %v4139 = vpack.c.bf16 %v2815, %v2815
    %v4140 = vpack.c.bf16 %v2822, %v2822
    %v4141 = vpack.c.bf16 %v2829, %v2829
    %v4142 = vpack.c.bf16 %v2836, %v2836
    %v4143 = vpack.c.bf16 %v2843, %v2843
    %v4144 = vpack.c.bf16 %v2850, %v2850
    %v4145 = vpack.c.bf16 %v2857, %v2857
    %v4146 = vpack.c.bf16 %v2864, %v2864
    %v4147 = vpack.c.bf16 %v2871, %v2871
    %v4148 = vpack.c.bf16 %v2878, %v2878
    %v4149 = vpack.c.bf16 %v2885, %v2885
    %v4150 = vpack.c.bf16 %v2892, %v2892
    %v4151 = vpack.c.bf16 %v2899, %v2899
    %v4152 = vpack.c.bf16 %v2906, %v2906
    %v4153 = vpack.c.bf16 %v2913, %v2913
    %v4154 = vpack.c.bf16 %v2920, %v2920
    %v4155 = vpack.c.bf16 %v2927, %v2927
    %v4156 = vpack.c.bf16 %v2934, %v2934
    %v4157 = vpack.c.bf16 %v2941, %v2941
    %v4158 = vpack.c.bf16 %v2948, %v2948
    %v4159 = vpack.c.bf16 %v2955, %v2955
    %v4160 = vpack.c.bf16 %v2962, %v2962
    %v4161 = vpack.c.bf16 %v2969, %v2969
    %v4162 = vpack.c.bf16 %v2976, %v2976
    %v4163 = vpack.c.bf16 %v2983, %v2983
    %v4164 = vpack.c.bf16 %v2990, %v2990
    %v4165 = vpack.c.bf16 %v2997, %v2997
    %v4166 = vpack.c.bf16 %v3004, %v3004
    %v4167 = vpack.c.bf16 %v3011, %v3011
    %v4168 = vpack.c.bf16 %v3018, %v3018
    %v4169 = vpack.c.bf16 %v3025, %v3025
    %v4170 = vpack.c.bf16 %v3032, %v3032
    %v4171 = vpack.c.bf16 %v3039, %v3039
    %v4172 = vpack.c.bf16 %v3046, %v3046
    %v4173 = vpack.c.bf16 %v3053, %v3053
    %v4174 = vpack.c.bf16 %v3060, %v3060
    %v4175 = vpack.c.bf16 %v3067, %v3067
    %v4176 = vpack.c.bf16 %v3074, %v3074
    %v4177 = vpack.c.bf16 %v3081, %v3081
    %v4178 = vpack.c.bf16 %v3088, %v3088
    %v4179 = vpack.c.bf16 %v3095, %v3095
    %v4180 = vpack.c.bf16 %v3102, %v3102
    %v4181 = vpack.c.bf16 %v3109, %v3109
    %v4182 = vpack.c.bf16 %v3116, %v3116
    %v4183 = vpack.c.bf16 %v3123, %v3123
    %v4184 = vpack.c.bf16 %v3130, %v3130
    %v4185 = vpack.c.bf16 %v3137, %v3137
    %v4186 = vpack.c.bf16 %v3144, %v3144
    %v4187 = vpack.c.bf16 %v3151, %v3151
    %v4188 = vpack.c.bf16 %v3158, %v3158
    %v4189 = vpack.c.bf16 %v3165, %v3165
    %v4190 = vpack.c.bf16 %v3172, %v3172
    %v4191 = vpack.c.bf16 %v3179, %v3179
    %v4192 = vpack.c.bf16 %v3186, %v3186
    %v4193 = vpack.c.bf16 %v3193, %v3193
    %v4194 = vpack.c.bf16 %v3200, %v3200
    %v4195 = vpack.c.bf16 %v3207, %v3207
    %v4196 = vpack.c.bf16 %v3214, %v3214
    %v4197 = vpack.c.bf16 %v3221, %v3221
    %v4198 = vpack.c.bf16 %v3228, %v3228
    %v4199 = vpack.c.bf16 %v3235, %v3235
    %v4200 = vpack.c.bf16 %v3242, %v3242
    %v4201 = vpack.c.bf16 %v3249, %v3249
    %v4202 = vpack.c.bf16 %v3256, %v3256
    %v4203 = vpack.c.bf16 %v3263, %v3263
    %v4204 = vpack.c.bf16 %v3270, %v3270
    %v4205 = vpack.c.bf16 %v3277, %v3277
    %v4206 = vpack.c.bf16 %v3284, %v3284
    %v4207 = vpack.c.bf16 %v3291, %v3291
    %v4208 = vpack.c.bf16 %v3298, %v3298
    %v4209 = vpack.c.bf16 %v3305, %v3305
    %v4210 = vpack.c.bf16 %v3312, %v3312
    %v4211 = vpack.c.bf16 %v3319, %v3319
    %v4212 = vpack.c.bf16 %v3326, %v3326
    %v4213 = vpack.c.bf16 %v3333, %v3333
    %v4214 = vpack.c.bf16 %v3340, %v3340
    %v4215 = vpack.c.bf16 %v3347, %v3347
    %v4216 = vpack.c.bf16 %v3354, %v3354
    %v4217 = vpack.c.bf16 %v3361, %v3361
    %v4218 = vpack.c.bf16 %v3368, %v3368
    %v4219 = vpack.c.bf16 %v3375, %v3375
    %v4220 = vpack.c.bf16 %v3382, %v3382
    %v4221 = vpack.c.bf16 %v3389, %v3389
    %v4222 = vpack.c.bf16 %v3396, %v3396
    %v4223 = vpack.c.bf16 %v3403, %v3403
    %v4224 = vpack.c.bf16 %v3410, %v3410
    %v4225 = vpack.c.bf16 %v3417, %v3417
    %v4226 = vpack.c.bf16 %v3424, %v3424
    %v4227 = vpack.c.bf16 %v3431, %v3431
    %v4228 = vpack.c.bf16 %v3438, %v3438
    %v4229 = vpack.c.bf16 %v3445, %v3445
    %v4230 = vpack.c.bf16 %v3452, %v3452
    %v4231 = vpack.c.bf16 %v3459, %v3459
    %v4232 = vpack.c.bf16 %v3466, %v3466
    %v4233 = vpack.c.bf16 %v3473, %v3473
    %v4234 = vpack.c.bf16 %v3480, %v3480
    %v4235 = vpack.c.bf16 %v3487, %v3487
    %v4236 = vpack.c.bf16 %v3494, %v3494
    %v4237 = vpack.c.bf16 %v3501, %v3501
    %v4238 = vpack.c.bf16 %v3508, %v3508
    %v4239 = vpack.c.bf16 %v3515, %v3515
    %v4240 = vpack.c.bf16 %v3522, %v3522
    %v4241 = vpack.c.bf16 %v3529, %v3529
    %v4242 = vpack.c.bf16 %v3536, %v3536
    %v4243 = vpack.c.bf16 %v3543, %v3543
    %v4244 = vpack.c.bf16 %v3550, %v3550
    %v4245 = vpack.c.bf16 %v3557, %v3557
    %v4246 = vpack.c.bf16 %v3564, %v3564
    %v4247 = vpack.c.bf16 %v3571, %v3571
    %v4248 = vpack.c.bf16 %v3578, %v3578
    %v4249 = vpack.c.bf16 %v3585, %v3585
    %v4250 = vpack.c.bf16 %v3592, %v3592
    %v4251 = vpack.c.bf16 %v3599, %v3599
    %v4252 = vpack.c.bf16 %v3606, %v3606
    %v4253 = vpack.c.bf16 %v3613, %v3613
    %v4254 = vpack.c.bf16 %v3620, %v3620
    %v4255 = vpack.c.bf16 %v3627, %v3627
    %v4256 = vpack.c.bf16 %v3634, %v3634
    %v4257 = vpack.c.bf16 %v3641, %v3641
    %v4258 = vpack.c.bf16 %v3648, %v3648
    %v4259 = vpack.c.bf16 %v3655, %v3655
    %v4260 = vpack.c.bf16 %v3662, %v3662
    %v4261 = vpack.c.bf16 %v3669, %v3669
    %v4262 = vpack.c.bf16 %v3676, %v3676
    %v4263 = vpack.c.bf16 %v3683, %v3683
    %v4264 = vpack.c.bf16 %v3690, %v3690
    %v4265 = vpack.c.bf16 %v3697, %v3697
    %v4266 = vpack.c.bf16 %v3704, %v3704
    %v4267 = vpack.c.bf16 %v3711, %v3711
    %v4268 = vpack.c.bf16 %v3718, %v3718
    %v4269 = vpack.c.bf16 %v3725, %v3725
    %v4270 = vpack.c.bf16 %v3732, %v3732
    %v4271 = vpack.c.bf16 %v3739, %v3739
    %v4272 = vpack.c.bf16 %v3746, %v3746
    %v4273 = vpack.c.bf16 %v3753, %v3753
    %v4274 = vpack.c.bf16 %v3760, %v3760
    %v4275 = vpack.c.bf16 %v3767, %v3767
    %v4276 = vpack.c.bf16 %v3774, %v3774
    %v4277 = vpack.c.bf16 %v3781, %v3781
    %v4278 = vpack.c.bf16 %v3788, %v3788
    %v4279 = vpack.c.bf16 %v3795, %v3795
    %v4280 = vpack.c.bf16 %v3802, %v3802
    %v4281 = vpack.c.bf16 %v3809, %v3809
    %v4282 = vpack.c.bf16 %v3816, %v3816
    %v4283 = vpack.c.bf16 %v3823, %v3823
    %v4284 = vpack.c.bf16 %v3830, %v3830
    %v4285 = vpack.c.bf16 %v3837, %v3837
    %v4286 = vpack.c.bf16 %v3844, %v3844
    %v4287 = vpack.c.bf16 %v3851, %v3851
    %v4288 = vpack.c.bf16 %v3858, %v3858
    %v4289 = vpack.c.bf16 %v3865, %v3865
    %v4290 = vpack.c.bf16 %v3872, %v3872
    %v4291 = vpack.c.bf16 %v3879, %v3879
    %v4292 = vpack.c.bf16 %v3886, %v3886
    %v4293 = vpack.c.bf16 %v3893, %v3893
    %v4294 = vpack.c.bf16 %v3900, %v3900
    %v4295 = vpack.c.bf16 %v3907, %v3907
    %v4296 = vpack.c.bf16 %v3914, %v3914
    %v4297 = vpack.c.bf16 %v3921, %v3921
    %v4298 = vpack.c.bf16 %v3928, %v3928
    %v4299 = vpack.c.bf16 %v3935, %v3935
    %v4300 = vpack.c.bf16 %v3942, %v3942
    %v4301 = vpack.c.bf16 %v3949, %v3949
    %v4302 = vpack.c.bf16 %v3956, %v3956
    %v4303 = vpack.c.bf16 %v3963, %v3963
    %v4304 = vpack.c.bf16 %v3970, %v3970
    %v4305 = vpack.c.bf16 %v3977, %v3977
    %v4306 = vpack.c.bf16 %v3984, %v3984
    %v4307 = vpack.c.bf16 %v3991, %v3991
    %v4308 = vpack.c.bf16 %v3998, %v3998
    %v4309 = vpack.c.bf16 %v4005, %v4005
    %v4310 = vpack.c.bf16 %v4012, %v4012
    %v4311 = vpack.c.bf16 %v4019, %v4019
    %v4312 = vpack.c.bf16 %v4026, %v4026
    %v4313 = vpack.c.bf16 %v4033, %v4033
    %v4314 = vpack.c.bf16 %v4040, %v4040
    %v4315 = vpack.c.bf16 %v4047, %v4047
    %v4316 = vpack.c.bf16 %v4054, %v4054
    %v4317 = vpack.c.bf16 %v4061, %v4061
    %v4318 = vld [vmem:[#allocation2] sm:$0xf]
    %v4319 = vld [vmem:[#allocation2 + $0x4] sm:$0xf]
    %v4320 = vld [vmem:[#allocation2 + $0x8] sm:$0xf]
    %v4321 = vld [vmem:[#allocation2 + $0xc] sm:$0xf]
    %v4322 = vld [vmem:[#allocation2 + $0x10] sm:$0xf]
    %v4323 = vld [vmem:[#allocation2 + $0x14] sm:$0xf]
    %v4324 = vld [vmem:[#allocation2 + $0x18] sm:$0xf]
    %v4325 = vld [vmem:[#allocation2 + $0x1c] sm:$0xf]
    %v4326 = vld [vmem:[#allocation2 + $0x20] sm:$0xf]
    %v4327 = vld [vmem:[#allocation2 + $0x24] sm:$0xf]
    %v4328 = vld [vmem:[#allocation2 + $0x28] sm:$0xf]
    %v4329 = vld [vmem:[#allocation2 + $0x2c] sm:$0xf]
    %v4330 = vld [vmem:[#allocation2 + $0x30] sm:$0xf]
    %v4331 = vld [vmem:[#allocation2 + $0x34] sm:$0xf]
    %v4332 = vld [vmem:[#allocation2 + $0x38] sm:$0xf]
    %v4333 = vld [vmem:[#allocation2 + $0x3c] sm:$0xf]
    %v4334 = vld [vmem:[#allocation2 + $0x40] sm:$0xf]
    %v4335 = vld [vmem:[#allocation2 + $0x44] sm:$0xf]
    %v4336 = vld [vmem:[#allocation2 + $0x48] sm:$0xf]
    %v4337 = vld [vmem:[#allocation2 + $0x4c] sm:$0xf]
    %v4338 = vld [vmem:[#allocation2 + $0x50] sm:$0xf]
    %v4339 = vld [vmem:[#allocation2 + $0x54] sm:$0xf]
    %v4340 = vld [vmem:[#allocation2 + $0x58] sm:$0xf]
    %v4341 = vld [vmem:[#allocation2 + $0x5c] sm:$0xf]
    %v4342 = vld [vmem:[#allocation2 + $0x60] sm:$0xf]
    %v4343 = vld [vmem:[#allocation2 + $0x64] sm:$0xf]
    %v4344 = vld [vmem:[#allocation2 + $0x68] sm:$0xf]
    %v4345 = vld [vmem:[#allocation2 + $0x6c] sm:$0xf]
    %v4346 = vld [vmem:[#allocation2 + $0x70] sm:$0xf]
    %v4347 = vld [vmem:[#allocation2 + $0x74] sm:$0xf]
    %v4348 = vld [vmem:[#allocation2 + $0x78] sm:$0xf]
    %v4349 = vld [vmem:[#allocation2 + $0x7c] sm:$0xf]
    %v4350 = vld [vmem:[#allocation2 + $0x80] sm:$0xf]
    %v4351 = vld [vmem:[#allocation2 + $0x84] sm:$0xf]
    %v4352 = vld [vmem:[#allocation2 + $0x88] sm:$0xf]
    %v4353 = vld [vmem:[#allocation2 + $0x8c] sm:$0xf]
    %v4354 = vld [vmem:[#allocation2 + $0x90] sm:$0xf]
    %v4355 = vld [vmem:[#allocation2 + $0x94] sm:$0xf]
    %v4356 = vld [vmem:[#allocation2 + $0x98] sm:$0xf]
    %v4357 = vld [vmem:[#allocation2 + $0x9c] sm:$0xf]
    %v4358 = vld [vmem:[#allocation2 + $0xa0] sm:$0xf]
    %v4359 = vld [vmem:[#allocation2 + $0xa4] sm:$0xf]
    %v4360 = vld [vmem:[#allocation2 + $0xa8] sm:$0xf]
    %v4361 = vld [vmem:[#allocation2 + $0xac] sm:$0xf]
    %v4362 = vld [vmem:[#allocation2 + $0xb0] sm:$0xf]
    %v4363 = vld [vmem:[#allocation2 + $0xb4] sm:$0xf]
    %v4364 = vld [vmem:[#allocation2 + $0xb8] sm:$0xf]
    %v4365 = vld [vmem:[#allocation2 + $0xbc] sm:$0xf]
    %v4366 = vld [vmem:[#allocation2 + $0xc0] sm:$0xf]
    %v4367 = vld [vmem:[#allocation2 + $0xc4] sm:$0xf]
    %v4368 = vld [vmem:[#allocation2 + $0xc8] sm:$0xf]
    %v4369 = vld [vmem:[#allocation2 + $0xcc] sm:$0xf]
    %v4370 = vld [vmem:[#allocation2 + $0xd0] sm:$0xf]
    %v4371 = vld [vmem:[#allocation2 + $0xd4] sm:$0xf]
    %v4372 = vld [vmem:[#allocation2 + $0xd8] sm:$0xf]
    %v4373 = vld [vmem:[#allocation2 + $0xdc] sm:$0xf]
    %v4374 = vld [vmem:[#allocation2 + $0xe0] sm:$0xf]
    %v4375 = vld [vmem:[#allocation2 + $0xe4] sm:$0xf]
    %v4376 = vld [vmem:[#allocation2 + $0xe8] sm:$0xf]
    %v4377 = vld [vmem:[#allocation2 + $0xec] sm:$0xf]
    %v4378 = vld [vmem:[#allocation2 + $0xf0] sm:$0xf]
    %v4379 = vld [vmem:[#allocation2 + $0xf4] sm:$0xf]
    %v4380 = vld [vmem:[#allocation2 + $0xf8] sm:$0xf]
    %v4381 = vld [vmem:[#allocation2 + $0xfc] sm:$0xf]
    %v4382 = vld [vmem:[#allocation2 + $0x100] sm:$0xf]
    %v4383 = vld [vmem:[#allocation2 + $0x104] sm:$0xf]
    %v4384 = vld [vmem:[#allocation2 + $0x108] sm:$0xf]
    %v4385 = vld [vmem:[#allocation2 + $0x10c] sm:$0xf]
    %v4386 = vld [vmem:[#allocation2 + $0x110] sm:$0xf]
    %v4387 = vld [vmem:[#allocation2 + $0x114] sm:$0xf]
    %v4388 = vld [vmem:[#allocation2 + $0x118] sm:$0xf]
    %v4389 = vld [vmem:[#allocation2 + $0x11c] sm:$0xf]
    %v4390 = vld [vmem:[#allocation2 + $0x120] sm:$0xf]
    %v4391 = vld [vmem:[#allocation2 + $0x124] sm:$0xf]
    %v4392 = vld [vmem:[#allocation2 + $0x128] sm:$0xf]
    %v4393 = vld [vmem:[#allocation2 + $0x12c] sm:$0xf]
    %v4394 = vld [vmem:[#allocation2 + $0x130] sm:$0xf]
    %v4395 = vld [vmem:[#allocation2 + $0x134] sm:$0xf]
    %v4396 = vld [vmem:[#allocation2 + $0x138] sm:$0xf]
    %v4397 = vld [vmem:[#allocation2 + $0x13c] sm:$0xf]
    %v4398 = vld [vmem:[#allocation2 + $0x140] sm:$0xf]
    %v4399 = vld [vmem:[#allocation2 + $0x144] sm:$0xf]
    %v4400 = vld [vmem:[#allocation2 + $0x148] sm:$0xf]
    %v4401 = vld [vmem:[#allocation2 + $0x14c] sm:$0xf]
    %v4402 = vld [vmem:[#allocation2 + $0x150] sm:$0xf]
    %v4403 = vld [vmem:[#allocation2 + $0x154] sm:$0xf]
    %v4404 = vld [vmem:[#allocation2 + $0x158] sm:$0xf]
    %v4405 = vld [vmem:[#allocation2 + $0x15c] sm:$0xf]
    %v4406 = vld [vmem:[#allocation2 + $0x160] sm:$0xf]
    %v4407 = vld [vmem:[#allocation2 + $0x164] sm:$0xf]
    %v4408 = vld [vmem:[#allocation2 + $0x168] sm:$0xf]
    %v4409 = vld [vmem:[#allocation2 + $0x16c] sm:$0xf]
    %v4410 = vld [vmem:[#allocation2 + $0x170] sm:$0xf]
    %v4411 = vld [vmem:[#allocation2 + $0x174] sm:$0xf]
    %v4412 = vld [vmem:[#allocation2 + $0x178] sm:$0xf]
    %v4413 = vld [vmem:[#allocation2 + $0x17c] sm:$0xf]
    %v4414 = vld [vmem:[#allocation2 + $0x180] sm:$0xf]
    %v4415 = vld [vmem:[#allocation2 + $0x184] sm:$0xf]
    %v4416 = vld [vmem:[#allocation2 + $0x188] sm:$0xf]
    %v4417 = vld [vmem:[#allocation2 + $0x18c] sm:$0xf]
    %v4418 = vld [vmem:[#allocation2 + $0x190] sm:$0xf]
    %v4419 = vld [vmem:[#allocation2 + $0x194] sm:$0xf]
    %v4420 = vld [vmem:[#allocation2 + $0x198] sm:$0xf]
    %v4421 = vld [vmem:[#allocation2 + $0x19c] sm:$0xf]
    %v4422 = vld [vmem:[#allocation2 + $0x1a0] sm:$0xf]
    %v4423 = vld [vmem:[#allocation2 + $0x1a4] sm:$0xf]
    %v4424 = vld [vmem:[#allocation2 + $0x1a8] sm:$0xf]
    %v4425 = vld [vmem:[#allocation2 + $0x1ac] sm:$0xf]
    %v4426 = vld [vmem:[#allocation2 + $0x1b0] sm:$0xf]
    %v4427 = vld [vmem:[#allocation2 + $0x1b4] sm:$0xf]
    %v4428 = vld [vmem:[#allocation2 + $0x1b8] sm:$0xf]
    %v4429 = vld [vmem:[#allocation2 + $0x1bc] sm:$0xf]
    %v4430 = vld [vmem:[#allocation2 + $0x1c0] sm:$0xf]
    %v4431 = vld [vmem:[#allocation2 + $0x1c4] sm:$0xf]
    %v4432 = vld [vmem:[#allocation2 + $0x1c8] sm:$0xf]
    %v4433 = vld [vmem:[#allocation2 + $0x1cc] sm:$0xf]
    %v4434 = vld [vmem:[#allocation2 + $0x1d0] sm:$0xf]
    %v4435 = vld [vmem:[#allocation2 + $0x1d4] sm:$0xf]
    %v4436 = vld [vmem:[#allocation2 + $0x1d8] sm:$0xf]
    %v4437 = vld [vmem:[#allocation2 + $0x1dc] sm:$0xf]
    %v4438 = vld [vmem:[#allocation2 + $0x1e0] sm:$0xf]
    %v4439 = vld [vmem:[#allocation2 + $0x1e4] sm:$0xf]
    %v4440 = vld [vmem:[#allocation2 + $0x1e8] sm:$0xf]
    %v4441 = vld [vmem:[#allocation2 + $0x1ec] sm:$0xf]
    %v4442 = vld [vmem:[#allocation2 + $0x1f0] sm:$0xf]
    %v4443 = vld [vmem:[#allocation2 + $0x1f4] sm:$0xf]
    %v4444 = vld [vmem:[#allocation2 + $0x1f8] sm:$0xf]
    %v4445 = vld [vmem:[#allocation2 + $0x1fc] sm:$0xf]
    %v4446 = vld [vmem:[#allocation2 + $0x200] sm:$0xf]
    %v4447 = vld [vmem:[#allocation2 + $0x204] sm:$0xf]
    %v4448 = vld [vmem:[#allocation2 + $0x208] sm:$0xf]
    %v4449 = vld [vmem:[#allocation2 + $0x20c] sm:$0xf]
    %v4450 = vld [vmem:[#allocation2 + $0x210] sm:$0xf]
    %v4451 = vld [vmem:[#allocation2 + $0x214] sm:$0xf]
    %v4452 = vld [vmem:[#allocation2 + $0x218] sm:$0xf]
    %v4453 = vld [vmem:[#allocation2 + $0x21c] sm:$0xf]
    %v4454 = vld [vmem:[#allocation2 + $0x220] sm:$0xf]
    %v4455 = vld [vmem:[#allocation2 + $0x224] sm:$0xf]
    %v4456 = vld [vmem:[#allocation2 + $0x228] sm:$0xf]
    %v4457 = vld [vmem:[#allocation2 + $0x22c] sm:$0xf]
    %v4458 = vld [vmem:[#allocation2 + $0x230] sm:$0xf]
    %v4459 = vld [vmem:[#allocation2 + $0x234] sm:$0xf]
    %v4460 = vld [vmem:[#allocation2 + $0x238] sm:$0xf]
    %v4461 = vld [vmem:[#allocation2 + $0x23c] sm:$0xf]
    %v4462 = vld [vmem:[#allocation2 + $0x240] sm:$0xf]
    %v4463 = vld [vmem:[#allocation2 + $0x244] sm:$0xf]
    %v4464 = vld [vmem:[#allocation2 + $0x248] sm:$0xf]
    %v4465 = vld [vmem:[#allocation2 + $0x24c] sm:$0xf]
    %v4466 = vld [vmem:[#allocation2 + $0x250] sm:$0xf]
    %v4467 = vld [vmem:[#allocation2 + $0x254] sm:$0xf]
    %v4468 = vld [vmem:[#allocation2 + $0x258] sm:$0xf]
    %v4469 = vld [vmem:[#allocation2 + $0x25c] sm:$0xf]
    %v4470 = vld [vmem:[#allocation2 + $0x260] sm:$0xf]
    %v4471 = vld [vmem:[#allocation2 + $0x264] sm:$0xf]
    %v4472 = vld [vmem:[#allocation2 + $0x268] sm:$0xf]
    %v4473 = vld [vmem:[#allocation2 + $0x26c] sm:$0xf]
    %v4474 = vld [vmem:[#allocation2 + $0x270] sm:$0xf]
    %v4475 = vld [vmem:[#allocation2 + $0x274] sm:$0xf]
    %v4476 = vld [vmem:[#allocation2 + $0x278] sm:$0xf]
    %v4477 = vld [vmem:[#allocation2 + $0x27c] sm:$0xf]
    %v4478 = vld [vmem:[#allocation2 + $0x280] sm:$0xf]
    %v4479 = vld [vmem:[#allocation2 + $0x284] sm:$0xf]
    %v4480 = vld [vmem:[#allocation2 + $0x288] sm:$0xf]
    %v4481 = vld [vmem:[#allocation2 + $0x28c] sm:$0xf]
    %v4482 = vld [vmem:[#allocation2 + $0x290] sm:$0xf]
    %v4483 = vld [vmem:[#allocation2 + $0x294] sm:$0xf]
    %v4484 = vld [vmem:[#allocation2 + $0x298] sm:$0xf]
    %v4485 = vld [vmem:[#allocation2 + $0x29c] sm:$0xf]
    %v4486 = vld [vmem:[#allocation2 + $0x2a0] sm:$0xf]
    %v4487 = vld [vmem:[#allocation2 + $0x2a4] sm:$0xf]
    %v4488 = vld [vmem:[#allocation2 + $0x2a8] sm:$0xf]
    %v4489 = vld [vmem:[#allocation2 + $0x2ac] sm:$0xf]
    %v4490 = vld [vmem:[#allocation2 + $0x2b0] sm:$0xf]
    %v4491 = vld [vmem:[#allocation2 + $0x2b4] sm:$0xf]
    %v4492 = vld [vmem:[#allocation2 + $0x2b8] sm:$0xf]
    %v4493 = vld [vmem:[#allocation2 + $0x2bc] sm:$0xf]
    %v4494 = vld [vmem:[#allocation2 + $0x2c0] sm:$0xf]
    %v4495 = vld [vmem:[#allocation2 + $0x2c4] sm:$0xf]
    %v4496 = vld [vmem:[#allocation2 + $0x2c8] sm:$0xf]
    %v4497 = vld [vmem:[#allocation2 + $0x2cc] sm:$0xf]
    %v4498 = vld [vmem:[#allocation2 + $0x2d0] sm:$0xf]
    %v4499 = vld [vmem:[#allocation2 + $0x2d4] sm:$0xf]
    %v4500 = vld [vmem:[#allocation2 + $0x2d8] sm:$0xf]
    %v4501 = vld [vmem:[#allocation2 + $0x2dc] sm:$0xf]
    %v4502 = vld [vmem:[#allocation2 + $0x2e0] sm:$0xf]
    %v4503 = vld [vmem:[#allocation2 + $0x2e4] sm:$0xf]
    %v4504 = vld [vmem:[#allocation2 + $0x2e8] sm:$0xf]
    %v4505 = vld [vmem:[#allocation2 + $0x2ec] sm:$0xf]
    %v4506 = vld [vmem:[#allocation2 + $0x2f0] sm:$0xf]
    %v4507 = vld [vmem:[#allocation2 + $0x2f4] sm:$0xf]
    %v4508 = vld [vmem:[#allocation2 + $0x2f8] sm:$0xf]
    %v4509 = vld [vmem:[#allocation2 + $0x2fc] sm:$0xf]
    %v4510 = vld [vmem:[#allocation2 + $0x300] sm:$0xf]
    %v4511 = vld [vmem:[#allocation2 + $0x304] sm:$0xf]
    %v4512 = vld [vmem:[#allocation2 + $0x308] sm:$0xf]
    %v4513 = vld [vmem:[#allocation2 + $0x30c] sm:$0xf]
    %v4514 = vld [vmem:[#allocation2 + $0x310] sm:$0xf]
    %v4515 = vld [vmem:[#allocation2 + $0x314] sm:$0xf]
    %v4516 = vld [vmem:[#allocation2 + $0x318] sm:$0xf]
    %v4517 = vld [vmem:[#allocation2 + $0x31c] sm:$0xf]
    %v4518 = vld [vmem:[#allocation2 + $0x320] sm:$0xf]
    %v4519 = vld [vmem:[#allocation2 + $0x324] sm:$0xf]
    %v4520 = vld [vmem:[#allocation2 + $0x328] sm:$0xf]
    %v4521 = vld [vmem:[#allocation2 + $0x32c] sm:$0xf]
    %v4522 = vld [vmem:[#allocation2 + $0x330] sm:$0xf]
    %v4523 = vld [vmem:[#allocation2 + $0x334] sm:$0xf]
    %v4524 = vld [vmem:[#allocation2 + $0x338] sm:$0xf]
    %v4525 = vld [vmem:[#allocation2 + $0x33c] sm:$0xf]
    %v4526 = vld [vmem:[#allocation2 + $0x340] sm:$0xf]
    %v4527 = vld [vmem:[#allocation2 + $0x344] sm:$0xf]
    %v4528 = vld [vmem:[#allocation2 + $0x348] sm:$0xf]
    %v4529 = vld [vmem:[#allocation2 + $0x34c] sm:$0xf]
    %v4530 = vld [vmem:[#allocation2 + $0x350] sm:$0xf]
    %v4531 = vld [vmem:[#allocation2 + $0x354] sm:$0xf]
    %v4532 = vld [vmem:[#allocation2 + $0x358] sm:$0xf]
    %v4533 = vld [vmem:[#allocation2 + $0x35c] sm:$0xf]
    %v4534 = vld [vmem:[#allocation2 + $0x360] sm:$0xf]
    %v4535 = vld [vmem:[#allocation2 + $0x364] sm:$0xf]
    %v4536 = vld [vmem:[#allocation2 + $0x368] sm:$0xf]
    %v4537 = vld [vmem:[#allocation2 + $0x36c] sm:$0xf]
    %v4538 = vld [vmem:[#allocation2 + $0x370] sm:$0xf]
    %v4539 = vld [vmem:[#allocation2 + $0x374] sm:$0xf]
    %v4540 = vld [vmem:[#allocation2 + $0x378] sm:$0xf]
    %v4541 = vld [vmem:[#allocation2 + $0x37c] sm:$0xf]
    %v4542 = vld [vmem:[#allocation2 + $0x380] sm:$0xf]
    %v4543 = vld [vmem:[#allocation2 + $0x384] sm:$0xf]
    %v4544 = vld [vmem:[#allocation2 + $0x388] sm:$0xf]
    %v4545 = vld [vmem:[#allocation2 + $0x38c] sm:$0xf]
    %v4546 = vld [vmem:[#allocation2 + $0x390] sm:$0xf]
    %v4547 = vld [vmem:[#allocation2 + $0x394] sm:$0xf]
    %v4548 = vld [vmem:[#allocation2 + $0x398] sm:$0xf]
    %v4549 = vld [vmem:[#allocation2 + $0x39c] sm:$0xf]
    %v4550 = vld [vmem:[#allocation2 + $0x3a0] sm:$0xf]
    %v4551 = vld [vmem:[#allocation2 + $0x3a4] sm:$0xf]
    %v4552 = vld [vmem:[#allocation2 + $0x3a8] sm:$0xf]
    %v4553 = vld [vmem:[#allocation2 + $0x3ac] sm:$0xf]
    %v4554 = vld [vmem:[#allocation2 + $0x3b0] sm:$0xf]
    %v4555 = vld [vmem:[#allocation2 + $0x3b4] sm:$0xf]
    %v4556 = vld [vmem:[#allocation2 + $0x3b8] sm:$0xf]
    %v4557 = vld [vmem:[#allocation2 + $0x3bc] sm:$0xf]
    %v4558 = vld [vmem:[#allocation2 + $0x3c0] sm:$0xf]
    %v4559 = vld [vmem:[#allocation2 + $0x3c4] sm:$0xf]
    %v4560 = vld [vmem:[#allocation2 + $0x3c8] sm:$0xf]
    %v4561 = vld [vmem:[#allocation2 + $0x3cc] sm:$0xf]
    %v4562 = vld [vmem:[#allocation2 + $0x3d0] sm:$0xf]
    %v4563 = vld [vmem:[#allocation2 + $0x3d4] sm:$0xf]
    %v4564 = vld [vmem:[#allocation2 + $0x3d8] sm:$0xf]
    %v4565 = vld [vmem:[#allocation2 + $0x3dc] sm:$0xf]
    %v4566 = vld [vmem:[#allocation2 + $0x3e0] sm:$0xf]
    %v4567 = vld [vmem:[#allocation2 + $0x3e4] sm:$0xf]
    %v4568 = vld [vmem:[#allocation2 + $0x3e8] sm:$0xf]
    %v4569 = vld [vmem:[#allocation2 + $0x3ec] sm:$0xf]
    %v4570 = vld [vmem:[#allocation2 + $0x3f0] sm:$0xf]
    %v4571 = vld [vmem:[#allocation2 + $0x3f4] sm:$0xf]
    %v4572 = vld [vmem:[#allocation2 + $0x3f8] sm:$0xf]
    %v4573 = vld [vmem:[#allocation2 + $0x3fc] sm:$0xf]
    %v4574 = vld [vmem:[#allocation2 + $0x400] sm:$0xf]
    %v4575 = vld [vmem:[#allocation2 + $0x404] sm:$0xf]
    %v4576 = vld [vmem:[#allocation2 + $0x408] sm:$0xf]
    %v4577 = vld [vmem:[#allocation2 + $0x40c] sm:$0xf]
    %v4578 = vld [vmem:[#allocation2 + $0x410] sm:$0xf]
    %v4579 = vld [vmem:[#allocation2 + $0x414] sm:$0xf]
    %v4580 = vld [vmem:[#allocation2 + $0x418] sm:$0xf]
    %v4581 = vld [vmem:[#allocation2 + $0x41c] sm:$0xf]
    %v4582 = vld [vmem:[#allocation2 + $0x420] sm:$0xf]
    %v4583 = vld [vmem:[#allocation2 + $0x424] sm:$0xf]
    %v4584 = vld [vmem:[#allocation2 + $0x428] sm:$0xf]
    %v4585 = vld [vmem:[#allocation2 + $0x42c] sm:$0xf]
    %v4586 = vld [vmem:[#allocation2 + $0x430] sm:$0xf]
    %v4587 = vld [vmem:[#allocation2 + $0x434] sm:$0xf]
    %v4588 = vld [vmem:[#allocation2 + $0x438] sm:$0xf]
    %v4589 = vld [vmem:[#allocation2 + $0x43c] sm:$0xf]
    %v4590 = vld [vmem:[#allocation2 + $0x440] sm:$0xf]
    %v4591 = vld [vmem:[#allocation2 + $0x444] sm:$0xf]
    %v4592 = vld [vmem:[#allocation2 + $0x448] sm:$0xf]
    %v4593 = vld [vmem:[#allocation2 + $0x44c] sm:$0xf]
    %v4594 = vld [vmem:[#allocation2 + $0x450] sm:$0xf]
    %v4595 = vld [vmem:[#allocation2 + $0x454] sm:$0xf]
    %v4596 = vld [vmem:[#allocation2 + $0x458] sm:$0xf]
    %v4597 = vld [vmem:[#allocation2 + $0x45c] sm:$0xf]
    %v4598 = vld [vmem:[#allocation2 + $0x460] sm:$0xf]
    %v4599 = vld [vmem:[#allocation2 + $0x464] sm:$0xf]
    %v4600 = vld [vmem:[#allocation2 + $0x468] sm:$0xf]
    %v4601 = vld [vmem:[#allocation2 + $0x46c] sm:$0xf]
    %v4602 = vld [vmem:[#allocation2 + $0x470] sm:$0xf]
    %v4603 = vld [vmem:[#allocation2 + $0x474] sm:$0xf]
    %v4604 = vld [vmem:[#allocation2 + $0x478] sm:$0xf]
    %v4605 = vld [vmem:[#allocation2 + $0x47c] sm:$0xf]
    %v4606 = vld [vmem:[#allocation2 + $0x480] sm:$0xf]
    %v4607 = vld [vmem:[#allocation2 + $0x484] sm:$0xf]
    %v4608 = vld [vmem:[#allocation2 + $0x488] sm:$0xf]
    %v4609 = vld [vmem:[#allocation2 + $0x48c] sm:$0xf]
    %v4610 = vld [vmem:[#allocation2 + $0x490] sm:$0xf]
    %v4611 = vld [vmem:[#allocation2 + $0x494] sm:$0xf]
    %v4612 = vld [vmem:[#allocation2 + $0x498] sm:$0xf]
    %v4613 = vld [vmem:[#allocation2 + $0x49c] sm:$0xf]
    %v4614 = vld [vmem:[#allocation2 + $0x4a0] sm:$0xf]
    %v4615 = vld [vmem:[#allocation2 + $0x4a4] sm:$0xf]
    %v4616 = vld [vmem:[#allocation2 + $0x4a8] sm:$0xf]
    %v4617 = vld [vmem:[#allocation2 + $0x4ac] sm:$0xf]
    %v4618 = vld [vmem:[#allocation2 + $0x4b0] sm:$0xf]
    %v4619 = vld [vmem:[#allocation2 + $0x4b4] sm:$0xf]
    %v4620 = vld [vmem:[#allocation2 + $0x4b8] sm:$0xf]
    %v4621 = vld [vmem:[#allocation2 + $0x4bc] sm:$0xf]
    %v4622 = vld [vmem:[#allocation2 + $0x4c0] sm:$0xf]
    %v4623 = vld [vmem:[#allocation2 + $0x4c4] sm:$0xf]
    %v4624 = vld [vmem:[#allocation2 + $0x4c8] sm:$0xf]
    %v4625 = vld [vmem:[#allocation2 + $0x4cc] sm:$0xf]
    %v4626 = vld [vmem:[#allocation2 + $0x4d0] sm:$0xf]
    %v4627 = vld [vmem:[#allocation2 + $0x4d4] sm:$0xf]
    %v4628 = vld [vmem:[#allocation2 + $0x4d8] sm:$0xf]
    %v4629 = vld [vmem:[#allocation2 + $0x4dc] sm:$0xf]
    %v4630 = vld [vmem:[#allocation2 + $0x4e0] sm:$0xf]
    %v4631 = vld [vmem:[#allocation2 + $0x4e4] sm:$0xf]
    %v4632 = vld [vmem:[#allocation2 + $0x4e8] sm:$0xf]
    %v4633 = vld [vmem:[#allocation2 + $0x4ec] sm:$0xf]
    %v4634 = vld [vmem:[#allocation2 + $0x4f0] sm:$0xf]
    %v4635 = vld [vmem:[#allocation2 + $0x4f4] sm:$0xf]
    %v4636 = vld [vmem:[#allocation2 + $0x4f8] sm:$0xf]
    %v4637 = vld [vmem:[#allocation2 + $0x4fc] sm:$0xf]
    %v4638 = vld [vmem:[#allocation2 + $0x500] sm:$0xf]
    %v4639 = vld [vmem:[#allocation2 + $0x504] sm:$0xf]
    %v4640 = vld [vmem:[#allocation2 + $0x508] sm:$0xf]
    %v4641 = vld [vmem:[#allocation2 + $0x50c] sm:$0xf]
    %v4642 = vld [vmem:[#allocation2 + $0x510] sm:$0xf]
    %v4643 = vld [vmem:[#allocation2 + $0x514] sm:$0xf]
    %v4644 = vld [vmem:[#allocation2 + $0x518] sm:$0xf]
    %v4645 = vld [vmem:[#allocation2 + $0x51c] sm:$0xf]
    %v4646 = vld [vmem:[#allocation2 + $0x520] sm:$0xf]
    %v4647 = vld [vmem:[#allocation2 + $0x524] sm:$0xf]
    %v4648 = vld [vmem:[#allocation2 + $0x528] sm:$0xf]
    %v4649 = vld [vmem:[#allocation2 + $0x52c] sm:$0xf]
    %v4650 = vld [vmem:[#allocation2 + $0x530] sm:$0xf]
    %v4651 = vld [vmem:[#allocation2 + $0x534] sm:$0xf]
    %v4652 = vld [vmem:[#allocation2 + $0x538] sm:$0xf]
    %v4653 = vld [vmem:[#allocation2 + $0x53c] sm:$0xf]
    %v4654 = vld [vmem:[#allocation2 + $0x540] sm:$0xf]
    %v4655 = vld [vmem:[#allocation2 + $0x544] sm:$0xf]
    %v4656 = vld [vmem:[#allocation2 + $0x548] sm:$0xf]
    %v4657 = vld [vmem:[#allocation2 + $0x54c] sm:$0xf]
    %v4658 = vld [vmem:[#allocation2 + $0x550] sm:$0xf]
    %v4659 = vld [vmem:[#allocation2 + $0x554] sm:$0xf]
    %v4660 = vld [vmem:[#allocation2 + $0x558] sm:$0xf]
    %v4661 = vld [vmem:[#allocation2 + $0x55c] sm:$0xf]
    %v4662 = vld [vmem:[#allocation2 + $0x560] sm:$0xf]
    %v4663 = vld [vmem:[#allocation2 + $0x564] sm:$0xf]
    %v4664 = vld [vmem:[#allocation2 + $0x568] sm:$0xf]
    %v4665 = vld [vmem:[#allocation2 + $0x56c] sm:$0xf]
    %v4666 = vld [vmem:[#allocation2 + $0x570] sm:$0xf]
    %v4667 = vld [vmem:[#allocation2 + $0x574] sm:$0xf]
    %v4668 = vld [vmem:[#allocation2 + $0x578] sm:$0xf]
    %v4669 = vld [vmem:[#allocation2 + $0x57c] sm:$0xf]
    %v4670 = vld [vmem:[#allocation2 + $0x580] sm:$0xf]
    %v4671 = vld [vmem:[#allocation2 + $0x584] sm:$0xf]
    %v4672 = vld [vmem:[#allocation2 + $0x588] sm:$0xf]
    %v4673 = vld [vmem:[#allocation2 + $0x58c] sm:$0xf]
    %v4674 = vld [vmem:[#allocation2 + $0x590] sm:$0xf]
    %v4675 = vld [vmem:[#allocation2 + $0x594] sm:$0xf]
    %v4676 = vld [vmem:[#allocation2 + $0x598] sm:$0xf]
    %v4677 = vld [vmem:[#allocation2 + $0x59c] sm:$0xf]
    %v4678 = vld [vmem:[#allocation2 + $0x5a0] sm:$0xf]
    %v4679 = vld [vmem:[#allocation2 + $0x5a4] sm:$0xf]
    %v4680 = vld [vmem:[#allocation2 + $0x5a8] sm:$0xf]
    %v4681 = vld [vmem:[#allocation2 + $0x5ac] sm:$0xf]
    %v4682 = vld [vmem:[#allocation2 + $0x5b0] sm:$0xf]
    %v4683 = vld [vmem:[#allocation2 + $0x5b4] sm:$0xf]
    %v4684 = vld [vmem:[#allocation2 + $0x5b8] sm:$0xf]
    %v4685 = vld [vmem:[#allocation2 + $0x5bc] sm:$0xf]
    %v4686 = vld [vmem:[#allocation2 + $0x5c0] sm:$0xf]
    %v4687 = vld [vmem:[#allocation2 + $0x5c4] sm:$0xf]
    %v4688 = vld [vmem:[#allocation2 + $0x5c8] sm:$0xf]
    %v4689 = vld [vmem:[#allocation2 + $0x5cc] sm:$0xf]
    %v4690 = vld [vmem:[#allocation2 + $0x5d0] sm:$0xf]
    %v4691 = vld [vmem:[#allocation2 + $0x5d4] sm:$0xf]
    %v4692 = vld [vmem:[#allocation2 + $0x5d8] sm:$0xf]
    %v4693 = vld [vmem:[#allocation2 + $0x5dc] sm:$0xf]
    %v4694 = vld [vmem:[#allocation2 + $0x5e0] sm:$0xf]
    %v4695 = vld [vmem:[#allocation2 + $0x5e4] sm:$0xf]
    %v4696 = vld [vmem:[#allocation2 + $0x5e8] sm:$0xf]
    %v4697 = vld [vmem:[#allocation2 + $0x5ec] sm:$0xf]
    %v4698 = vld [vmem:[#allocation2 + $0x5f0] sm:$0xf]
    %v4699 = vld [vmem:[#allocation2 + $0x5f4] sm:$0xf]
    %v4700 = vld [vmem:[#allocation2 + $0x5f8] sm:$0xf]
    %v4701 = vld [vmem:[#allocation2 + $0x5fc] sm:$0xf]
    %v4702 = vld [vmem:[#allocation2 + $0x600] sm:$0xf]
    %v4703 = vld [vmem:[#allocation2 + $0x604] sm:$0xf]
    %v4704 = vld [vmem:[#allocation2 + $0x608] sm:$0xf]
    %v4705 = vld [vmem:[#allocation2 + $0x60c] sm:$0xf]
    %v4706 = vld [vmem:[#allocation2 + $0x610] sm:$0xf]
    %v4707 = vld [vmem:[#allocation2 + $0x614] sm:$0xf]
    %v4708 = vld [vmem:[#allocation2 + $0x618] sm:$0xf]
    %v4709 = vld [vmem:[#allocation2 + $0x61c] sm:$0xf]
    %v4710 = vld [vmem:[#allocation2 + $0x620] sm:$0xf]
    %v4711 = vld [vmem:[#allocation2 + $0x624] sm:$0xf]
    %v4712 = vld [vmem:[#allocation2 + $0x628] sm:$0xf]
    %v4713 = vld [vmem:[#allocation2 + $0x62c] sm:$0xf]
    %v4714 = vld [vmem:[#allocation2 + $0x630] sm:$0xf]
    %v4715 = vld [vmem:[#allocation2 + $0x634] sm:$0xf]
    %v4716 = vld [vmem:[#allocation2 + $0x638] sm:$0xf]
    %v4717 = vld [vmem:[#allocation2 + $0x63c] sm:$0xf]
    %v4718 = vld [vmem:[#allocation2 + $0x640] sm:$0xf]
    %v4719 = vld [vmem:[#allocation2 + $0x644] sm:$0xf]
    %v4720 = vld [vmem:[#allocation2 + $0x648] sm:$0xf]
    %v4721 = vld [vmem:[#allocation2 + $0x64c] sm:$0xf]
    %v4722 = vld [vmem:[#allocation2 + $0x650] sm:$0xf]
    %v4723 = vld [vmem:[#allocation2 + $0x654] sm:$0xf]
    %v4724 = vld [vmem:[#allocation2 + $0x658] sm:$0xf]
    %v4725 = vld [vmem:[#allocation2 + $0x65c] sm:$0xf]
    %v4726 = vld [vmem:[#allocation2 + $0x660] sm:$0xf]
    %v4727 = vld [vmem:[#allocation2 + $0x664] sm:$0xf]
    %v4728 = vld [vmem:[#allocation2 + $0x668] sm:$0xf]
    %v4729 = vld [vmem:[#allocation2 + $0x66c] sm:$0xf]
    %v4730 = vld [vmem:[#allocation2 + $0x670] sm:$0xf]
    %v4731 = vld [vmem:[#allocation2 + $0x674] sm:$0xf]
    %v4732 = vld [vmem:[#allocation2 + $0x678] sm:$0xf]
    %v4733 = vld [vmem:[#allocation2 + $0x67c] sm:$0xf]
    %v4734 = vld [vmem:[#allocation2 + $0x680] sm:$0xf]
    %v4735 = vld [vmem:[#allocation2 + $0x684] sm:$0xf]
    %v4736 = vld [vmem:[#allocation2 + $0x688] sm:$0xf]
    %v4737 = vld [vmem:[#allocation2 + $0x68c] sm:$0xf]
    %v4738 = vld [vmem:[#allocation2 + $0x690] sm:$0xf]
    %v4739 = vld [vmem:[#allocation2 + $0x694] sm:$0xf]
    %v4740 = vld [vmem:[#allocation2 + $0x698] sm:$0xf]
    %v4741 = vld [vmem:[#allocation2 + $0x69c] sm:$0xf]
    %v4742 = vld [vmem:[#allocation2 + $0x6a0] sm:$0xf]
    %v4743 = vld [vmem:[#allocation2 + $0x6a4] sm:$0xf]
    %v4744 = vld [vmem:[#allocation2 + $0x6a8] sm:$0xf]
    %v4745 = vld [vmem:[#allocation2 + $0x6ac] sm:$0xf]
    %v4746 = vld [vmem:[#allocation2 + $0x6b0] sm:$0xf]
    %v4747 = vld [vmem:[#allocation2 + $0x6b4] sm:$0xf]
    %v4748 = vld [vmem:[#allocation2 + $0x6b8] sm:$0xf]
    %v4749 = vld [vmem:[#allocation2 + $0x6bc] sm:$0xf]
    %v4750 = vld [vmem:[#allocation2 + $0x6c0] sm:$0xf]
    %v4751 = vld [vmem:[#allocation2 + $0x6c4] sm:$0xf]
    %v4752 = vld [vmem:[#allocation2 + $0x6c8] sm:$0xf]
    %v4753 = vld [vmem:[#allocation2 + $0x6cc] sm:$0xf]
    %v4754 = vld [vmem:[#allocation2 + $0x6d0] sm:$0xf]
    %v4755 = vld [vmem:[#allocation2 + $0x6d4] sm:$0xf]
    %v4756 = vld [vmem:[#allocation2 + $0x6d8] sm:$0xf]
    %v4757 = vld [vmem:[#allocation2 + $0x6dc] sm:$0xf]
    %v4758 = vld [vmem:[#allocation2 + $0x6e0] sm:$0xf]
    %v4759 = vld [vmem:[#allocation2 + $0x6e4] sm:$0xf]
    %v4760 = vld [vmem:[#allocation2 + $0x6e8] sm:$0xf]
    %v4761 = vld [vmem:[#allocation2 + $0x6ec] sm:$0xf]
    %v4762 = vld [vmem:[#allocation2 + $0x6f0] sm:$0xf]
    %v4763 = vld [vmem:[#allocation2 + $0x6f4] sm:$0xf]
    %v4764 = vld [vmem:[#allocation2 + $0x6f8] sm:$0xf]
    %v4765 = vld [vmem:[#allocation2 + $0x6fc] sm:$0xf]
    %v4766 = vld [vmem:[#allocation2 + $0x700] sm:$0xf]
    %v4767 = vld [vmem:[#allocation2 + $0x704] sm:$0xf]
    %v4768 = vld [vmem:[#allocation2 + $0x708] sm:$0xf]
    %v4769 = vld [vmem:[#allocation2 + $0x70c] sm:$0xf]
    %v4770 = vld [vmem:[#allocation2 + $0x710] sm:$0xf]
    %v4771 = vld [vmem:[#allocation2 + $0x714] sm:$0xf]
    %v4772 = vld [vmem:[#allocation2 + $0x718] sm:$0xf]
    %v4773 = vld [vmem:[#allocation2 + $0x71c] sm:$0xf]
    %v4774 = vld [vmem:[#allocation2 + $0x720] sm:$0xf]
    %v4775 = vld [vmem:[#allocation2 + $0x724] sm:$0xf]
    %v4776 = vld [vmem:[#allocation2 + $0x728] sm:$0xf]
    %v4777 = vld [vmem:[#allocation2 + $0x72c] sm:$0xf]
    %v4778 = vld [vmem:[#allocation2 + $0x730] sm:$0xf]
    %v4779 = vld [vmem:[#allocation2 + $0x734] sm:$0xf]
    %v4780 = vld [vmem:[#allocation2 + $0x738] sm:$0xf]
    %v4781 = vld [vmem:[#allocation2 + $0x73c] sm:$0xf]
    %v4782 = vld [vmem:[#allocation2 + $0x740] sm:$0xf]
    %v4783 = vld [vmem:[#allocation2 + $0x744] sm:$0xf]
    %v4784 = vld [vmem:[#allocation2 + $0x748] sm:$0xf]
    %v4785 = vld [vmem:[#allocation2 + $0x74c] sm:$0xf]
    %v4786 = vld [vmem:[#allocation2 + $0x750] sm:$0xf]
    %v4787 = vld [vmem:[#allocation2 + $0x754] sm:$0xf]
    %v4788 = vld [vmem:[#allocation2 + $0x758] sm:$0xf]
    %v4789 = vld [vmem:[#allocation2 + $0x75c] sm:$0xf]
    %v4790 = vld [vmem:[#allocation2 + $0x760] sm:$0xf]
    %v4791 = vld [vmem:[#allocation2 + $0x764] sm:$0xf]
    %v4792 = vld [vmem:[#allocation2 + $0x768] sm:$0xf]
    %v4793 = vld [vmem:[#allocation2 + $0x76c] sm:$0xf]
    %v4794 = vld [vmem:[#allocation2 + $0x770] sm:$0xf]
    %v4795 = vld [vmem:[#allocation2 + $0x774] sm:$0xf]
    %v4796 = vld [vmem:[#allocation2 + $0x778] sm:$0xf]
    %v4797 = vld [vmem:[#allocation2 + $0x77c] sm:$0xf]
    %v4798 = vld [vmem:[#allocation2 + $0x780] sm:$0xf]
    %v4799 = vld [vmem:[#allocation2 + $0x784] sm:$0xf]
    %v4800 = vld [vmem:[#allocation2 + $0x788] sm:$0xf]
    %v4801 = vld [vmem:[#allocation2 + $0x78c] sm:$0xf]
    %v4802 = vld [vmem:[#allocation2 + $0x790] sm:$0xf]
    %v4803 = vld [vmem:[#allocation2 + $0x794] sm:$0xf]
    %v4804 = vld [vmem:[#allocation2 + $0x798] sm:$0xf]
    %v4805 = vld [vmem:[#allocation2 + $0x79c] sm:$0xf]
    %v4806 = vld [vmem:[#allocation2 + $0x7a0] sm:$0xf]
    %v4807 = vld [vmem:[#allocation2 + $0x7a4] sm:$0xf]
    %v4808 = vld [vmem:[#allocation2 + $0x7a8] sm:$0xf]
    %v4809 = vld [vmem:[#allocation2 + $0x7ac] sm:$0xf]
    %v4810 = vld [vmem:[#allocation2 + $0x7b0] sm:$0xf]
    %v4811 = vld [vmem:[#allocation2 + $0x7b4] sm:$0xf]
    %v4812 = vld [vmem:[#allocation2 + $0x7b8] sm:$0xf]
    %v4813 = vld [vmem:[#allocation2 + $0x7bc] sm:$0xf]
    %v4814 = vld [vmem:[#allocation2 + $0x7c0] sm:$0xf]
    %v4815 = vld [vmem:[#allocation2 + $0x7c4] sm:$0xf]
    %v4816 = vld [vmem:[#allocation2 + $0x7c8] sm:$0xf]
    %v4817 = vld [vmem:[#allocation2 + $0x7cc] sm:$0xf]
    %v4818 = vld [vmem:[#allocation2 + $0x7d0] sm:$0xf]
    %v4819 = vld [vmem:[#allocation2 + $0x7d4] sm:$0xf]
    %v4820 = vld [vmem:[#allocation2 + $0x7d8] sm:$0xf]
    %v4821 = vld [vmem:[#allocation2 + $0x7dc] sm:$0xf]
    %v4822 = vld [vmem:[#allocation2 + $0x7e0] sm:$0xf]
    %v4823 = vld [vmem:[#allocation2 + $0x7e4] sm:$0xf]
    %v4824 = vld [vmem:[#allocation2 + $0x7e8] sm:$0xf]
    %v4825 = vld [vmem:[#allocation2 + $0x7ec] sm:$0xf]
    %v4826 = vld [vmem:[#allocation2 + $0x7f0] sm:$0xf]
    %v4827 = vld [vmem:[#allocation2 + $0x7f4] sm:$0xf]
    %v4828 = vld [vmem:[#allocation2 + $0x7f8] sm:$0xf]
    %v4829 = vld [vmem:[#allocation2 + $0x7fc] sm:$0xf]
    %v4830 = vld [vmem:[%s2] sm:$0x1]
    %v4831 = vmul.f32 %v4830, 3.0
    %v4833 = vlaneseq
    %v4834 = vshrl.u32 %v4833, 7
    %v4835 = vsub.s32 0, %v4834
    %v4836 = vrot.slane %v4831, %v4835
    %v5094 = vunpack.c.l.b16 %v4062
    %v5095 = vunpack.c.l.b16 %v4063
    %v5096 = vunpack.c.l.b16 %v4064
    %v5097 = vunpack.c.l.b16 %v4065
    %v5098 = vunpack.c.l.b16 %v4066
    %v5099 = vunpack.c.l.b16 %v4067
    %v5100 = vunpack.c.l.b16 %v4068
    %v5101 = vunpack.c.l.b16 %v4069
    %v5102 = vunpack.c.l.b16 %v4070
    %v5103 = vunpack.c.l.b16 %v4071
    %v5104 = vunpack.c.l.b16 %v4072
    %v5105 = vunpack.c.l.b16 %v4073
    %v5106 = vunpack.c.l.b16 %v4074
    %v5107 = vunpack.c.l.b16 %v4075
    %v5108 = vunpack.c.l.b16 %v4076
    %v5109 = vunpack.c.l.b16 %v4077
    %v5110 = vunpack.c.l.b16 %v4078
    %v5111 = vunpack.c.l.b16 %v4079
    %v5112 = vunpack.c.l.b16 %v4080
    %v5113 = vunpack.c.l.b16 %v4081
    %v5114 = vunpack.c.l.b16 %v4082
    %v5115 = vunpack.c.l.b16 %v4083
    %v5116 = vunpack.c.l.b16 %v4084
    %v5117 = vunpack.c.l.b16 %v4085
    %v5118 = vunpack.c.l.b16 %v4086
    %v5119 = vunpack.c.l.b16 %v4087
    %v5120 = vunpack.c.l.b16 %v4088
    %v5121 = vunpack.c.l.b16 %v4089
    %v5122 = vunpack.c.l.b16 %v4090
    %v5123 = vunpack.c.l.b16 %v4091
    %v5124 = vunpack.c.l.b16 %v4092
    %v5125 = vunpack.c.l.b16 %v4093
    %v5126 = vunpack.c.l.b16 %v4094
    %v5127 = vunpack.c.l.b16 %v4095
    %v5128 = vunpack.c.l.b16 %v4096
    %v5129 = vunpack.c.l.b16 %v4097
    %v5130 = vunpack.c.l.b16 %v4098
    %v5131 = vunpack.c.l.b16 %v4099
    %v5132 = vunpack.c.l.b16 %v4100
    %v5133 = vunpack.c.l.b16 %v4101
    %v5134 = vunpack.c.l.b16 %v4102
    %v5135 = vunpack.c.l.b16 %v4103
    %v5136 = vunpack.c.l.b16 %v4104
    %v5137 = vunpack.c.l.b16 %v4105
    %v5138 = vunpack.c.l.b16 %v4106
    %v5139 = vunpack.c.l.b16 %v4107
    %v5140 = vunpack.c.l.b16 %v4108
    %v5141 = vunpack.c.l.b16 %v4109
    %v5142 = vunpack.c.l.b16 %v4110
    %v5143 = vunpack.c.l.b16 %v4111
    %v5144 = vunpack.c.l.b16 %v4112
    %v5145 = vunpack.c.l.b16 %v4113
    %v5146 = vunpack.c.l.b16 %v4114
    %v5147 = vunpack.c.l.b16 %v4115
    %v5148 = vunpack.c.l.b16 %v4116
    %v5149 = vunpack.c.l.b16 %v4117
    %v5150 = vunpack.c.l.b16 %v4118
    %v5151 = vunpack.c.l.b16 %v4119
    %v5152 = vunpack.c.l.b16 %v4120
    %v5153 = vunpack.c.l.b16 %v4121
    %v5154 = vunpack.c.l.b16 %v4122
    %v5155 = vunpack.c.l.b16 %v4123
    %v5156 = vunpack.c.l.b16 %v4124
    %v5157 = vunpack.c.l.b16 %v4125
    %v5158 = vunpack.c.l.b16 %v4126
    %v5159 = vunpack.c.l.b16 %v4127
    %v5160 = vunpack.c.l.b16 %v4128
    %v5161 = vunpack.c.l.b16 %v4129
    %v5162 = vunpack.c.l.b16 %v4130
    %v5163 = vunpack.c.l.b16 %v4131
    %v5164 = vunpack.c.l.b16 %v4132
    %v5165 = vunpack.c.l.b16 %v4133
    %v5166 = vunpack.c.l.b16 %v4134
    %v5167 = vunpack.c.l.b16 %v4135
    %v5168 = vunpack.c.l.b16 %v4136
    %v5169 = vunpack.c.l.b16 %v4137
    %v5170 = vunpack.c.l.b16 %v4138
    %v5171 = vunpack.c.l.b16 %v4139
    %v5172 = vunpack.c.l.b16 %v4140
    %v5173 = vunpack.c.l.b16 %v4141
    %v5174 = vunpack.c.l.b16 %v4142
    %v5175 = vunpack.c.l.b16 %v4143
    %v5176 = vunpack.c.l.b16 %v4144
    %v5177 = vunpack.c.l.b16 %v4145
    %v5178 = vunpack.c.l.b16 %v4146
    %v5179 = vunpack.c.l.b16 %v4147
    %v5180 = vunpack.c.l.b16 %v4148
    %v5181 = vunpack.c.l.b16 %v4149
    %v5182 = vunpack.c.l.b16 %v4150
    %v5183 = vunpack.c.l.b16 %v4151
    %v5184 = vunpack.c.l.b16 %v4152
    %v5185 = vunpack.c.l.b16 %v4153
    %v5186 = vunpack.c.l.b16 %v4154
    %v5187 = vunpack.c.l.b16 %v4155
    %v5188 = vunpack.c.l.b16 %v4156
    %v5189 = vunpack.c.l.b16 %v4157
    %v5190 = vunpack.c.l.b16 %v4158
    %v5191 = vunpack.c.l.b16 %v4159
    %v5192 = vunpack.c.l.b16 %v4160
    %v5193 = vunpack.c.l.b16 %v4161
    %v5194 = vunpack.c.l.b16 %v4162
    %v5195 = vunpack.c.l.b16 %v4163
    %v5196 = vunpack.c.l.b16 %v4164
    %v5197 = vunpack.c.l.b16 %v4165
    %v5198 = vunpack.c.l.b16 %v4166
    %v5199 = vunpack.c.l.b16 %v4167
    %v5200 = vunpack.c.l.b16 %v4168
    %v5201 = vunpack.c.l.b16 %v4169
    %v5202 = vunpack.c.l.b16 %v4170
    %v5203 = vunpack.c.l.b16 %v4171
    %v5204 = vunpack.c.l.b16 %v4172
    %v5205 = vunpack.c.l.b16 %v4173
    %v5206 = vunpack.c.l.b16 %v4174
    %v5207 = vunpack.c.l.b16 %v4175
    %v5208 = vunpack.c.l.b16 %v4176
    %v5209 = vunpack.c.l.b16 %v4177
    %v5210 = vunpack.c.l.b16 %v4178
    %v5211 = vunpack.c.l.b16 %v4179
    %v5212 = vunpack.c.l.b16 %v4180
    %v5213 = vunpack.c.l.b16 %v4181
    %v5214 = vunpack.c.l.b16 %v4182
    %v5215 = vunpack.c.l.b16 %v4183
    %v5216 = vunpack.c.l.b16 %v4184
    %v5217 = vunpack.c.l.b16 %v4185
    %v5218 = vunpack.c.l.b16 %v4186
    %v5219 = vunpack.c.l.b16 %v4187
    %v5220 = vunpack.c.l.b16 %v4188
    %v5221 = vunpack.c.l.b16 %v4189
    %v5222 = vunpack.c.l.b16 %v4190
    %v5223 = vunpack.c.l.b16 %v4191
    %v5224 = vunpack.c.l.b16 %v4192
    %v5225 = vunpack.c.l.b16 %v4193
    %v5226 = vunpack.c.l.b16 %v4194
    %v5227 = vunpack.c.l.b16 %v4195
    %v5228 = vunpack.c.l.b16 %v4196
    %v5229 = vunpack.c.l.b16 %v4197
    %v5230 = vunpack.c.l.b16 %v4198
    %v5231 = vunpack.c.l.b16 %v4199
    %v5232 = vunpack.c.l.b16 %v4200
    %v5233 = vunpack.c.l.b16 %v4201
    %v5234 = vunpack.c.l.b16 %v4202
    %v5235 = vunpack.c.l.b16 %v4203
    %v5236 = vunpack.c.l.b16 %v4204
    %v5237 = vunpack.c.l.b16 %v4205
    %v5238 = vunpack.c.l.b16 %v4206
    %v5239 = vunpack.c.l.b16 %v4207
    %v5240 = vunpack.c.l.b16 %v4208
    %v5241 = vunpack.c.l.b16 %v4209
    %v5242 = vunpack.c.l.b16 %v4210
    %v5243 = vunpack.c.l.b16 %v4211
    %v5244 = vunpack.c.l.b16 %v4212
    %v5245 = vunpack.c.l.b16 %v4213
    %v5246 = vunpack.c.l.b16 %v4214
    %v5247 = vunpack.c.l.b16 %v4215
    %v5248 = vunpack.c.l.b16 %v4216
    %v5249 = vunpack.c.l.b16 %v4217
    %v5250 = vunpack.c.l.b16 %v4218
    %v5251 = vunpack.c.l.b16 %v4219
    %v5252 = vunpack.c.l.b16 %v4220
    %v5253 = vunpack.c.l.b16 %v4221
    %v5254 = vunpack.c.l.b16 %v4222
    %v5255 = vunpack.c.l.b16 %v4223
    %v5256 = vunpack.c.l.b16 %v4224
    %v5257 = vunpack.c.l.b16 %v4225
    %v5258 = vunpack.c.l.b16 %v4226
    %v5259 = vunpack.c.l.b16 %v4227
    %v5260 = vunpack.c.l.b16 %v4228
    %v5261 = vunpack.c.l.b16 %v4229
    %v5262 = vunpack.c.l.b16 %v4230
    %v5263 = vunpack.c.l.b16 %v4231
    %v5264 = vunpack.c.l.b16 %v4232
    %v5265 = vunpack.c.l.b16 %v4233
    %v5266 = vunpack.c.l.b16 %v4234
    %v5267 = vunpack.c.l.b16 %v4235
    %v5268 = vunpack.c.l.b16 %v4236
    %v5269 = vunpack.c.l.b16 %v4237
    %v5270 = vunpack.c.l.b16 %v4238
    %v5271 = vunpack.c.l.b16 %v4239
    %v5272 = vunpack.c.l.b16 %v4240
    %v5273 = vunpack.c.l.b16 %v4241
    %v5274 = vunpack.c.l.b16 %v4242
    %v5275 = vunpack.c.l.b16 %v4243
    %v5276 = vunpack.c.l.b16 %v4244
    %v5277 = vunpack.c.l.b16 %v4245
    %v5278 = vunpack.c.l.b16 %v4246
    %v5279 = vunpack.c.l.b16 %v4247
    %v5280 = vunpack.c.l.b16 %v4248
    %v5281 = vunpack.c.l.b16 %v4249
    %v5282 = vunpack.c.l.b16 %v4250
    %v5283 = vunpack.c.l.b16 %v4251
    %v5284 = vunpack.c.l.b16 %v4252
    %v5285 = vunpack.c.l.b16 %v4253
    %v5286 = vunpack.c.l.b16 %v4254
    %v5287 = vunpack.c.l.b16 %v4255
    %v5288 = vunpack.c.l.b16 %v4256
    %v5289 = vunpack.c.l.b16 %v4257
    %v5290 = vunpack.c.l.b16 %v4258
    %v5291 = vunpack.c.l.b16 %v4259
    %v5292 = vunpack.c.l.b16 %v4260
    %v5293 = vunpack.c.l.b16 %v4261
    %v5294 = vunpack.c.l.b16 %v4262
    %v5295 = vunpack.c.l.b16 %v4263
    %v5296 = vunpack.c.l.b16 %v4264
    %v5297 = vunpack.c.l.b16 %v4265
    %v5298 = vunpack.c.l.b16 %v4266
    %v5299 = vunpack.c.l.b16 %v4267
    %v5300 = vunpack.c.l.b16 %v4268
    %v5301 = vunpack.c.l.b16 %v4269
    %v5302 = vunpack.c.l.b16 %v4270
    %v5303 = vunpack.c.l.b16 %v4271
    %v5304 = vunpack.c.l.b16 %v4272
    %v5305 = vunpack.c.l.b16 %v4273
    %v5306 = vunpack.c.l.b16 %v4274
    %v5307 = vunpack.c.l.b16 %v4275
    %v5308 = vunpack.c.l.b16 %v4276
    %v5309 = vunpack.c.l.b16 %v4277
    %v5310 = vunpack.c.l.b16 %v4278
    %v5311 = vunpack.c.l.b16 %v4279
    %v5312 = vunpack.c.l.b16 %v4280
    %v5313 = vunpack.c.l.b16 %v4281
    %v5314 = vunpack.c.l.b16 %v4282
    %v5315 = vunpack.c.l.b16 %v4283
    %v5316 = vunpack.c.l.b16 %v4284
    %v5317 = vunpack.c.l.b16 %v4285
    %v5318 = vunpack.c.l.b16 %v4286
    %v5319 = vunpack.c.l.b16 %v4287
    %v5320 = vunpack.c.l.b16 %v4288
    %v5321 = vunpack.c.l.b16 %v4289
    %v5322 = vunpack.c.l.b16 %v4290
    %v5323 = vunpack.c.l.b16 %v4291
    %v5324 = vunpack.c.l.b16 %v4292
    %v5325 = vunpack.c.l.b16 %v4293
    %v5326 = vunpack.c.l.b16 %v4294
    %v5327 = vunpack.c.l.b16 %v4295
    %v5328 = vunpack.c.l.b16 %v4296
    %v5329 = vunpack.c.l.b16 %v4297
    %v5330 = vunpack.c.l.b16 %v4298
    %v5331 = vunpack.c.l.b16 %v4299
    %v5332 = vunpack.c.l.b16 %v4300
    %v5333 = vunpack.c.l.b16 %v4301
    %v5334 = vunpack.c.l.b16 %v4302
    %v5335 = vunpack.c.l.b16 %v4303
    %v5336 = vunpack.c.l.b16 %v4304
    %v5337 = vunpack.c.l.b16 %v4305
    %v5338 = vunpack.c.l.b16 %v4306
    %v5339 = vunpack.c.l.b16 %v4307
    %v5340 = vunpack.c.l.b16 %v4308
    %v5341 = vunpack.c.l.b16 %v4309
    %v5342 = vunpack.c.l.b16 %v4310
    %v5343 = vunpack.c.l.b16 %v4311
    %v5344 = vunpack.c.l.b16 %v4312
    %v5345 = vunpack.c.l.b16 %v4313
    %v5346 = vunpack.c.l.b16 %v4314
    %v5347 = vunpack.c.l.b16 %v4315
    %v5348 = vunpack.c.l.b16 %v4316
    %v5349 = vunpack.c.l.b16 %v4317
    %vm5350 = vcmask 1041409
    %v5351 = vsel %vm5350, %v5126, %v5094
    %vm5352 = vcmask 1042434
    %v5353 = vsel %vm5352, %v5158, %v5351
    %vm5354 = vcmask 1043459
    %v5355 = vsel %vm5354, %v5190, %v5353
    %vm5356 = vcmask 1044484
    %v5357 = vsel %vm5356, %v5222, %v5355
    %vm5358 = vcmask 1045509
    %v5359 = vsel %vm5358, %v5254, %v5357
    %vm5360 = vcmask 1046534
    %v5361 = vsel %vm5360, %v5286, %v5359
    %vm5362 = vcmask 1047559
    %v5363 = vsel %vm5362, %v5318, %v5361
    %v5364 = vsel %vm5350, %v5127, %v5095
    %v5365 = vsel %vm5352, %v5159, %v5364
    %v5366 = vsel %vm5354, %v5191, %v5365
    %v5367 = vsel %vm5356, %v5223, %v5366
    %v5368 = vsel %vm5358, %v5255, %v5367
    %v5369 = vsel %vm5360, %v5287, %v5368
    %v5370 = vsel %vm5362, %v5319, %v5369
    %v5371 = vsel %vm5350, %v5128, %v5096
    %v5372 = vsel %vm5352, %v5160, %v5371
    %v5373 = vsel %vm5354, %v5192, %v5372
    %v5374 = vsel %vm5356, %v5224, %v5373
    %v5375 = vsel %vm5358, %v5256, %v5374
    %v5376 = vsel %vm5360, %v5288, %v5375
    %v5377 = vsel %vm5362, %v5320, %v5376
    %v5378 = vsel %vm5350, %v5129, %v5097
    %v5379 = vsel %vm5352, %v5161, %v5378
    %v5380 = vsel %vm5354, %v5193, %v5379
    %v5381 = vsel %vm5356, %v5225, %v5380
    %v5382 = vsel %vm5358, %v5257, %v5381
    %v5383 = vsel %vm5360, %v5289, %v5382
    %v5384 = vsel %vm5362, %v5321, %v5383
    %v5385 = vsel %vm5350, %v5130, %v5098
    %v5386 = vsel %vm5352, %v5162, %v5385
    %v5387 = vsel %vm5354, %v5194, %v5386
    %v5388 = vsel %vm5356, %v5226, %v5387
    %v5389 = vsel %vm5358, %v5258, %v5388
    %v5390 = vsel %vm5360, %v5290, %v5389
    %v5391 = vsel %vm5362, %v5322, %v5390
    %v5392 = vsel %vm5350, %v5131, %v5099
    %v5393 = vsel %vm5352, %v5163, %v5392
    %v5394 = vsel %vm5354, %v5195, %v5393
    %v5395 = vsel %vm5356, %v5227, %v5394
    %v5396 = vsel %vm5358, %v5259, %v5395
    %v5397 = vsel %vm5360, %v5291, %v5396
    %v5398 = vsel %vm5362, %v5323, %v5397
    %v5399 = vsel %vm5350, %v5132, %v5100
    %v5400 = vsel %vm5352, %v5164, %v5399
    %v5401 = vsel %vm5354, %v5196, %v5400
    %v5402 = vsel %vm5356, %v5228, %v5401
    %v5403 = vsel %vm5358, %v5260, %v5402
    %v5404 = vsel %vm5360, %v5292, %v5403
    %v5405 = vsel %vm5362, %v5324, %v5404
    %v5406 = vsel %vm5350, %v5133, %v5101
    %v5407 = vsel %vm5352, %v5165, %v5406
    %v5408 = vsel %vm5354, %v5197, %v5407
    %v5409 = vsel %vm5356, %v5229, %v5408
    %v5410 = vsel %vm5358, %v5261, %v5409
    %v5411 = vsel %vm5360, %v5293, %v5410
    %v5412 = vsel %vm5362, %v5325, %v5411
    %v5413 = vsel %vm5350, %v5134, %v5102
    %v5414 = vsel %vm5352, %v5166, %v5413
    %v5415 = vsel %vm5354, %v5198, %v5414
    %v5416 = vsel %vm5356, %v5230, %v5415
    %v5417 = vsel %vm5358, %v5262, %v5416
    %v5418 = vsel %vm5360, %v5294, %v5417
    %v5419 = vsel %vm5362, %v5326, %v5418
    %v5420 = vsel %vm5350, %v5135, %v5103
    %v5421 = vsel %vm5352, %v5167, %v5420
    %v5422 = vsel %vm5354, %v5199, %v5421
    %v5423 = vsel %vm5356, %v5231, %v5422
    %v5424 = vsel %vm5358, %v5263, %v5423
    %v5425 = vsel %vm5360, %v5295, %v5424
    %v5426 = vsel %vm5362, %v5327, %v5425
    %v5427 = vsel %vm5350, %v5136, %v5104
    %v5428 = vsel %vm5352, %v5168, %v5427
    %v5429 = vsel %vm5354, %v5200, %v5428
    %v5430 = vsel %vm5356, %v5232, %v5429
    %v5431 = vsel %vm5358, %v5264, %v5430
    %v5432 = vsel %vm5360, %v5296, %v5431
    %v5433 = vsel %vm5362, %v5328, %v5432
    %v5434 = vsel %vm5350, %v5137, %v5105
    %v5435 = vsel %vm5352, %v5169, %v5434
    %v5436 = vsel %vm5354, %v5201, %v5435
    %v5437 = vsel %vm5356, %v5233, %v5436
    %v5438 = vsel %vm5358, %v5265, %v5437
    %v5439 = vsel %vm5360, %v5297, %v5438
    %v5440 = vsel %vm5362, %v5329, %v5439
    %v5441 = vsel %vm5350, %v5138, %v5106
    %v5442 = vsel %vm5352, %v5170, %v5441
    %v5443 = vsel %vm5354, %v5202, %v5442
    %v5444 = vsel %vm5356, %v5234, %v5443
    %v5445 = vsel %vm5358, %v5266, %v5444
    %v5446 = vsel %vm5360, %v5298, %v5445
    %v5447 = vsel %vm5362, %v5330, %v5446
    %v5448 = vsel %vm5350, %v5139, %v5107
    %v5449 = vsel %vm5352, %v5171, %v5448
    %v5450 = vsel %vm5354, %v5203, %v5449
    %v5451 = vsel %vm5356, %v5235, %v5450
    %v5452 = vsel %vm5358, %v5267, %v5451
    %v5453 = vsel %vm5360, %v5299, %v5452
    %v5454 = vsel %vm5362, %v5331, %v5453
    %v5455 = vsel %vm5350, %v5140, %v5108
    %v5456 = vsel %vm5352, %v5172, %v5455
    %v5457 = vsel %vm5354, %v5204, %v5456
    %v5458 = vsel %vm5356, %v5236, %v5457
    %v5459 = vsel %vm5358, %v5268, %v5458
    %v5460 = vsel %vm5360, %v5300, %v5459
    %v5461 = vsel %vm5362, %v5332, %v5460
    %v5462 = vsel %vm5350, %v5141, %v5109
    %v5463 = vsel %vm5352, %v5173, %v5462
    %v5464 = vsel %vm5354, %v5205, %v5463
    %v5465 = vsel %vm5356, %v5237, %v5464
    %v5466 = vsel %vm5358, %v5269, %v5465
    %v5467 = vsel %vm5360, %v5301, %v5466
    %v5468 = vsel %vm5362, %v5333, %v5467
    %v5469 = vsel %vm5350, %v5142, %v5110
    %v5470 = vsel %vm5352, %v5174, %v5469
    %v5471 = vsel %vm5354, %v5206, %v5470
    %v5472 = vsel %vm5356, %v5238, %v5471
    %v5473 = vsel %vm5358, %v5270, %v5472
    %v5474 = vsel %vm5360, %v5302, %v5473
    %v5475 = vsel %vm5362, %v5334, %v5474
    %v5476 = vsel %vm5350, %v5143, %v5111
    %v5477 = vsel %vm5352, %v5175, %v5476
    %v5478 = vsel %vm5354, %v5207, %v5477
    %v5479 = vsel %vm5356, %v5239, %v5478
    %v5480 = vsel %vm5358, %v5271, %v5479
    %v5481 = vsel %vm5360, %v5303, %v5480
    %v5482 = vsel %vm5362, %v5335, %v5481
    %v5483 = vsel %vm5350, %v5144, %v5112
    %v5484 = vsel %vm5352, %v5176, %v5483
    %v5485 = vsel %vm5354, %v5208, %v5484
    %v5486 = vsel %vm5356, %v5240, %v5485
    %v5487 = vsel %vm5358, %v5272, %v5486
    %v5488 = vsel %vm5360, %v5304, %v5487
    %v5489 = vsel %vm5362, %v5336, %v5488
    %v5490 = vsel %vm5350, %v5145, %v5113
    %v5491 = vsel %vm5352, %v5177, %v5490
    %v5492 = vsel %vm5354, %v5209, %v5491
    %v5493 = vsel %vm5356, %v5241, %v5492
    %v5494 = vsel %vm5358, %v5273, %v5493
    %v5495 = vsel %vm5360, %v5305, %v5494
    %v5496 = vsel %vm5362, %v5337, %v5495
    %v5497 = vsel %vm5350, %v5146, %v5114
    %v5498 = vsel %vm5352, %v5178, %v5497
    %v5499 = vsel %vm5354, %v5210, %v5498
    %v5500 = vsel %vm5356, %v5242, %v5499
    %v5501 = vsel %vm5358, %v5274, %v5500
    %v5502 = vsel %vm5360, %v5306, %v5501
    %v5503 = vsel %vm5362, %v5338, %v5502
    %v5504 = vsel %vm5350, %v5147, %v5115
    %v5505 = vsel %vm5352, %v5179, %v5504
    %v5506 = vsel %vm5354, %v5211, %v5505
    %v5507 = vsel %vm5356, %v5243, %v5506
    %v5508 = vsel %vm5358, %v5275, %v5507
    %v5509 = vsel %vm5360, %v5307, %v5508
    %v5510 = vsel %vm5362, %v5339, %v5509
    %v5511 = vsel %vm5350, %v5148, %v5116
    %v5512 = vsel %vm5352, %v5180, %v5511
    %v5513 = vsel %vm5354, %v5212, %v5512
    %v5514 = vsel %vm5356, %v5244, %v5513
    %v5515 = vsel %vm5358, %v5276, %v5514
    %v5516 = vsel %vm5360, %v5308, %v5515
    %v5517 = vsel %vm5362, %v5340, %v5516
    %v5518 = vsel %vm5350, %v5149, %v5117
    %v5519 = vsel %vm5352, %v5181, %v5518
    %v5520 = vsel %vm5354, %v5213, %v5519
    %v5521 = vsel %vm5356, %v5245, %v5520
    %v5522 = vsel %vm5358, %v5277, %v5521
    %v5523 = vsel %vm5360, %v5309, %v5522
    %v5524 = vsel %vm5362, %v5341, %v5523
    %v5525 = vsel %vm5350, %v5150, %v5118
    %v5526 = vsel %vm5352, %v5182, %v5525
    %v5527 = vsel %vm5354, %v5214, %v5526
    %v5528 = vsel %vm5356, %v5246, %v5527
    %v5529 = vsel %vm5358, %v5278, %v5528
    %v5530 = vsel %vm5360, %v5310, %v5529
    %v5531 = vsel %vm5362, %v5342, %v5530
    %v5532 = vsel %vm5350, %v5151, %v5119
    %v5533 = vsel %vm5352, %v5183, %v5532
    %v5534 = vsel %vm5354, %v5215, %v5533
    %v5535 = vsel %vm5356, %v5247, %v5534
    %v5536 = vsel %vm5358, %v5279, %v5535
    %v5537 = vsel %vm5360, %v5311, %v5536
    %v5538 = vsel %vm5362, %v5343, %v5537
    %v5539 = vsel %vm5350, %v5152, %v5120
    %v5540 = vsel %vm5352, %v5184, %v5539
    %v5541 = vsel %vm5354, %v5216, %v5540
    %v5542 = vsel %vm5356, %v5248, %v5541
    %v5543 = vsel %vm5358, %v5280, %v5542
    %v5544 = vsel %vm5360, %v5312, %v5543
    %v5545 = vsel %vm5362, %v5344, %v5544
    %v5546 = vsel %vm5350, %v5153, %v5121
    %v5547 = vsel %vm5352, %v5185, %v5546
    %v5548 = vsel %vm5354, %v5217, %v5547
    %v5549 = vsel %vm5356, %v5249, %v5548
    %v5550 = vsel %vm5358, %v5281, %v5549
    %v5551 = vsel %vm5360, %v5313, %v5550
    %v5552 = vsel %vm5362, %v5345, %v5551
    %v5553 = vsel %vm5350, %v5154, %v5122
    %v5554 = vsel %vm5352, %v5186, %v5553
    %v5555 = vsel %vm5354, %v5218, %v5554
    %v5556 = vsel %vm5356, %v5250, %v5555
    %v5557 = vsel %vm5358, %v5282, %v5556
    %v5558 = vsel %vm5360, %v5314, %v5557
    %v5559 = vsel %vm5362, %v5346, %v5558
    %v5560 = vsel %vm5350, %v5155, %v5123
    %v5561 = vsel %vm5352, %v5187, %v5560
    %v5562 = vsel %vm5354, %v5219, %v5561
    %v5563 = vsel %vm5356, %v5251, %v5562
    %v5564 = vsel %vm5358, %v5283, %v5563
    %v5565 = vsel %vm5360, %v5315, %v5564
    %v5566 = vsel %vm5362, %v5347, %v5565
    %v5567 = vsel %vm5350, %v5156, %v5124
    %v5568 = vsel %vm5352, %v5188, %v5567
    %v5569 = vsel %vm5354, %v5220, %v5568
    %v5570 = vsel %vm5356, %v5252, %v5569
    %v5571 = vsel %vm5358, %v5284, %v5570
    %v5572 = vsel %vm5360, %v5316, %v5571
    %v5573 = vsel %vm5362, %v5348, %v5572
    %v5574 = vsel %vm5350, %v5157, %v5125
    %v5575 = vsel %vm5352, %v5189, %v5574
    %v5576 = vsel %vm5354, %v5221, %v5575
    %v5577 = vsel %vm5356, %v5253, %v5576
    %v5578 = vsel %vm5358, %v5285, %v5577
    %v5579 = vsel %vm5360, %v5317, %v5578
    %v5580 = vsel %vm5362, %v5349, %v5579
    %v5581 = vpack.c.b16 %v5363, %v5363
    %v5582 = vpack.c.b16 %v5370, %v5370
    %v5583 = vpack.c.b16 %v5377, %v5377
    %v5584 = vpack.c.b16 %v5384, %v5384
    %v5585 = vpack.c.b16 %v5391, %v5391
    %v5586 = vpack.c.b16 %v5398, %v5398
    %v5587 = vpack.c.b16 %v5405, %v5405
    %v5588 = vpack.c.b16 %v5412, %v5412
    %v5589 = vpack.c.b16 %v5419, %v5419
    %v5590 = vpack.c.b16 %v5426, %v5426
    %v5591 = vpack.c.b16 %v5433, %v5433
    %v5592 = vpack.c.b16 %v5440, %v5440
    %v5593 = vpack.c.b16 %v5447, %v5447
    %v5594 = vpack.c.b16 %v5454, %v5454
    %v5595 = vpack.c.b16 %v5461, %v5461
    %v5596 = vpack.c.b16 %v5468, %v5468
    %v5597 = vpack.c.b16 %v5475, %v5475
    %v5598 = vpack.c.b16 %v5482, %v5482
    %v5599 = vpack.c.b16 %v5489, %v5489
    %v5600 = vpack.c.b16 %v5496, %v5496
    %v5601 = vpack.c.b16 %v5503, %v5503
    %v5602 = vpack.c.b16 %v5510, %v5510
    %v5603 = vpack.c.b16 %v5517, %v5517
    %v5604 = vpack.c.b16 %v5524, %v5524
    %v5605 = vpack.c.b16 %v5531, %v5531
    %v5606 = vpack.c.b16 %v5538, %v5538
    %v5607 = vpack.c.b16 %v5545, %v5545
    %v5608 = vpack.c.b16 %v5552, %v5552
    %v5609 = vpack.c.b16 %v5559, %v5559
    %v5610 = vpack.c.b16 %v5566, %v5566
    %v5611 = vpack.c.b16 %v5573, %v5573
    %v5612 = vpack.c.b16 %v5580, %v5580
    %v6157 = vunpack.c.l.b16 %v4318
    %v6158 = vunpack.c.l.b16 %v4319
    %v6159 = vunpack.c.l.b16 %v4320
    %v6160 = vunpack.c.l.b16 %v4321
    %v6161 = vunpack.c.l.b16 %v4322
    %v6162 = vunpack.c.l.b16 %v4323
    %v6163 = vunpack.c.l.b16 %v4324
    %v6164 = vunpack.c.l.b16 %v4325
    %v6165 = vunpack.c.l.b16 %v4326
    %v6166 = vunpack.c.l.b16 %v4327
    %v6167 = vunpack.c.l.b16 %v4328
    %v6168 = vunpack.c.l.b16 %v4329
    %v6169 = vunpack.c.l.b16 %v4330
    %v6170 = vunpack.c.l.b16 %v4331
    %v6171 = vunpack.c.l.b16 %v4332
    %v6172 = vunpack.c.l.b16 %v4333
    %v6173 = vunpack.c.l.b16 %v4334
    %v6174 = vunpack.c.l.b16 %v4335
    %v6175 = vunpack.c.l.b16 %v4336
    %v6176 = vunpack.c.l.b16 %v4337
    %v6177 = vunpack.c.l.b16 %v4338
    %v6178 = vunpack.c.l.b16 %v4339
    %v6179 = vunpack.c.l.b16 %v4340
    %v6180 = vunpack.c.l.b16 %v4341
    %v6181 = vunpack.c.l.b16 %v4342
    %v6182 = vunpack.c.l.b16 %v4343
    %v6183 = vunpack.c.l.b16 %v4344
    %v6184 = vunpack.c.l.b16 %v4345
    %v6185 = vunpack.c.l.b16 %v4346
    %v6186 = vunpack.c.l.b16 %v4347
    %v6187 = vunpack.c.l.b16 %v4348
    %v6188 = vunpack.c.l.b16 %v4349
    %v6189 = vunpack.c.l.b16 %v4350
    %v6190 = vunpack.c.l.b16 %v4351
    %v6191 = vunpack.c.l.b16 %v4352
    %v6192 = vunpack.c.l.b16 %v4353
    %v6193 = vunpack.c.l.b16 %v4354
    %v6194 = vunpack.c.l.b16 %v4355
    %v6195 = vunpack.c.l.b16 %v4356
    %v6196 = vunpack.c.l.b16 %v4357
    %v6197 = vunpack.c.l.b16 %v4358
    %v6198 = vunpack.c.l.b16 %v4359
    %v6199 = vunpack.c.l.b16 %v4360
    %v6200 = vunpack.c.l.b16 %v4361
    %v6201 = vunpack.c.l.b16 %v4362
    %v6202 = vunpack.c.l.b16 %v4363
    %v6203 = vunpack.c.l.b16 %v4364
    %v6204 = vunpack.c.l.b16 %v4365
    %v6205 = vunpack.c.l.b16 %v4366
    %v6206 = vunpack.c.l.b16 %v4367
    %v6207 = vunpack.c.l.b16 %v4368
    %v6208 = vunpack.c.l.b16 %v4369
    %v6209 = vunpack.c.l.b16 %v4370
    %v6210 = vunpack.c.l.b16 %v4371
    %v6211 = vunpack.c.l.b16 %v4372
    %v6212 = vunpack.c.l.b16 %v4373
    %v6213 = vunpack.c.l.b16 %v4374
    %v6214 = vunpack.c.l.b16 %v4375
    %v6215 = vunpack.c.l.b16 %v4376
    %v6216 = vunpack.c.l.b16 %v4377
    %v6217 = vunpack.c.l.b16 %v4378
    %v6218 = vunpack.c.l.b16 %v4379
    %v6219 = vunpack.c.l.b16 %v4380
    %v6220 = vunpack.c.l.b16 %v4381
    %v6221 = vunpack.c.l.b16 %v4382
    %v6222 = vunpack.c.l.b16 %v4383
    %v6223 = vunpack.c.l.b16 %v4384
    %v6224 = vunpack.c.l.b16 %v4385
    %v6225 = vunpack.c.l.b16 %v4386
    %v6226 = vunpack.c.l.b16 %v4387
    %v6227 = vunpack.c.l.b16 %v4388
    %v6228 = vunpack.c.l.b16 %v4389
    %v6229 = vunpack.c.l.b16 %v4390
    %v6230 = vunpack.c.l.b16 %v4391
    %v6231 = vunpack.c.l.b16 %v4392
    %v6232 = vunpack.c.l.b16 %v4393
    %v6233 = vunpack.c.l.b16 %v4394
    %v6234 = vunpack.c.l.b16 %v4395
    %v6235 = vunpack.c.l.b16 %v4396
    %v6236 = vunpack.c.l.b16 %v4397
    %v6237 = vunpack.c.l.b16 %v4398
    %v6238 = vunpack.c.l.b16 %v4399
    %v6239 = vunpack.c.l.b16 %v4400
    %v6240 = vunpack.c.l.b16 %v4401
    %v6241 = vunpack.c.l.b16 %v4402
    %v6242 = vunpack.c.l.b16 %v4403
    %v6243 = vunpack.c.l.b16 %v4404
    %v6244 = vunpack.c.l.b16 %v4405
    %v6245 = vunpack.c.l.b16 %v4406
    %v6246 = vunpack.c.l.b16 %v4407
    %v6247 = vunpack.c.l.b16 %v4408
    %v6248 = vunpack.c.l.b16 %v4409
    %v6249 = vunpack.c.l.b16 %v4410
    %v6250 = vunpack.c.l.b16 %v4411
    %v6251 = vunpack.c.l.b16 %v4412
    %v6252 = vunpack.c.l.b16 %v4413
    %v6253 = vunpack.c.l.b16 %v4414
    %v6254 = vunpack.c.l.b16 %v4415
    %v6255 = vunpack.c.l.b16 %v4416
    %v6256 = vunpack.c.l.b16 %v4417
    %v6257 = vunpack.c.l.b16 %v4418
    %v6258 = vunpack.c.l.b16 %v4419
    %v6259 = vunpack.c.l.b16 %v4420
    %v6260 = vunpack.c.l.b16 %v4421
    %v6261 = vunpack.c.l.b16 %v4422
    %v6262 = vunpack.c.l.b16 %v4423
    %v6263 = vunpack.c.l.b16 %v4424
    %v6264 = vunpack.c.l.b16 %v4425
    %v6265 = vunpack.c.l.b16 %v4426
    %v6266 = vunpack.c.l.b16 %v4427
    %v6267 = vunpack.c.l.b16 %v4428
    %v6268 = vunpack.c.l.b16 %v4429
    %v6269 = vunpack.c.l.b16 %v4430
    %v6270 = vunpack.c.l.b16 %v4431
    %v6271 = vunpack.c.l.b16 %v4432
    %v6272 = vunpack.c.l.b16 %v4433
    %v6273 = vunpack.c.l.b16 %v4434
    %v6274 = vunpack.c.l.b16 %v4435
    %v6275 = vunpack.c.l.b16 %v4436
    %v6276 = vunpack.c.l.b16 %v4437
    %v6277 = vunpack.c.l.b16 %v4438
    %v6278 = vunpack.c.l.b16 %v4439
    %v6279 = vunpack.c.l.b16 %v4440
    %v6280 = vunpack.c.l.b16 %v4441
    %v6281 = vunpack.c.l.b16 %v4442
    %v6282 = vunpack.c.l.b16 %v4443
    %v6283 = vunpack.c.l.b16 %v4444
    %v6284 = vunpack.c.l.b16 %v4445
    %v6285 = vunpack.c.l.b16 %v4446
    %v6286 = vunpack.c.l.b16 %v4447
    %v6287 = vunpack.c.l.b16 %v4448
    %v6288 = vunpack.c.l.b16 %v4449
    %v6289 = vunpack.c.l.b16 %v4450
    %v6290 = vunpack.c.l.b16 %v4451
    %v6291 = vunpack.c.l.b16 %v4452
    %v6292 = vunpack.c.l.b16 %v4453
    %v6293 = vunpack.c.l.b16 %v4454
    %v6294 = vunpack.c.l.b16 %v4455
    %v6295 = vunpack.c.l.b16 %v4456
    %v6296 = vunpack.c.l.b16 %v4457
    %v6297 = vunpack.c.l.b16 %v4458
    %v6298 = vunpack.c.l.b16 %v4459
    %v6299 = vunpack.c.l.b16 %v4460
    %v6300 = vunpack.c.l.b16 %v4461
    %v6301 = vunpack.c.l.b16 %v4462
    %v6302 = vunpack.c.l.b16 %v4463
    %v6303 = vunpack.c.l.b16 %v4464
    %v6304 = vunpack.c.l.b16 %v4465
    %v6305 = vunpack.c.l.b16 %v4466
    %v6306 = vunpack.c.l.b16 %v4467
    %v6307 = vunpack.c.l.b16 %v4468
    %v6308 = vunpack.c.l.b16 %v4469
    %v6309 = vunpack.c.l.b16 %v4470
    %v6310 = vunpack.c.l.b16 %v4471
    %v6311 = vunpack.c.l.b16 %v4472
    %v6312 = vunpack.c.l.b16 %v4473
    %v6313 = vunpack.c.l.b16 %v4474
    %v6314 = vunpack.c.l.b16 %v4475
    %v6315 = vunpack.c.l.b16 %v4476
    %v6316 = vunpack.c.l.b16 %v4477
    %v6317 = vunpack.c.l.b16 %v4478
    %v6318 = vunpack.c.l.b16 %v4479
    %v6319 = vunpack.c.l.b16 %v4480
    %v6320 = vunpack.c.l.b16 %v4481
    %v6321 = vunpack.c.l.b16 %v4482
    %v6322 = vunpack.c.l.b16 %v4483
    %v6323 = vunpack.c.l.b16 %v4484
    %v6324 = vunpack.c.l.b16 %v4485
    %v6325 = vunpack.c.l.b16 %v4486
    %v6326 = vunpack.c.l.b16 %v4487
    %v6327 = vunpack.c.l.b16 %v4488
    %v6328 = vunpack.c.l.b16 %v4489
    %v6329 = vunpack.c.l.b16 %v4490
    %v6330 = vunpack.c.l.b16 %v4491
    %v6331 = vunpack.c.l.b16 %v4492
    %v6332 = vunpack.c.l.b16 %v4493
    %v6333 = vunpack.c.l.b16 %v4494
    %v6334 = vunpack.c.l.b16 %v4495
    %v6335 = vunpack.c.l.b16 %v4496
    %v6336 = vunpack.c.l.b16 %v4497
    %v6337 = vunpack.c.l.b16 %v4498
    %v6338 = vunpack.c.l.b16 %v4499
    %v6339 = vunpack.c.l.b16 %v4500
    %v6340 = vunpack.c.l.b16 %v4501
    %v6341 = vunpack.c.l.b16 %v4502
    %v6342 = vunpack.c.l.b16 %v4503
    %v6343 = vunpack.c.l.b16 %v4504
    %v6344 = vunpack.c.l.b16 %v4505
    %v6345 = vunpack.c.l.b16 %v4506
    %v6346 = vunpack.c.l.b16 %v4507
    %v6347 = vunpack.c.l.b16 %v4508
    %v6348 = vunpack.c.l.b16 %v4509
    %v6349 = vunpack.c.l.b16 %v4510
    %v6350 = vunpack.c.l.b16 %v4511
    %v6351 = vunpack.c.l.b16 %v4512
    %v6352 = vunpack.c.l.b16 %v4513
    %v6353 = vunpack.c.l.b16 %v4514
    %v6354 = vunpack.c.l.b16 %v4515
    %v6355 = vunpack.c.l.b16 %v4516
    %v6356 = vunpack.c.l.b16 %v4517
    %v6357 = vunpack.c.l.b16 %v4518
    %v6358 = vunpack.c.l.b16 %v4519
    %v6359 = vunpack.c.l.b16 %v4520
    %v6360 = vunpack.c.l.b16 %v4521
    %v6361 = vunpack.c.l.b16 %v4522
    %v6362 = vunpack.c.l.b16 %v4523
    %v6363 = vunpack.c.l.b16 %v4524
    %v6364 = vunpack.c.l.b16 %v4525
    %v6365 = vunpack.c.l.b16 %v4526
    %v6366 = vunpack.c.l.b16 %v4527
    %v6367 = vunpack.c.l.b16 %v4528
    %v6368 = vunpack.c.l.b16 %v4529
    %v6369 = vunpack.c.l.b16 %v4530
    %v6370 = vunpack.c.l.b16 %v4531
    %v6371 = vunpack.c.l.b16 %v4532
    %v6372 = vunpack.c.l.b16 %v4533
    %v6373 = vunpack.c.l.b16 %v4534
    %v6374 = vunpack.c.l.b16 %v4535
    %v6375 = vunpack.c.l.b16 %v4536
    %v6376 = vunpack.c.l.b16 %v4537
    %v6377 = vunpack.c.l.b16 %v4538
    %v6378 = vunpack.c.l.b16 %v4539
    %v6379 = vunpack.c.l.b16 %v4540
    %v6380 = vunpack.c.l.b16 %v4541
    %v6381 = vunpack.c.l.b16 %v4542
    %v6382 = vunpack.c.l.b16 %v4543
    %v6383 = vunpack.c.l.b16 %v4544
    %v6384 = vunpack.c.l.b16 %v4545
    %v6385 = vunpack.c.l.b16 %v4546
    %v6386 = vunpack.c.l.b16 %v4547
    %v6387 = vunpack.c.l.b16 %v4548
    %v6388 = vunpack.c.l.b16 %v4549
    %v6389 = vunpack.c.l.b16 %v4550
    %v6390 = vunpack.c.l.b16 %v4551
    %v6391 = vunpack.c.l.b16 %v4552
    %v6392 = vunpack.c.l.b16 %v4553
    %v6393 = vunpack.c.l.b16 %v4554
    %v6394 = vunpack.c.l.b16 %v4555
    %v6395 = vunpack.c.l.b16 %v4556
    %v6396 = vunpack.c.l.b16 %v4557
    %v6397 = vunpack.c.l.b16 %v4558
    %v6398 = vunpack.c.l.b16 %v4559
    %v6399 = vunpack.c.l.b16 %v4560
    %v6400 = vunpack.c.l.b16 %v4561
    %v6401 = vunpack.c.l.b16 %v4562
    %v6402 = vunpack.c.l.b16 %v4563
    %v6403 = vunpack.c.l.b16 %v4564
    %v6404 = vunpack.c.l.b16 %v4565
    %v6405 = vunpack.c.l.b16 %v4566
    %v6406 = vunpack.c.l.b16 %v4567
    %v6407 = vunpack.c.l.b16 %v4568
    %v6408 = vunpack.c.l.b16 %v4569
    %v6409 = vunpack.c.l.b16 %v4570
    %v6410 = vunpack.c.l.b16 %v4571
    %v6411 = vunpack.c.l.b16 %v4572
    %v6412 = vunpack.c.l.b16 %v4573
    %v6413 = vunpack.c.l.b16 %v4574
    %v6414 = vunpack.c.l.b16 %v4575
    %v6415 = vunpack.c.l.b16 %v4576
    %v6416 = vunpack.c.l.b16 %v4577
    %v6417 = vunpack.c.l.b16 %v4578
    %v6418 = vunpack.c.l.b16 %v4579
    %v6419 = vunpack.c.l.b16 %v4580
    %v6420 = vunpack.c.l.b16 %v4581
    %v6421 = vunpack.c.l.b16 %v4582
    %v6422 = vunpack.c.l.b16 %v4583
    %v6423 = vunpack.c.l.b16 %v4584
    %v6424 = vunpack.c.l.b16 %v4585
    %v6425 = vunpack.c.l.b16 %v4586
    %v6426 = vunpack.c.l.b16 %v4587
    %v6427 = vunpack.c.l.b16 %v4588
    %v6428 = vunpack.c.l.b16 %v4589
    %v6429 = vunpack.c.l.b16 %v4590
    %v6430 = vunpack.c.l.b16 %v4591
    %v6431 = vunpack.c.l.b16 %v4592
    %v6432 = vunpack.c.l.b16 %v4593
    %v6433 = vunpack.c.l.b16 %v4594
    %v6434 = vunpack.c.l.b16 %v4595
    %v6435 = vunpack.c.l.b16 %v4596
    %v6436 = vunpack.c.l.b16 %v4597
    %v6437 = vunpack.c.l.b16 %v4598
    %v6438 = vunpack.c.l.b16 %v4599
    %v6439 = vunpack.c.l.b16 %v4600
    %v6440 = vunpack.c.l.b16 %v4601
    %v6441 = vunpack.c.l.b16 %v4602
    %v6442 = vunpack.c.l.b16 %v4603
    %v6443 = vunpack.c.l.b16 %v4604
    %v6444 = vunpack.c.l.b16 %v4605
    %v6445 = vunpack.c.l.b16 %v4606
    %v6446 = vunpack.c.l.b16 %v4607
    %v6447 = vunpack.c.l.b16 %v4608
    %v6448 = vunpack.c.l.b16 %v4609
    %v6449 = vunpack.c.l.b16 %v4610
    %v6450 = vunpack.c.l.b16 %v4611
    %v6451 = vunpack.c.l.b16 %v4612
    %v6452 = vunpack.c.l.b16 %v4613
    %v6453 = vunpack.c.l.b16 %v4614
    %v6454 = vunpack.c.l.b16 %v4615
    %v6455 = vunpack.c.l.b16 %v4616
    %v6456 = vunpack.c.l.b16 %v4617
    %v6457 = vunpack.c.l.b16 %v4618
    %v6458 = vunpack.c.l.b16 %v4619
    %v6459 = vunpack.c.l.b16 %v4620
    %v6460 = vunpack.c.l.b16 %v4621
    %v6461 = vunpack.c.l.b16 %v4622
    %v6462 = vunpack.c.l.b16 %v4623
    %v6463 = vunpack.c.l.b16 %v4624
    %v6464 = vunpack.c.l.b16 %v4625
    %v6465 = vunpack.c.l.b16 %v4626
    %v6466 = vunpack.c.l.b16 %v4627
    %v6467 = vunpack.c.l.b16 %v4628
    %v6468 = vunpack.c.l.b16 %v4629
    %v6469 = vunpack.c.l.b16 %v4630
    %v6470 = vunpack.c.l.b16 %v4631
    %v6471 = vunpack.c.l.b16 %v4632
    %v6472 = vunpack.c.l.b16 %v4633
    %v6473 = vunpack.c.l.b16 %v4634
    %v6474 = vunpack.c.l.b16 %v4635
    %v6475 = vunpack.c.l.b16 %v4636
    %v6476 = vunpack.c.l.b16 %v4637
    %v6477 = vunpack.c.l.b16 %v4638
    %v6478 = vunpack.c.l.b16 %v4639
    %v6479 = vunpack.c.l.b16 %v4640
    %v6480 = vunpack.c.l.b16 %v4641
    %v6481 = vunpack.c.l.b16 %v4642
    %v6482 = vunpack.c.l.b16 %v4643
    %v6483 = vunpack.c.l.b16 %v4644
    %v6484 = vunpack.c.l.b16 %v4645
    %v6485 = vunpack.c.l.b16 %v4646
    %v6486 = vunpack.c.l.b16 %v4647
    %v6487 = vunpack.c.l.b16 %v4648
    %v6488 = vunpack.c.l.b16 %v4649
    %v6489 = vunpack.c.l.b16 %v4650
    %v6490 = vunpack.c.l.b16 %v4651
    %v6491 = vunpack.c.l.b16 %v4652
    %v6492 = vunpack.c.l.b16 %v4653
    %v6493 = vunpack.c.l.b16 %v4654
    %v6494 = vunpack.c.l.b16 %v4655
    %v6495 = vunpack.c.l.b16 %v4656
    %v6496 = vunpack.c.l.b16 %v4657
    %v6497 = vunpack.c.l.b16 %v4658
    %v6498 = vunpack.c.l.b16 %v4659
    %v6499 = vunpack.c.l.b16 %v4660
    %v6500 = vunpack.c.l.b16 %v4661
    %v6501 = vunpack.c.l.b16 %v4662
    %v6502 = vunpack.c.l.b16 %v4663
    %v6503 = vunpack.c.l.b16 %v4664
    %v6504 = vunpack.c.l.b16 %v4665
    %v6505 = vunpack.c.l.b16 %v4666
    %v6506 = vunpack.c.l.b16 %v4667
    %v6507 = vunpack.c.l.b16 %v4668
    %v6508 = vunpack.c.l.b16 %v4669
    %v6509 = vunpack.c.l.b16 %v4670
    %v6510 = vunpack.c.l.b16 %v4671
    %v6511 = vunpack.c.l.b16 %v4672
    %v6512 = vunpack.c.l.b16 %v4673
    %v6513 = vunpack.c.l.b16 %v4674
    %v6514 = vunpack.c.l.b16 %v4675
    %v6515 = vunpack.c.l.b16 %v4676
    %v6516 = vunpack.c.l.b16 %v4677
    %v6517 = vunpack.c.l.b16 %v4678
    %v6518 = vunpack.c.l.b16 %v4679
    %v6519 = vunpack.c.l.b16 %v4680
    %v6520 = vunpack.c.l.b16 %v4681
    %v6521 = vunpack.c.l.b16 %v4682
    %v6522 = vunpack.c.l.b16 %v4683
    %v6523 = vunpack.c.l.b16 %v4684
    %v6524 = vunpack.c.l.b16 %v4685
    %v6525 = vunpack.c.l.b16 %v4686
    %v6526 = vunpack.c.l.b16 %v4687
    %v6527 = vunpack.c.l.b16 %v4688
    %v6528 = vunpack.c.l.b16 %v4689
    %v6529 = vunpack.c.l.b16 %v4690
    %v6530 = vunpack.c.l.b16 %v4691
    %v6531 = vunpack.c.l.b16 %v4692
    %v6532 = vunpack.c.l.b16 %v4693
    %v6533 = vunpack.c.l.b16 %v4694
    %v6534 = vunpack.c.l.b16 %v4695
    %v6535 = vunpack.c.l.b16 %v4696
    %v6536 = vunpack.c.l.b16 %v4697
    %v6537 = vunpack.c.l.b16 %v4698
    %v6538 = vunpack.c.l.b16 %v4699
    %v6539 = vunpack.c.l.b16 %v4700
    %v6540 = vunpack.c.l.b16 %v4701
    %v6541 = vunpack.c.l.b16 %v4702
    %v6542 = vunpack.c.l.b16 %v4703
    %v6543 = vunpack.c.l.b16 %v4704
    %v6544 = vunpack.c.l.b16 %v4705
    %v6545 = vunpack.c.l.b16 %v4706
    %v6546 = vunpack.c.l.b16 %v4707
    %v6547 = vunpack.c.l.b16 %v4708
    %v6548 = vunpack.c.l.b16 %v4709
    %v6549 = vunpack.c.l.b16 %v4710
    %v6550 = vunpack.c.l.b16 %v4711
    %v6551 = vunpack.c.l.b16 %v4712
    %v6552 = vunpack.c.l.b16 %v4713
    %v6553 = vunpack.c.l.b16 %v4714
    %v6554 = vunpack.c.l.b16 %v4715
    %v6555 = vunpack.c.l.b16 %v4716
    %v6556 = vunpack.c.l.b16 %v4717
    %v6557 = vunpack.c.l.b16 %v4718
    %v6558 = vunpack.c.l.b16 %v4719
    %v6559 = vunpack.c.l.b16 %v4720
    %v6560 = vunpack.c.l.b16 %v4721
    %v6561 = vunpack.c.l.b16 %v4722
    %v6562 = vunpack.c.l.b16 %v4723
    %v6563 = vunpack.c.l.b16 %v4724
    %v6564 = vunpack.c.l.b16 %v4725
    %v6565 = vunpack.c.l.b16 %v4726
    %v6566 = vunpack.c.l.b16 %v4727
    %v6567 = vunpack.c.l.b16 %v4728
    %v6568 = vunpack.c.l.b16 %v4729
    %v6569 = vunpack.c.l.b16 %v4730
    %v6570 = vunpack.c.l.b16 %v4731
    %v6571 = vunpack.c.l.b16 %v4732
    %v6572 = vunpack.c.l.b16 %v4733
    %v6573 = vunpack.c.l.b16 %v4734
    %v6574 = vunpack.c.l.b16 %v4735
    %v6575 = vunpack.c.l.b16 %v4736
    %v6576 = vunpack.c.l.b16 %v4737
    %v6577 = vunpack.c.l.b16 %v4738
    %v6578 = vunpack.c.l.b16 %v4739
    %v6579 = vunpack.c.l.b16 %v4740
    %v6580 = vunpack.c.l.b16 %v4741
    %v6581 = vunpack.c.l.b16 %v4742
    %v6582 = vunpack.c.l.b16 %v4743
    %v6583 = vunpack.c.l.b16 %v4744
    %v6584 = vunpack.c.l.b16 %v4745
    %v6585 = vunpack.c.l.b16 %v4746
    %v6586 = vunpack.c.l.b16 %v4747
    %v6587 = vunpack.c.l.b16 %v4748
    %v6588 = vunpack.c.l.b16 %v4749
    %v6589 = vunpack.c.l.b16 %v4750
    %v6590 = vunpack.c.l.b16 %v4751
    %v6591 = vunpack.c.l.b16 %v4752
    %v6592 = vunpack.c.l.b16 %v4753
    %v6593 = vunpack.c.l.b16 %v4754
    %v6594 = vunpack.c.l.b16 %v4755
    %v6595 = vunpack.c.l.b16 %v4756
    %v6596 = vunpack.c.l.b16 %v4757
    %v6597 = vunpack.c.l.b16 %v4758
    %v6598 = vunpack.c.l.b16 %v4759
    %v6599 = vunpack.c.l.b16 %v4760
    %v6600 = vunpack.c.l.b16 %v4761
    %v6601 = vunpack.c.l.b16 %v4762
    %v6602 = vunpack.c.l.b16 %v4763
    %v6603 = vunpack.c.l.b16 %v4764
    %v6604 = vunpack.c.l.b16 %v4765
    %v6605 = vunpack.c.l.b16 %v4766
    %v6606 = vunpack.c.l.b16 %v4767
    %v6607 = vunpack.c.l.b16 %v4768
    %v6608 = vunpack.c.l.b16 %v4769
    %v6609 = vunpack.c.l.b16 %v4770
    %v6610 = vunpack.c.l.b16 %v4771
    %v6611 = vunpack.c.l.b16 %v4772
    %v6612 = vunpack.c.l.b16 %v4773
    %v6613 = vunpack.c.l.b16 %v4774
    %v6614 = vunpack.c.l.b16 %v4775
    %v6615 = vunpack.c.l.b16 %v4776
    %v6616 = vunpack.c.l.b16 %v4777
    %v6617 = vunpack.c.l.b16 %v4778
    %v6618 = vunpack.c.l.b16 %v4779
    %v6619 = vunpack.c.l.b16 %v4780
    %v6620 = vunpack.c.l.b16 %v4781
    %v6621 = vunpack.c.l.b16 %v4782
    %v6622 = vunpack.c.l.b16 %v4783
    %v6623 = vunpack.c.l.b16 %v4784
    %v6624 = vunpack.c.l.b16 %v4785
    %v6625 = vunpack.c.l.b16 %v4786
    %v6626 = vunpack.c.l.b16 %v4787
    %v6627 = vunpack.c.l.b16 %v4788
    %v6628 = vunpack.c.l.b16 %v4789
    %v6629 = vunpack.c.l.b16 %v4790
    %v6630 = vunpack.c.l.b16 %v4791
    %v6631 = vunpack.c.l.b16 %v4792
    %v6632 = vunpack.c.l.b16 %v4793
    %v6633 = vunpack.c.l.b16 %v4794
    %v6634 = vunpack.c.l.b16 %v4795
    %v6635 = vunpack.c.l.b16 %v4796
    %v6636 = vunpack.c.l.b16 %v4797
    %v6637 = vunpack.c.l.b16 %v4798
    %v6638 = vunpack.c.l.b16 %v4799
    %v6639 = vunpack.c.l.b16 %v4800
    %v6640 = vunpack.c.l.b16 %v4801
    %v6641 = vunpack.c.l.b16 %v4802
    %v6642 = vunpack.c.l.b16 %v4803
    %v6643 = vunpack.c.l.b16 %v4804
    %v6644 = vunpack.c.l.b16 %v4805
    %v6645 = vunpack.c.l.b16 %v4806
    %v6646 = vunpack.c.l.b16 %v4807
    %v6647 = vunpack.c.l.b16 %v4808
    %v6648 = vunpack.c.l.b16 %v4809
    %v6649 = vunpack.c.l.b16 %v4810
    %v6650 = vunpack.c.l.b16 %v4811
    %v6651 = vunpack.c.l.b16 %v4812
    %v6652 = vunpack.c.l.b16 %v4813
    %v6653 = vunpack.c.l.b16 %v4814
    %v6654 = vunpack.c.l.b16 %v4815
    %v6655 = vunpack.c.l.b16 %v4816
    %v6656 = vunpack.c.l.b16 %v4817
    %v6657 = vunpack.c.l.b16 %v4818
    %v6658 = vunpack.c.l.b16 %v4819
    %v6659 = vunpack.c.l.b16 %v4820
    %v6660 = vunpack.c.l.b16 %v4821
    %v6661 = vunpack.c.l.b16 %v4822
    %v6662 = vunpack.c.l.b16 %v4823
    %v6663 = vunpack.c.l.b16 %v4824
    %v6664 = vunpack.c.l.b16 %v4825
    %v6665 = vunpack.c.l.b16 %v4826
    %v6666 = vunpack.c.l.b16 %v4827
    %v6667 = vunpack.c.l.b16 %v4828
    %v6668 = vunpack.c.l.b16 %v4829
    %v6669 = vpack.c.b16 %v6158, %v6157
    %v6670 = vpack.c.b16 %v6160, %v6159
    %v6671 = vpack.c.b16 %v6162, %v6161
    %v6672 = vpack.c.b16 %v6164, %v6163
    %v6673 = vpack.c.b16 %v6166, %v6165
    %v6674 = vpack.c.b16 %v6168, %v6167
    %v6675 = vpack.c.b16 %v6170, %v6169
    %v6676 = vpack.c.b16 %v6172, %v6171
    %v6677 = vpack.c.b16 %v6174, %v6173
    %v6678 = vpack.c.b16 %v6176, %v6175
    %v6679 = vpack.c.b16 %v6178, %v6177
    %v6680 = vpack.c.b16 %v6180, %v6179
    %v6681 = vpack.c.b16 %v6182, %v6181
    %v6682 = vpack.c.b16 %v6184, %v6183
    %v6683 = vpack.c.b16 %v6186, %v6185
    %v6684 = vpack.c.b16 %v6188, %v6187
    %v6685 = vpack.c.b16 %v6190, %v6189
    %v6686 = vpack.c.b16 %v6192, %v6191
    %v6687 = vpack.c.b16 %v6194, %v6193
    %v6688 = vpack.c.b16 %v6196, %v6195
    %v6689 = vpack.c.b16 %v6198, %v6197
    %v6690 = vpack.c.b16 %v6200, %v6199
    %v6691 = vpack.c.b16 %v6202, %v6201
    %v6692 = vpack.c.b16 %v6204, %v6203
    %v6693 = vpack.c.b16 %v6206, %v6205
    %v6694 = vpack.c.b16 %v6208, %v6207
    %v6695 = vpack.c.b16 %v6210, %v6209
    %v6696 = vpack.c.b16 %v6212, %v6211
    %v6697 = vpack.c.b16 %v6214, %v6213
    %v6698 = vpack.c.b16 %v6216, %v6215
    %v6699 = vpack.c.b16 %v6218, %v6217
    %v6700 = vpack.c.b16 %v6220, %v6219
    %v6701 = vpack.c.b16 %v6222, %v6221
    %v6702 = vpack.c.b16 %v6224, %v6223
    %v6703 = vpack.c.b16 %v6226, %v6225
    %v6704 = vpack.c.b16 %v6228, %v6227
    %v6705 = vpack.c.b16 %v6230, %v6229
    %v6706 = vpack.c.b16 %v6232, %v6231
    %v6707 = vpack.c.b16 %v6234, %v6233
    %v6708 = vpack.c.b16 %v6236, %v6235
    %v6709 = vpack.c.b16 %v6238, %v6237
    %v6710 = vpack.c.b16 %v6240, %v6239
    %v6711 = vpack.c.b16 %v6242, %v6241
    %v6712 = vpack.c.b16 %v6244, %v6243
    %v6713 = vpack.c.b16 %v6246, %v6245
    %v6714 = vpack.c.b16 %v6248, %v6247
    %v6715 = vpack.c.b16 %v6250, %v6249
    %v6716 = vpack.c.b16 %v6252, %v6251
    %v6717 = vpack.c.b16 %v6254, %v6253
    %v6718 = vpack.c.b16 %v6256, %v6255
    %v6719 = vpack.c.b16 %v6258, %v6257
    %v6720 = vpack.c.b16 %v6260, %v6259
    %v6721 = vpack.c.b16 %v6262, %v6261
    %v6722 = vpack.c.b16 %v6264, %v6263
    %v6723 = vpack.c.b16 %v6266, %v6265
    %v6724 = vpack.c.b16 %v6268, %v6267
    %v6725 = vpack.c.b16 %v6270, %v6269
    %v6726 = vpack.c.b16 %v6272, %v6271
    %v6727 = vpack.c.b16 %v6274, %v6273
    %v6728 = vpack.c.b16 %v6276, %v6275
    %v6729 = vpack.c.b16 %v6278, %v6277
    %v6730 = vpack.c.b16 %v6280, %v6279
    %v6731 = vpack.c.b16 %v6282, %v6281
    %v6732 = vpack.c.b16 %v6284, %v6283
    %v6733 = vpack.c.b16 %v6286, %v6285
    %v6734 = vpack.c.b16 %v6288, %v6287
    %v6735 = vpack.c.b16 %v6290, %v6289
    %v6736 = vpack.c.b16 %v6292, %v6291
    %v6737 = vpack.c.b16 %v6294, %v6293
    %v6738 = vpack.c.b16 %v6296, %v6295
    %v6739 = vpack.c.b16 %v6298, %v6297
    %v6740 = vpack.c.b16 %v6300, %v6299
    %v6741 = vpack.c.b16 %v6302, %v6301
    %v6742 = vpack.c.b16 %v6304, %v6303
    %v6743 = vpack.c.b16 %v6306, %v6305
    %v6744 = vpack.c.b16 %v6308, %v6307
    %v6745 = vpack.c.b16 %v6310, %v6309
    %v6746 = vpack.c.b16 %v6312, %v6311
    %v6747 = vpack.c.b16 %v6314, %v6313
    %v6748 = vpack.c.b16 %v6316, %v6315
    %v6749 = vpack.c.b16 %v6318, %v6317
    %v6750 = vpack.c.b16 %v6320, %v6319
    %v6751 = vpack.c.b16 %v6322, %v6321
    %v6752 = vpack.c.b16 %v6324, %v6323
    %v6753 = vpack.c.b16 %v6326, %v6325
    %v6754 = vpack.c.b16 %v6328, %v6327
    %v6755 = vpack.c.b16 %v6330, %v6329
    %v6756 = vpack.c.b16 %v6332, %v6331
    %v6757 = vpack.c.b16 %v6334, %v6333
    %v6758 = vpack.c.b16 %v6336, %v6335
    %v6759 = vpack.c.b16 %v6338, %v6337
    %v6760 = vpack.c.b16 %v6340, %v6339
    %v6761 = vpack.c.b16 %v6342, %v6341
    %v6762 = vpack.c.b16 %v6344, %v6343
    %v6763 = vpack.c.b16 %v6346, %v6345
    %v6764 = vpack.c.b16 %v6348, %v6347
    %v6765 = vpack.c.b16 %v6350, %v6349
    %v6766 = vpack.c.b16 %v6352, %v6351
    %v6767 = vpack.c.b16 %v6354, %v6353
    %v6768 = vpack.c.b16 %v6356, %v6355
    %v6769 = vpack.c.b16 %v6358, %v6357
    %v6770 = vpack.c.b16 %v6360, %v6359
    %v6771 = vpack.c.b16 %v6362, %v6361
    %v6772 = vpack.c.b16 %v6364, %v6363
    %v6773 = vpack.c.b16 %v6366, %v6365
    %v6774 = vpack.c.b16 %v6368, %v6367
    %v6775 = vpack.c.b16 %v6370, %v6369
    %v6776 = vpack.c.b16 %v6372, %v6371
    %v6777 = vpack.c.b16 %v6374, %v6373
    %v6778 = vpack.c.b16 %v6376, %v6375
    %v6779 = vpack.c.b16 %v6378, %v6377
    %v6780 = vpack.c.b16 %v6380, %v6379
    %v6781 = vpack.c.b16 %v6382, %v6381
    %v6782 = vpack.c.b16 %v6384, %v6383
    %v6783 = vpack.c.b16 %v6386, %v6385
    %v6784 = vpack.c.b16 %v6388, %v6387
    %v6785 = vpack.c.b16 %v6390, %v6389
    %v6786 = vpack.c.b16 %v6392, %v6391
    %v6787 = vpack.c.b16 %v6394, %v6393
    %v6788 = vpack.c.b16 %v6396, %v6395
    %v6789 = vpack.c.b16 %v6398, %v6397
    %v6790 = vpack.c.b16 %v6400, %v6399
    %v6791 = vpack.c.b16 %v6402, %v6401
    %v6792 = vpack.c.b16 %v6404, %v6403
    %v6793 = vpack.c.b16 %v6406, %v6405
    %v6794 = vpack.c.b16 %v6408, %v6407
    %v6795 = vpack.c.b16 %v6410, %v6409
    %v6796 = vpack.c.b16 %v6412, %v6411
    %v6797 = vpack.c.b16 %v6414, %v6413
    %v6798 = vpack.c.b16 %v6416, %v6415
    %v6799 = vpack.c.b16 %v6418, %v6417
    %v6800 = vpack.c.b16 %v6420, %v6419
    %v6801 = vpack.c.b16 %v6422, %v6421
    %v6802 = vpack.c.b16 %v6424, %v6423
    %v6803 = vpack.c.b16 %v6426, %v6425
    %v6804 = vpack.c.b16 %v6428, %v6427
    %v6805 = vpack.c.b16 %v6430, %v6429
    %v6806 = vpack.c.b16 %v6432, %v6431
    %v6807 = vpack.c.b16 %v6434, %v6433
    %v6808 = vpack.c.b16 %v6436, %v6435
    %v6809 = vpack.c.b16 %v6438, %v6437
    %v6810 = vpack.c.b16 %v6440, %v6439
    %v6811 = vpack.c.b16 %v6442, %v6441
    %v6812 = vpack.c.b16 %v6444, %v6443
    %v6813 = vpack.c.b16 %v6446, %v6445
    %v6814 = vpack.c.b16 %v6448, %v6447
    %v6815 = vpack.c.b16 %v6450, %v6449
    %v6816 = vpack.c.b16 %v6452, %v6451
    %v6817 = vpack.c.b16 %v6454, %v6453
    %v6818 = vpack.c.b16 %v6456, %v6455
    %v6819 = vpack.c.b16 %v6458, %v6457
    %v6820 = vpack.c.b16 %v6460, %v6459
    %v6821 = vpack.c.b16 %v6462, %v6461
    %v6822 = vpack.c.b16 %v6464, %v6463
    %v6823 = vpack.c.b16 %v6466, %v6465
    %v6824 = vpack.c.b16 %v6468, %v6467
    %v6825 = vpack.c.b16 %v6470, %v6469
    %v6826 = vpack.c.b16 %v6472, %v6471
    %v6827 = vpack.c.b16 %v6474, %v6473
    %v6828 = vpack.c.b16 %v6476, %v6475
    %v6829 = vpack.c.b16 %v6478, %v6477
    %v6830 = vpack.c.b16 %v6480, %v6479
    %v6831 = vpack.c.b16 %v6482, %v6481
    %v6832 = vpack.c.b16 %v6484, %v6483
    %v6833 = vpack.c.b16 %v6486, %v6485
    %v6834 = vpack.c.b16 %v6488, %v6487
    %v6835 = vpack.c.b16 %v6490, %v6489
    %v6836 = vpack.c.b16 %v6492, %v6491
    %v6837 = vpack.c.b16 %v6494, %v6493
    %v6838 = vpack.c.b16 %v6496, %v6495
    %v6839 = vpack.c.b16 %v6498, %v6497
    %v6840 = vpack.c.b16 %v6500, %v6499
    %v6841 = vpack.c.b16 %v6502, %v6501
    %v6842 = vpack.c.b16 %v6504, %v6503
    %v6843 = vpack.c.b16 %v6506, %v6505
    %v6844 = vpack.c.b16 %v6508, %v6507
    %v6845 = vpack.c.b16 %v6510, %v6509
    %v6846 = vpack.c.b16 %v6512, %v6511
    %v6847 = vpack.c.b16 %v6514, %v6513
    %v6848 = vpack.c.b16 %v6516, %v6515
    %v6849 = vpack.c.b16 %v6518, %v6517
    %v6850 = vpack.c.b16 %v6520, %v6519
    %v6851 = vpack.c.b16 %v6522, %v6521
    %v6852 = vpack.c.b16 %v6524, %v6523
    %v6853 = vpack.c.b16 %v6526, %v6525
    %v6854 = vpack.c.b16 %v6528, %v6527
    %v6855 = vpack.c.b16 %v6530, %v6529
    %v6856 = vpack.c.b16 %v6532, %v6531
    %v6857 = vpack.c.b16 %v6534, %v6533
    %v6858 = vpack.c.b16 %v6536, %v6535
    %v6859 = vpack.c.b16 %v6538, %v6537
    %v6860 = vpack.c.b16 %v6540, %v6539
    %v6861 = vpack.c.b16 %v6542, %v6541
    %v6862 = vpack.c.b16 %v6544, %v6543
    %v6863 = vpack.c.b16 %v6546, %v6545
    %v6864 = vpack.c.b16 %v6548, %v6547
    %v6865 = vpack.c.b16 %v6550, %v6549
    %v6866 = vpack.c.b16 %v6552, %v6551
    %v6867 = vpack.c.b16 %v6554, %v6553
    %v6868 = vpack.c.b16 %v6556, %v6555
    %v6869 = vpack.c.b16 %v6558, %v6557
    %v6870 = vpack.c.b16 %v6560, %v6559
    %v6871 = vpack.c.b16 %v6562, %v6561
    %v6872 = vpack.c.b16 %v6564, %v6563
    %v6873 = vpack.c.b16 %v6566, %v6565
    %v6874 = vpack.c.b16 %v6568, %v6567
    %v6875 = vpack.c.b16 %v6570, %v6569
    %v6876 = vpack.c.b16 %v6572, %v6571
    %v6877 = vpack.c.b16 %v6574, %v6573
    %v6878 = vpack.c.b16 %v6576, %v6575
    %v6879 = vpack.c.b16 %v6578, %v6577
    %v6880 = vpack.c.b16 %v6580, %v6579
    %v6881 = vpack.c.b16 %v6582, %v6581
    %v6882 = vpack.c.b16 %v6584, %v6583
    %v6883 = vpack.c.b16 %v6586, %v6585
    %v6884 = vpack.c.b16 %v6588, %v6587
    %v6885 = vpack.c.b16 %v6590, %v6589
    %v6886 = vpack.c.b16 %v6592, %v6591
    %v6887 = vpack.c.b16 %v6594, %v6593
    %v6888 = vpack.c.b16 %v6596, %v6595
    %v6889 = vpack.c.b16 %v6598, %v6597
    %v6890 = vpack.c.b16 %v6600, %v6599
    %v6891 = vpack.c.b16 %v6602, %v6601
    %v6892 = vpack.c.b16 %v6604, %v6603
    %v6893 = vpack.c.b16 %v6606, %v6605
    %v6894 = vpack.c.b16 %v6608, %v6607
    %v6895 = vpack.c.b16 %v6610, %v6609
    %v6896 = vpack.c.b16 %v6612, %v6611
    %v6897 = vpack.c.b16 %v6614, %v6613
    %v6898 = vpack.c.b16 %v6616, %v6615
    %v6899 = vpack.c.b16 %v6618, %v6617
    %v6900 = vpack.c.b16 %v6620, %v6619
    %v6901 = vpack.c.b16 %v6622, %v6621
    %v6902 = vpack.c.b16 %v6624, %v6623
    %v6903 = vpack.c.b16 %v6626, %v6625
    %v6904 = vpack.c.b16 %v6628, %v6627
    %v6905 = vpack.c.b16 %v6630, %v6629
    %v6906 = vpack.c.b16 %v6632, %v6631
    %v6907 = vpack.c.b16 %v6634, %v6633
    %v6908 = vpack.c.b16 %v6636, %v6635
    %v6909 = vpack.c.b16 %v6638, %v6637
    %v6910 = vpack.c.b16 %v6640, %v6639
    %v6911 = vpack.c.b16 %v6642, %v6641
    %v6912 = vpack.c.b16 %v6644, %v6643
    %v6913 = vpack.c.b16 %v6646, %v6645
    %v6914 = vpack.c.b16 %v6648, %v6647
    %v6915 = vpack.c.b16 %v6650, %v6649
    %v6916 = vpack.c.b16 %v6652, %v6651
    %v6917 = vpack.c.b16 %v6654, %v6653
    %v6918 = vpack.c.b16 %v6656, %v6655
    %v6919 = vpack.c.b16 %v6658, %v6657
    %v6920 = vpack.c.b16 %v6660, %v6659
    %v6921 = vpack.c.b16 %v6662, %v6661
    %v6922 = vpack.c.b16 %v6664, %v6663
    %v6923 = vpack.c.b16 %v6666, %v6665
    %v6924 = vpack.c.b16 %v6668, %v6667
    %7181 = vmatprep.subr.bf16.mxu0 0
    %7182 = vmatpush1.bf16.msra.mxu0 %v6676
    %7183 = vmatprep.subr.bf16.mxu0 0
    %7184 = vmatpush1.bf16.msra.mxu0 %v6675
    %7185 = vmatprep.subr.bf16.mxu0 0
    %7186 = vmatpush1.bf16.msra.mxu0 %v6674
    %7187 = vmatprep.subr.bf16.mxu0 0
    %7188 = vmatpush1.bf16.msra.mxu0 %v6673
    %7189 = vmatprep.subr.bf16.mxu0 0
    %7190 = vmatpush1.bf16.msra.mxu0 %v6672
    %7191 = vmatprep.subr.bf16.mxu0 0
    %7192 = vmatpush1.bf16.msra.mxu0 %v6671
    %7193 = vmatprep.subr.bf16.mxu0 0
    %7194 = vmatpush1.bf16.msra.mxu0 %v6670
    %7195 = vmatprep.subr.bf16.mxu0 0
    %7196 = vmatpush1.bf16.msra.mxu0 %v6669
    %7197 = vmatprep.subr.bf16.mxu0 0
    %7198 = vmatpush2.bf16.msra.mxu0 %v6684
    %7199 = vmatprep.subr.bf16.mxu0 0
    %7200 = vmatpush2.bf16.msra.mxu0 %v6683
    %7201 = vmatprep.subr.bf16.mxu0 0
    %7202 = vmatpush2.bf16.msra.mxu0 %v6682
    %7203 = vmatprep.subr.bf16.mxu0 0
    %7204 = vmatpush2.bf16.msra.mxu0 %v6681
    %7205 = vmatprep.subr.bf16.mxu0 0
    %7206 = vmatpush2.bf16.msra.mxu0 %v6680
    %7207 = vmatprep.subr.bf16.mxu0 0
    %7208 = vmatpush2.bf16.msra.mxu0 %v6679
    %7209 = vmatprep.subr.bf16.mxu0 0
    %7210 = vmatpush2.bf16.msra.mxu0 %v6678
    %7211 = vmatprep.subr.bf16.mxu0 0
    %7212 = vmatpush2.bf16.msra.mxu0 %v6677
    %7213 = vmatprep.mubr.bf16.mxu0 %v5582
    %7214 = vmatmul.mubr.bf16.gmra.mxu0 %v5581
    %v7215 = vpop.f32.mrf.mxu0
    %v7216 = vadd.f32 %v4836, %v7215
    %v7217 = vpop.f32.mrf.mxu0
    %v7218 = vpop.f32.mrf.mxu0
    %v7219 = vpop.f32.mrf.mxu0
    %7220 = vdwg.mxu0
    %7221 = vmatprep.subr.bf16.mxu0 0
    %7222 = vmatpush1.bf16.msra.mxu0 %v6692
    %7223 = vmatprep.subr.bf16.mxu0 0
    %7224 = vmatpush1.bf16.msra.mxu0 %v6691
    %7225 = vmatprep.subr.bf16.mxu0 0
    %7226 = vmatpush1.bf16.msra.mxu0 %v6690
    %7227 = vmatprep.subr.bf16.mxu0 0
    %7228 = vmatpush1.bf16.msra.mxu0 %v6689
    %7229 = vmatprep.subr.bf16.mxu0 0
    %7230 = vmatpush1.bf16.msra.mxu0 %v6688
    %7231 = vmatprep.subr.bf16.mxu0 0
    %7232 = vmatpush1.bf16.msra.mxu0 %v6687
    %7233 = vmatprep.subr.bf16.mxu0 0
    %7234 = vmatpush1.bf16.msra.mxu0 %v6686
    %7235 = vmatprep.subr.bf16.mxu0 0
    %7236 = vmatpush1.bf16.msra.mxu0 %v6685
    %7237 = vmatprep.subr.bf16.mxu0 0
    %7238 = vmatpush2.bf16.msra.mxu0 %v6700
    %7239 = vmatprep.subr.bf16.mxu0 0
    %7240 = vmatpush2.bf16.msra.mxu0 %v6699
    %7241 = vmatprep.subr.bf16.mxu0 0
    %7242 = vmatpush2.bf16.msra.mxu0 %v6698
    %7243 = vmatprep.subr.bf16.mxu0 0
    %7244 = vmatpush2.bf16.msra.mxu0 %v6697
    %7245 = vmatprep.subr.bf16.mxu0 0
    %7246 = vmatpush2.bf16.msra.mxu0 %v6696
    %7247 = vmatprep.subr.bf16.mxu0 0
    %7248 = vmatpush2.bf16.msra.mxu0 %v6695
    %7249 = vmatprep.subr.bf16.mxu0 0
    %7250 = vmatpush2.bf16.msra.mxu0 %v6694
    %7251 = vmatprep.subr.bf16.mxu0 0
    %7252 = vmatpush2.bf16.msra.mxu0 %v6693
    %7253 = vmatprep.mubr.bf16.mxu0 %v5584
    %7254 = vmatmul.mubr.bf16.gmra.mxu0 %v5583
    %v7255 = vpop.f32.mrf.mxu0
    %v7256 = vadd.f32 %v7216, %v7255
    %v7257 = vpop.f32.mrf.mxu0
    %v7258 = vpop.f32.mrf.mxu0
    %v7259 = vpop.f32.mrf.mxu0
    %7260 = vdwg.mxu0
    %7261 = vmatprep.subr.bf16.mxu0 0
    %7262 = vmatpush1.bf16.msra.mxu0 %v6708
    %7263 = vmatprep.subr.bf16.mxu0 0
    %7264 = vmatpush1.bf16.msra.mxu0 %v6707
    %7265 = vmatprep.subr.bf16.mxu0 0
    %7266 = vmatpush1.bf16.msra.mxu0 %v6706
    %7267 = vmatprep.subr.bf16.mxu0 0
    %7268 = vmatpush1.bf16.msra.mxu0 %v6705
    %7269 = vmatprep.subr.bf16.mxu0 0
    %7270 = vmatpush1.bf16.msra.mxu0 %v6704
    %7271 = vmatprep.subr.bf16.mxu0 0
    %7272 = vmatpush1.bf16.msra.mxu0 %v6703
    %7273 = vmatprep.subr.bf16.mxu0 0
    %7274 = vmatpush1.bf16.msra.mxu0 %v6702
    %7275 = vmatprep.subr.bf16.mxu0 0
    %7276 = vmatpush1.bf16.msra.mxu0 %v6701
    %7277 = vmatprep.subr.bf16.mxu0 0
    %7278 = vmatpush2.bf16.msra.mxu0 %v6716
    %7279 = vmatprep.subr.bf16.mxu0 0
    %7280 = vmatpush2.bf16.msra.mxu0 %v6715
    %7281 = vmatprep.subr.bf16.mxu0 0
    %7282 = vmatpush2.bf16.msra.mxu0 %v6714
    %7283 = vmatprep.subr.bf16.mxu0 0
    %7284 = vmatpush2.bf16.msra.mxu0 %v6713
    %7285 = vmatprep.subr.bf16.mxu0 0
    %7286 = vmatpush2.bf16.msra.mxu0 %v6712
    %7287 = vmatprep.subr.bf16.mxu0 0
    %7288 = vmatpush2.bf16.msra.mxu0 %v6711
    %7289 = vmatprep.subr.bf16.mxu0 0
    %7290 = vmatpush2.bf16.msra.mxu0 %v6710
    %7291 = vmatprep.subr.bf16.mxu0 0
    %7292 = vmatpush2.bf16.msra.mxu0 %v6709
    %7293 = vmatprep.mubr.bf16.mxu0 %v5586
    %7294 = vmatmul.mubr.bf16.gmra.mxu0 %v5585
    %v7295 = vpop.f32.mrf.mxu0
    %v7296 = vadd.f32 %v7256, %v7295
    %v7297 = vpop.f32.mrf.mxu0
    %v7298 = vpop.f32.mrf.mxu0
    %v7299 = vpop.f32.mrf.mxu0
    %7300 = vdwg.mxu0
    %7301 = vmatprep.subr.bf16.mxu0 0
    %7302 = vmatpush1.bf16.msra.mxu0 %v6724
    %7303 = vmatprep.subr.bf16.mxu0 0
    %7304 = vmatpush1.bf16.msra.mxu0 %v6723
    %7305 = vmatprep.subr.bf16.mxu0 0
    %7306 = vmatpush1.bf16.msra.mxu0 %v6722
    %7307 = vmatprep.subr.bf16.mxu0 0
    %7308 = vmatpush1.bf16.msra.mxu0 %v6721
    %7309 = vmatprep.subr.bf16.mxu0 0
    %7310 = vmatpush1.bf16.msra.mxu0 %v6720
    %7311 = vmatprep.subr.bf16.mxu0 0
    %7312 = vmatpush1.bf16.msra.mxu0 %v6719
    %7313 = vmatprep.subr.bf16.mxu0 0
    %7314 = vmatpush1.bf16.msra.mxu0 %v6718
    %7315 = vmatprep.subr.bf16.mxu0 0
    %7316 = vmatpush1.bf16.msra.mxu0 %v6717
    %7317 = vmatprep.subr.bf16.mxu0 0
    %7318 = vmatpush2.bf16.msra.mxu0 %v6732
    %7319 = vmatprep.subr.bf16.mxu0 0
    %7320 = vmatpush2.bf16.msra.mxu0 %v6731
    %7321 = vmatprep.subr.bf16.mxu0 0
    %7322 = vmatpush2.bf16.msra.mxu0 %v6730
    %7323 = vmatprep.subr.bf16.mxu0 0
    %7324 = vmatpush2.bf16.msra.mxu0 %v6729
    %7325 = vmatprep.subr.bf16.mxu0 0
    %7326 = vmatpush2.bf16.msra.mxu0 %v6728
    %7327 = vmatprep.subr.bf16.mxu0 0
    %7328 = vmatpush2.bf16.msra.mxu0 %v6727
    %7329 = vmatprep.subr.bf16.mxu0 0
    %7330 = vmatpush2.bf16.msra.mxu0 %v6726
    %7331 = vmatprep.subr.bf16.mxu0 0
    %7332 = vmatpush2.bf16.msra.mxu0 %v6725
    %7333 = vmatprep.mubr.bf16.mxu0 %v5588
    %7334 = vmatmul.mubr.bf16.gmra.mxu0 %v5587
    %v7335 = vpop.f32.mrf.mxu0
    %v7336 = vadd.f32 %v7296, %v7335
    %v7337 = vpop.f32.mrf.mxu0
    %v7338 = vpop.f32.mrf.mxu0
    %v7339 = vpop.f32.mrf.mxu0
    %7340 = vdwg.mxu0
    %7341 = vmatprep.subr.bf16.mxu0 0
    %7342 = vmatpush1.bf16.msra.mxu0 %v6740
    %7343 = vmatprep.subr.bf16.mxu0 0
    %7344 = vmatpush1.bf16.msra.mxu0 %v6739
    %7345 = vmatprep.subr.bf16.mxu0 0
    %7346 = vmatpush1.bf16.msra.mxu0 %v6738
    %7347 = vmatprep.subr.bf16.mxu0 0
    %7348 = vmatpush1.bf16.msra.mxu0 %v6737
    %7349 = vmatprep.subr.bf16.mxu0 0
    %7350 = vmatpush1.bf16.msra.mxu0 %v6736
    %7351 = vmatprep.subr.bf16.mxu0 0
    %7352 = vmatpush1.bf16.msra.mxu0 %v6735
    %7353 = vmatprep.subr.bf16.mxu0 0
    %7354 = vmatpush1.bf16.msra.mxu0 %v6734
    %7355 = vmatprep.subr.bf16.mxu0 0
    %7356 = vmatpush1.bf16.msra.mxu0 %v6733
    %7357 = vmatprep.subr.bf16.mxu0 0
    %7358 = vmatpush2.bf16.msra.mxu0 %v6748
    %7359 = vmatprep.subr.bf16.mxu0 0
    %7360 = vmatpush2.bf16.msra.mxu0 %v6747
    %7361 = vmatprep.subr.bf16.mxu0 0
    %7362 = vmatpush2.bf16.msra.mxu0 %v6746
    %7363 = vmatprep.subr.bf16.mxu0 0
    %7364 = vmatpush2.bf16.msra.mxu0 %v6745
    %7365 = vmatprep.subr.bf16.mxu0 0
    %7366 = vmatpush2.bf16.msra.mxu0 %v6744
    %7367 = vmatprep.subr.bf16.mxu0 0
    %7368 = vmatpush2.bf16.msra.mxu0 %v6743
    %7369 = vmatprep.subr.bf16.mxu0 0
    %7370 = vmatpush2.bf16.msra.mxu0 %v6742
    %7371 = vmatprep.subr.bf16.mxu0 0
    %7372 = vmatpush2.bf16.msra.mxu0 %v6741
    %7373 = vmatprep.mubr.bf16.mxu0 %v5590
    %7374 = vmatmul.mubr.bf16.gmra.mxu0 %v5589
    %v7375 = vpop.f32.mrf.mxu0
    %v7376 = vadd.f32 %v7336, %v7375
    %v7377 = vpop.f32.mrf.mxu0
    %v7378 = vpop.f32.mrf.mxu0
    %v7379 = vpop.f32.mrf.mxu0
    %7380 = vdwg.mxu0
    %7381 = vmatprep.subr.bf16.mxu0 0
    %7382 = vmatpush1.bf16.msra.mxu0 %v6756
    %7383 = vmatprep.subr.bf16.mxu0 0
    %7384 = vmatpush1.bf16.msra.mxu0 %v6755
    %7385 = vmatprep.subr.bf16.mxu0 0
    %7386 = vmatpush1.bf16.msra.mxu0 %v6754
    %7387 = vmatprep.subr.bf16.mxu0 0
    %7388 = vmatpush1.bf16.msra.mxu0 %v6753
    %7389 = vmatprep.subr.bf16.mxu0 0
    %7390 = vmatpush1.bf16.msra.mxu0 %v6752
    %7391 = vmatprep.subr.bf16.mxu0 0
    %7392 = vmatpush1.bf16.msra.mxu0 %v6751
    %7393 = vmatprep.subr.bf16.mxu0 0
    %7394 = vmatpush1.bf16.msra.mxu0 %v6750
    %7395 = vmatprep.subr.bf16.mxu0 0
    %7396 = vmatpush1.bf16.msra.mxu0 %v6749
    %7397 = vmatprep.subr.bf16.mxu0 0
    %7398 = vmatpush2.bf16.msra.mxu0 %v6764
    %7399 = vmatprep.subr.bf16.mxu0 0
    %7400 = vmatpush2.bf16.msra.mxu0 %v6763
    %7401 = vmatprep.subr.bf16.mxu0 0
    %7402 = vmatpush2.bf16.msra.mxu0 %v6762
    %7403 = vmatprep.subr.bf16.mxu0 0
    %7404 = vmatpush2.bf16.msra.mxu0 %v6761
    %7405 = vmatprep.subr.bf16.mxu0 0
    %7406 = vmatpush2.bf16.msra.mxu0 %v6760
    %7407 = vmatprep.subr.bf16.mxu0 0
    %7408 = vmatpush2.bf16.msra.mxu0 %v6759
    %7409 = vmatprep.subr.bf16.mxu0 0
    %7410 = vmatpush2.bf16.msra.mxu0 %v6758
    %7411 = vmatprep.subr.bf16.mxu0 0
    %7412 = vmatpush2.bf16.msra.mxu0 %v6757
    %7413 = vmatprep.mubr.bf16.mxu0 %v5592
    %7414 = vmatmul.mubr.bf16.gmra.mxu0 %v5591
    %v7415 = vpop.f32.mrf.mxu0
    %v7416 = vadd.f32 %v7376, %v7415
    %v7417 = vpop.f32.mrf.mxu0
    %v7418 = vpop.f32.mrf.mxu0
    %v7419 = vpop.f32.mrf.mxu0
    %7420 = vdwg.mxu0
    %7421 = vmatprep.subr.bf16.mxu0 0
    %7422 = vmatpush1.bf16.msra.mxu0 %v6772
    %7423 = vmatprep.subr.bf16.mxu0 0
    %7424 = vmatpush1.bf16.msra.mxu0 %v6771
    %7425 = vmatprep.subr.bf16.mxu0 0
    %7426 = vmatpush1.bf16.msra.mxu0 %v6770
    %7427 = vmatprep.subr.bf16.mxu0 0
    %7428 = vmatpush1.bf16.msra.mxu0 %v6769
    %7429 = vmatprep.subr.bf16.mxu0 0
    %7430 = vmatpush1.bf16.msra.mxu0 %v6768
    %7431 = vmatprep.subr.bf16.mxu0 0
    %7432 = vmatpush1.bf16.msra.mxu0 %v6767
    %7433 = vmatprep.subr.bf16.mxu0 0
    %7434 = vmatpush1.bf16.msra.mxu0 %v6766
    %7435 = vmatprep.subr.bf16.mxu0 0
    %7436 = vmatpush1.bf16.msra.mxu0 %v6765
    %7437 = vmatprep.subr.bf16.mxu0 0
    %7438 = vmatpush2.bf16.msra.mxu0 %v6780
    %7439 = vmatprep.subr.bf16.mxu0 0
    %7440 = vmatpush2.bf16.msra.mxu0 %v6779
    %7441 = vmatprep.subr.bf16.mxu0 0
    %7442 = vmatpush2.bf16.msra.mxu0 %v6778
    %7443 = vmatprep.subr.bf16.mxu0 0
    %7444 = vmatpush2.bf16.msra.mxu0 %v6777
    %7445 = vmatprep.subr.bf16.mxu0 0
    %7446 = vmatpush2.bf16.msra.mxu0 %v6776
    %7447 = vmatprep.subr.bf16.mxu0 0
    %7448 = vmatpush2.bf16.msra.mxu0 %v6775
    %7449 = vmatprep.subr.bf16.mxu0 0
    %7450 = vmatpush2.bf16.msra.mxu0 %v6774
    %7451 = vmatprep.subr.bf16.mxu0 0
    %7452 = vmatpush2.bf16.msra.mxu0 %v6773
    %7453 = vmatprep.mubr.bf16.mxu0 %v5594
    %7454 = vmatmul.mubr.bf16.gmra.mxu0 %v5593
    %v7455 = vpop.f32.mrf.mxu0
    %v7456 = vadd.f32 %v7416, %v7455
    %v7457 = vpop.f32.mrf.mxu0
    %v7458 = vpop.f32.mrf.mxu0
    %v7459 = vpop.f32.mrf.mxu0
    %7460 = vdwg.mxu0
    %7461 = vmatprep.subr.bf16.mxu0 0
    %7462 = vmatpush1.bf16.msra.mxu0 %v6788
    %7463 = vmatprep.subr.bf16.mxu0 0
    %7464 = vmatpush1.bf16.msra.mxu0 %v6787
    %7465 = vmatprep.subr.bf16.mxu0 0
    %7466 = vmatpush1.bf16.msra.mxu0 %v6786
    %7467 = vmatprep.subr.bf16.mxu0 0
    %7468 = vmatpush1.bf16.msra.mxu0 %v6785
    %7469 = vmatprep.subr.bf16.mxu0 0
    %7470 = vmatpush1.bf16.msra.mxu0 %v6784
    %7471 = vmatprep.subr.bf16.mxu0 0
    %7472 = vmatpush1.bf16.msra.mxu0 %v6783
    %7473 = vmatprep.subr.bf16.mxu0 0
    %7474 = vmatpush1.bf16.msra.mxu0 %v6782
    %7475 = vmatprep.subr.bf16.mxu0 0
    %7476 = vmatpush1.bf16.msra.mxu0 %v6781
    %7477 = vmatprep.subr.bf16.mxu0 0
    %7478 = vmatpush2.bf16.msra.mxu0 %v6796
    %7479 = vmatprep.subr.bf16.mxu0 0
    %7480 = vmatpush2.bf16.msra.mxu0 %v6795
    %7481 = vmatprep.subr.bf16.mxu0 0
    %7482 = vmatpush2.bf16.msra.mxu0 %v6794
    %7483 = vmatprep.subr.bf16.mxu0 0
    %7484 = vmatpush2.bf16.msra.mxu0 %v6793
    %7485 = vmatprep.subr.bf16.mxu0 0
    %7486 = vmatpush2.bf16.msra.mxu0 %v6792
    %7487 = vmatprep.subr.bf16.mxu0 0
    %7488 = vmatpush2.bf16.msra.mxu0 %v6791
    %7489 = vmatprep.subr.bf16.mxu0 0
    %7490 = vmatpush2.bf16.msra.mxu0 %v6790
    %7491 = vmatprep.subr.bf16.mxu0 0
    %7492 = vmatpush2.bf16.msra.mxu0 %v6789
    %7493 = vmatprep.mubr.bf16.mxu0 %v5596
    %7494 = vmatmul.mubr.bf16.gmra.mxu0 %v5595
    %v7495 = vpop.f32.mrf.mxu0
    %v7496 = vadd.f32 %v7456, %v7495
    %v7497 = vpop.f32.mrf.mxu0
    %v7498 = vpop.f32.mrf.mxu0
    %v7499 = vpop.f32.mrf.mxu0
    %7500 = vdwg.mxu0
    %7501 = vmatprep.subr.bf16.mxu0 0
    %7502 = vmatpush1.bf16.msra.mxu0 %v6804
    %7503 = vmatprep.subr.bf16.mxu0 0
    %7504 = vmatpush1.bf16.msra.mxu0 %v6803
    %7505 = vmatprep.subr.bf16.mxu0 0
    %7506 = vmatpush1.bf16.msra.mxu0 %v6802
    %7507 = vmatprep.subr.bf16.mxu0 0
    %7508 = vmatpush1.bf16.msra.mxu0 %v6801
    %7509 = vmatprep.subr.bf16.mxu0 0
    %7510 = vmatpush1.bf16.msra.mxu0 %v6800
    %7511 = vmatprep.subr.bf16.mxu0 0
    %7512 = vmatpush1.bf16.msra.mxu0 %v6799
    %7513 = vmatprep.subr.bf16.mxu0 0
    %7514 = vmatpush1.bf16.msra.mxu0 %v6798
    %7515 = vmatprep.subr.bf16.mxu0 0
    %7516 = vmatpush1.bf16.msra.mxu0 %v6797
    %7517 = vmatprep.subr.bf16.mxu0 0
    %7518 = vmatpush2.bf16.msra.mxu0 %v6812
    %7519 = vmatprep.subr.bf16.mxu0 0
    %7520 = vmatpush2.bf16.msra.mxu0 %v6811
    %7521 = vmatprep.subr.bf16.mxu0 0
    %7522 = vmatpush2.bf16.msra.mxu0 %v6810
    %7523 = vmatprep.subr.bf16.mxu0 0
    %7524 = vmatpush2.bf16.msra.mxu0 %v6809
    %7525 = vmatprep.subr.bf16.mxu0 0
    %7526 = vmatpush2.bf16.msra.mxu0 %v6808
    %7527 = vmatprep.subr.bf16.mxu0 0
    %7528 = vmatpush2.bf16.msra.mxu0 %v6807
    %7529 = vmatprep.subr.bf16.mxu0 0
    %7530 = vmatpush2.bf16.msra.mxu0 %v6806
    %7531 = vmatprep.subr.bf16.mxu0 0
    %7532 = vmatpush2.bf16.msra.mxu0 %v6805
    %7533 = vmatprep.mubr.bf16.mxu0 %v5598
    %7534 = vmatmul.mubr.bf16.gmra.mxu0 %v5597
    %v7535 = vpop.f32.mrf.mxu0
    %v7536 = vadd.f32 %v7496, %v7535
    %v7537 = vpop.f32.mrf.mxu0
    %v7538 = vpop.f32.mrf.mxu0
    %v7539 = vpop.f32.mrf.mxu0
    %7540 = vdwg.mxu0
    %7541 = vmatprep.subr.bf16.mxu0 0
    %7542 = vmatpush1.bf16.msra.mxu0 %v6820
    %7543 = vmatprep.subr.bf16.mxu0 0
    %7544 = vmatpush1.bf16.msra.mxu0 %v6819
    %7545 = vmatprep.subr.bf16.mxu0 0
    %7546 = vmatpush1.bf16.msra.mxu0 %v6818
    %7547 = vmatprep.subr.bf16.mxu0 0
    %7548 = vmatpush1.bf16.msra.mxu0 %v6817
    %7549 = vmatprep.subr.bf16.mxu0 0
    %7550 = vmatpush1.bf16.msra.mxu0 %v6816
    %7551 = vmatprep.subr.bf16.mxu0 0
    %7552 = vmatpush1.bf16.msra.mxu0 %v6815
    %7553 = vmatprep.subr.bf16.mxu0 0
    %7554 = vmatpush1.bf16.msra.mxu0 %v6814
    %7555 = vmatprep.subr.bf16.mxu0 0
    %7556 = vmatpush1.bf16.msra.mxu0 %v6813
    %7557 = vmatprep.subr.bf16.mxu0 0
    %7558 = vmatpush2.bf16.msra.mxu0 %v6828
    %7559 = vmatprep.subr.bf16.mxu0 0
    %7560 = vmatpush2.bf16.msra.mxu0 %v6827
    %7561 = vmatprep.subr.bf16.mxu0 0
    %7562 = vmatpush2.bf16.msra.mxu0 %v6826
    %7563 = vmatprep.subr.bf16.mxu0 0
    %7564 = vmatpush2.bf16.msra.mxu0 %v6825
    %7565 = vmatprep.subr.bf16.mxu0 0
    %7566 = vmatpush2.bf16.msra.mxu0 %v6824
    %7567 = vmatprep.subr.bf16.mxu0 0
    %7568 = vmatpush2.bf16.msra.mxu0 %v6823
    %7569 = vmatprep.subr.bf16.mxu0 0
    %7570 = vmatpush2.bf16.msra.mxu0 %v6822
    %7571 = vmatprep.subr.bf16.mxu0 0
    %7572 = vmatpush2.bf16.msra.mxu0 %v6821
    %7573 = vmatprep.mubr.bf16.mxu0 %v5600
    %7574 = vmatmul.mubr.bf16.gmra.mxu0 %v5599
    %v7575 = vpop.f32.mrf.mxu0
    %v7576 = vadd.f32 %v7536, %v7575
    %v7577 = vpop.f32.mrf.mxu0
    %v7578 = vpop.f32.mrf.mxu0
    %v7579 = vpop.f32.mrf.mxu0
    %7580 = vdwg.mxu0
    %7581 = vmatprep.subr.bf16.mxu0 0
    %7582 = vmatpush1.bf16.msra.mxu0 %v6836
    %7583 = vmatprep.subr.bf16.mxu0 0
    %7584 = vmatpush1.bf16.msra.mxu0 %v6835
    %7585 = vmatprep.subr.bf16.mxu0 0
    %7586 = vmatpush1.bf16.msra.mxu0 %v6834
    %7587 = vmatprep.subr.bf16.mxu0 0
    %7588 = vmatpush1.bf16.msra.mxu0 %v6833
    %7589 = vmatprep.subr.bf16.mxu0 0
    %7590 = vmatpush1.bf16.msra.mxu0 %v6832
    %7591 = vmatprep.subr.bf16.mxu0 0
    %7592 = vmatpush1.bf16.msra.mxu0 %v6831
    %7593 = vmatprep.subr.bf16.mxu0 0
    %7594 = vmatpush1.bf16.msra.mxu0 %v6830
    %7595 = vmatprep.subr.bf16.mxu0 0
    %7596 = vmatpush1.bf16.msra.mxu0 %v6829
    %7597 = vmatprep.subr.bf16.mxu0 0
    %7598 = vmatpush2.bf16.msra.mxu0 %v6844
    %7599 = vmatprep.subr.bf16.mxu0 0
    %7600 = vmatpush2.bf16.msra.mxu0 %v6843
    %7601 = vmatprep.subr.bf16.mxu0 0
    %7602 = vmatpush2.bf16.msra.mxu0 %v6842
    %7603 = vmatprep.subr.bf16.mxu0 0
    %7604 = vmatpush2.bf16.msra.mxu0 %v6841
    %7605 = vmatprep.subr.bf16.mxu0 0
    %7606 = vmatpush2.bf16.msra.mxu0 %v6840
    %7607 = vmatprep.subr.bf16.mxu0 0
    %7608 = vmatpush2.bf16.msra.mxu0 %v6839
    %7609 = vmatprep.subr.bf16.mxu0 0
    %7610 = vmatpush2.bf16.msra.mxu0 %v6838
    %7611 = vmatprep.subr.bf16.mxu0 0
    %7612 = vmatpush2.bf16.msra.mxu0 %v6837
    %7613 = vmatprep.mubr.bf16.mxu0 %v5602
    %7614 = vmatmul.mubr.bf16.gmra.mxu0 %v5601
    %v7615 = vpop.f32.mrf.mxu0
    %v7616 = vadd.f32 %v7576, %v7615
    %v7617 = vpop.f32.mrf.mxu0
    %v7618 = vpop.f32.mrf.mxu0
    %v7619 = vpop.f32.mrf.mxu0
    %7620 = vdwg.mxu0
    %7621 = vmatprep.subr.bf16.mxu0 0
    %7622 = vmatpush1.bf16.msra.mxu0 %v6852
    %7623 = vmatprep.subr.bf16.mxu0 0
    %7624 = vmatpush1.bf16.msra.mxu0 %v6851
    %7625 = vmatprep.subr.bf16.mxu0 0
    %7626 = vmatpush1.bf16.msra.mxu0 %v6850
    %7627 = vmatprep.subr.bf16.mxu0 0
    %7628 = vmatpush1.bf16.msra.mxu0 %v6849
    %7629 = vmatprep.subr.bf16.mxu0 0
    %7630 = vmatpush1.bf16.msra.mxu0 %v6848
    %7631 = vmatprep.subr.bf16.mxu0 0
    %7632 = vmatpush1.bf16.msra.mxu0 %v6847
    %7633 = vmatprep.subr.bf16.mxu0 0
    %7634 = vmatpush1.bf16.msra.mxu0 %v6846
    %7635 = vmatprep.subr.bf16.mxu0 0
    %7636 = vmatpush1.bf16.msra.mxu0 %v6845
    %7637 = vmatprep.subr.bf16.mxu0 0
    %7638 = vmatpush2.bf16.msra.mxu0 %v6860
    %7639 = vmatprep.subr.bf16.mxu0 0
    %7640 = vmatpush2.bf16.msra.mxu0 %v6859
    %7641 = vmatprep.subr.bf16.mxu0 0
    %7642 = vmatpush2.bf16.msra.mxu0 %v6858
    %7643 = vmatprep.subr.bf16.mxu0 0
    %7644 = vmatpush2.bf16.msra.mxu0 %v6857
    %7645 = vmatprep.subr.bf16.mxu0 0
    %7646 = vmatpush2.bf16.msra.mxu0 %v6856
    %7647 = vmatprep.subr.bf16.mxu0 0
    %7648 = vmatpush2.bf16.msra.mxu0 %v6855
    %7649 = vmatprep.subr.bf16.mxu0 0
    %7650 = vmatpush2.bf16.msra.mxu0 %v6854
    %7651 = vmatprep.subr.bf16.mxu0 0
    %7652 = vmatpush2.bf16.msra.mxu0 %v6853
    %7653 = vmatprep.mubr.bf16.mxu0 %v5604
    %7654 = vmatmul.mubr.bf16.gmra.mxu0 %v5603
    %v7655 = vpop.f32.mrf.mxu0
    %v7656 = vadd.f32 %v7616, %v7655
    %v7657 = vpop.f32.mrf.mxu0
    %v7658 = vpop.f32.mrf.mxu0
    %v7659 = vpop.f32.mrf.mxu0
    %7660 = vdwg.mxu0
    %7661 = vmatprep.subr.bf16.mxu0 0
    %7662 = vmatpush1.bf16.msra.mxu0 %v6868
    %7663 = vmatprep.subr.bf16.mxu0 0
    %7664 = vmatpush1.bf16.msra.mxu0 %v6867
    %7665 = vmatprep.subr.bf16.mxu0 0
    %7666 = vmatpush1.bf16.msra.mxu0 %v6866
    %7667 = vmatprep.subr.bf16.mxu0 0
    %7668 = vmatpush1.bf16.msra.mxu0 %v6865
    %7669 = vmatprep.subr.bf16.mxu0 0
    %7670 = vmatpush1.bf16.msra.mxu0 %v6864
    %7671 = vmatprep.subr.bf16.mxu0 0
    %7672 = vmatpush1.bf16.msra.mxu0 %v6863
    %7673 = vmatprep.subr.bf16.mxu0 0
    %7674 = vmatpush1.bf16.msra.mxu0 %v6862
    %7675 = vmatprep.subr.bf16.mxu0 0
    %7676 = vmatpush1.bf16.msra.mxu0 %v6861
    %7677 = vmatprep.subr.bf16.mxu0 0
    %7678 = vmatpush2.bf16.msra.mxu0 %v6876
    %7679 = vmatprep.subr.bf16.mxu0 0
    %7680 = vmatpush2.bf16.msra.mxu0 %v6875
    %7681 = vmatprep.subr.bf16.mxu0 0
    %7682 = vmatpush2.bf16.msra.mxu0 %v6874
    %7683 = vmatprep.subr.bf16.mxu0 0
    %7684 = vmatpush2.bf16.msra.mxu0 %v6873
    %7685 = vmatprep.subr.bf16.mxu0 0
    %7686 = vmatpush2.bf16.msra.mxu0 %v6872
    %7687 = vmatprep.subr.bf16.mxu0 0
    %7688 = vmatpush2.bf16.msra.mxu0 %v6871
    %7689 = vmatprep.subr.bf16.mxu0 0
    %7690 = vmatpush2.bf16.msra.mxu0 %v6870
    %7691 = vmatprep.subr.bf16.mxu0 0
    %7692 = vmatpush2.bf16.msra.mxu0 %v6869
    %7693 = vmatprep.mubr.bf16.mxu0 %v5606
    %7694 = vmatmul.mubr.bf16.gmra.mxu0 %v5605
    %v7695 = vpop.f32.mrf.mxu0
    %v7696 = vadd.f32 %v7656, %v7695
    %v7697 = vpop.f32.mrf.mxu0
    %v7698 = vpop.f32.mrf.mxu0
    %v7699 = vpop.f32.mrf.mxu0
    %7700 = vdwg.mxu0
    %7701 = vmatprep.subr.bf16.mxu0 0
    %7702 = vmatpush1.bf16.msra.mxu0 %v6884
    %7703 = vmatprep.subr.bf16.mxu0 0
    %7704 = vmatpush1.bf16.msra.mxu0 %v6883
    %7705 = vmatprep.subr.bf16.mxu0 0
    %7706 = vmatpush1.bf16.msra.mxu0 %v6882
    %7707 = vmatprep.subr.bf16.mxu0 0
    %7708 = vmatpush1.bf16.msra.mxu0 %v6881
    %7709 = vmatprep.subr.bf16.mxu0 0
    %7710 = vmatpush1.bf16.msra.mxu0 %v6880
    %7711 = vmatprep.subr.bf16.mxu0 0
    %7712 = vmatpush1.bf16.msra.mxu0 %v6879
    %7713 = vmatprep.subr.bf16.mxu0 0
    %7714 = vmatpush1.bf16.msra.mxu0 %v6878
    %7715 = vmatprep.subr.bf16.mxu0 0
    %7716 = vmatpush1.bf16.msra.mxu0 %v6877
    %7717 = vmatprep.subr.bf16.mxu0 0
    %7718 = vmatpush2.bf16.msra.mxu0 %v6892
    %7719 = vmatprep.subr.bf16.mxu0 0
    %7720 = vmatpush2.bf16.msra.mxu0 %v6891
    %7721 = vmatprep.subr.bf16.mxu0 0
    %7722 = vmatpush2.bf16.msra.mxu0 %v6890
    %7723 = vmatprep.subr.bf16.mxu0 0
    %7724 = vmatpush2.bf16.msra.mxu0 %v6889
    %7725 = vmatprep.subr.bf16.mxu0 0
    %7726 = vmatpush2.bf16.msra.mxu0 %v6888
    %7727 = vmatprep.subr.bf16.mxu0 0
    %7728 = vmatpush2.bf16.msra.mxu0 %v6887
    %7729 = vmatprep.subr.bf16.mxu0 0
    %7730 = vmatpush2.bf16.msra.mxu0 %v6886
    %7731 = vmatprep.subr.bf16.mxu0 0
    %7732 = vmatpush2.bf16.msra.mxu0 %v6885
    %7733 = vmatprep.mubr.bf16.mxu0 %v5608
    %7734 = vmatmul.mubr.bf16.gmra.mxu0 %v5607
    %v7735 = vpop.f32.mrf.mxu0
    %v7736 = vadd.f32 %v7696, %v7735
    %v7737 = vpop.f32.mrf.mxu0
    %v7738 = vpop.f32.mrf.mxu0
    %v7739 = vpop.f32.mrf.mxu0
    %7740 = vdwg.mxu0
    %7741 = vmatprep.subr.bf16.mxu0 0
    %7742 = vmatpush1.bf16.msra.mxu0 %v6900
    %7743 = vmatprep.subr.bf16.mxu0 0
    %7744 = vmatpush1.bf16.msra.mxu0 %v6899
    %7745 = vmatprep.subr.bf16.mxu0 0
    %7746 = vmatpush1.bf16.msra.mxu0 %v6898
    %7747 = vmatprep.subr.bf16.mxu0 0
    %7748 = vmatpush1.bf16.msra.mxu0 %v6897
    %7749 = vmatprep.subr.bf16.mxu0 0
    %7750 = vmatpush1.bf16.msra.mxu0 %v6896
    %7751 = vmatprep.subr.bf16.mxu0 0
    %7752 = vmatpush1.bf16.msra.mxu0 %v6895
    %7753 = vmatprep.subr.bf16.mxu0 0
    %7754 = vmatpush1.bf16.msra.mxu0 %v6894
    %7755 = vmatprep.subr.bf16.mxu0 0
    %7756 = vmatpush1.bf16.msra.mxu0 %v6893
    %7757 = vmatprep.subr.bf16.mxu0 0
    %7758 = vmatpush2.bf16.msra.mxu0 %v6908
    %7759 = vmatprep.subr.bf16.mxu0 0
    %7760 = vmatpush2.bf16.msra.mxu0 %v6907
    %7761 = vmatprep.subr.bf16.mxu0 0
    %7762 = vmatpush2.bf16.msra.mxu0 %v6906
    %7763 = vmatprep.subr.bf16.mxu0 0
    %7764 = vmatpush2.bf16.msra.mxu0 %v6905
    %7765 = vmatprep.subr.bf16.mxu0 0
    %7766 = vmatpush2.bf16.msra.mxu0 %v6904
    %7767 = vmatprep.subr.bf16.mxu0 0
    %7768 = vmatpush2.bf16.msra.mxu0 %v6903
    %7769 = vmatprep.subr.bf16.mxu0 0
    %7770 = vmatpush2.bf16.msra.mxu0 %v6902
    %7771 = vmatprep.subr.bf16.mxu0 0
    %7772 = vmatpush2.bf16.msra.mxu0 %v6901
    %7773 = vmatprep.mubr.bf16.mxu0 %v5610
    %7774 = vmatmul.mubr.bf16.gmra.mxu0 %v5609
    %v7775 = vpop.f32.mrf.mxu0
    %v7776 = vadd.f32 %v7736, %v7775
    %v7777 = vpop.f32.mrf.mxu0
    %v7778 = vpop.f32.mrf.mxu0
    %v7779 = vpop.f32.mrf.mxu0
    %7780 = vdwg.mxu0
    %7781 = vmatprep.subr.bf16.mxu0 0
    %7782 = vmatpush1.bf16.msra.mxu0 %v6916
    %7783 = vmatprep.subr.bf16.mxu0 0
    %7784 = vmatpush1.bf16.msra.mxu0 %v6915
    %7785 = vmatprep.subr.bf16.mxu0 0
    %7786 = vmatpush1.bf16.msra.mxu0 %v6914
    %7787 = vmatprep.subr.bf16.mxu0 0
    %7788 = vmatpush1.bf16.msra.mxu0 %v6913
    %7789 = vmatprep.subr.bf16.mxu0 0
    %7790 = vmatpush1.bf16.msra.mxu0 %v6912
    %7791 = vmatprep.subr.bf16.mxu0 0
    %7792 = vmatpush1.bf16.msra.mxu0 %v6911
    %7793 = vmatprep.subr.bf16.mxu0 0
    %7794 = vmatpush1.bf16.msra.mxu0 %v6910
    %7795 = vmatprep.subr.bf16.mxu0 0
    %7796 = vmatpush1.bf16.msra.mxu0 %v6909
    %7797 = vmatprep.subr.bf16.mxu0 0
    %7798 = vmatpush2.bf16.msra.mxu0 %v6924
    %7799 = vmatprep.subr.bf16.mxu0 0
    %7800 = vmatpush2.bf16.msra.mxu0 %v6923
    %7801 = vmatprep.subr.bf16.mxu0 0
    %7802 = vmatpush2.bf16.msra.mxu0 %v6922
    %7803 = vmatprep.subr.bf16.mxu0 0
    %7804 = vmatpush2.bf16.msra.mxu0 %v6921
    %7805 = vmatprep.subr.bf16.mxu0 0
    %7806 = vmatpush2.bf16.msra.mxu0 %v6920
    %7807 = vmatprep.subr.bf16.mxu0 0
    %7808 = vmatpush2.bf16.msra.mxu0 %v6919
    %7809 = vmatprep.subr.bf16.mxu0 0
    %7810 = vmatpush2.bf16.msra.mxu0 %v6918
    %7811 = vmatprep.subr.bf16.mxu0 0
    %7812 = vmatpush2.bf16.msra.mxu0 %v6917
    %7813 = vmatprep.mubr.bf16.mxu0 %v5612
    %7814 = vmatmul.mubr.bf16.gmra.mxu0 %v5611
    %v7815 = vpop.f32.mrf.mxu0
    %v7816 = vadd.f32 %v7776, %v7815
    %v7817 = vpop.f32.mrf.mxu0
    %v7818 = vpop.f32.mrf.mxu0
    %v7819 = vpop.f32.mrf.mxu0
    %7820 = vdwg.mxu0
    %v7821 = vmul.f32 %v7816, 0.25
    %7822 = vst [vmem:[%s3] sm:$0xff] %v7821
    // Predicated region
    $region18: #{diff_fc_forward.1} parent=1 // pred_check
      _
    $region19: #{diff_fc_forward.1} parent=1 // pred_check_branch
      %7824 = sbr.rel (0) target = $region21
    $region20: #{diff_fc_forward.1} parent=1 // pred_region
      _
    $region21: #{diff_fc_forward.1} parent=1 // pred_fallthru
      _
    // Predicated region
    $region22: #{diff_fc_forward.1} parent=1 // pred_check
      _
    $region23: #{diff_fc_forward.1} parent=1 // pred_check_branch
      %7826 = sbr.rel (0) target = $region25
    $region24: #{diff_fc_forward.1} parent=1 // pred_region
      _
    $region25: #{diff_fc_forward.1} parent=1 // pred_fallthru
      _
    %7827 = vsyncpa [#allocation3], 1

</llo_original>
